<compile_context>
chip_gen: v7x
topology: tpu7x:2x2x1
jax: 0.10.0
libtpu: 0.0.40
codegen_flags: <defaults>
</compile_context>

<pallas_src>
import functools

import numpy as np
import jax
import jax.numpy as jnp
from jax import lax
from jax.experimental import pallas as pl
from jax.experimental.pallas import tpu as pltpu  # noqa: F401  (CompilerParams when scaling up)

# ----------------------- model hyper-parameters (scaled-down SAM) -----------------------
IMG_SIZE = 64            # encoder input resolution           (real SAM: 1024)
PATCH = 16               # ViT patch size
GRID = IMG_SIZE // PATCH  # image-embedding spatial size       (real SAM: 64)
ENC_DIM = 64             # ViT embed dim                      (vit_h: 1280)
ENC_DEPTH = 2            # ViT depth                          (vit_h: 32)
ENC_HEADS = 2
ENC_MLP = 4 * ENC_DIM
EMB = 32                 # prompt / transformer dim           (real SAM: 256)
DEC_HEADS = 2
DEC_DEPTH = 2
DEC_MLP = 2 * EMB
NUM_MASK_TOKENS = 4      # 3 multimask outputs + 1

_BF16 = jnp.bfloat16

# TODO(synk): real SAM image encoder (ViT-H) uses windowed attention + relative position
# embeddings and loads checkpoint weights; this synthetic encoder uses global attention
# with deterministic random weights (no checkpoint loading).


# ===================================== kernel helpers ====================================


def _zmap(ndim):
    return lambda i: (0,) * ndim


def _full_spec(arr):
    return pl.BlockSpec(arr.shape, _zmap(arr.ndim))


def _dot(a, b):
    """MXU matmul: bf16 inputs, f32 accumulation."""
    return jnp.dot(a.astype(_BF16), b.astype(_BF16), preferred_element_type=jnp.float32)


def _gelu(x):
    # TODO(synk): tanh-approx GELU inside kernels (reference SAM uses exact erf GELU).
    return 0.5 * x * (1.0 + jnp.tanh(0.7978845608028654 * (x + 0.044715 * x * x * x)))


def _ln(x, g, b, eps):
    mu = jnp.mean(x, axis=-1, keepdims=True)
    var = jnp.mean(jnp.square(x - mu), axis=-1, keepdims=True)
    return (x - mu) * lax.rsqrt(var + eps) * g + b


def _softmax_lastdim(s):
    s = s - jnp.max(s, axis=-1, keepdims=True)
    p = jnp.exp(s)
    return p * pl.reciprocal(jnp.sum(p, axis=-1, keepdims=True), approx=True)


# ================================ fused linear (matmul+epilogue) =========================


def _make_fused_linear_kernel(has_bias, has_res, has_ln, ln_groups, act, eps):
    def kernel(*refs):
        x_ref, w_ref = refs[0], refs[1]
        i = 2
        b_ref = r_ref = g_ref = bl_ref = None
        if has_bias:
            b_ref = refs[i]; i += 1
        if has_res:
            r_ref = refs[i]; i += 1
        if has_ln:
            g_ref, bl_ref = refs[i], refs[i + 1]; i += 2
        o_ref = refs[i]
        M, N = o_ref.shape
        y = _dot(x_ref[...], w_ref[...])
        if has_bias:
            y = y + b_ref[...]
        if has_res:
            y = y + r_ref[...]
        if has_ln:
            if ln_groups > 1:
                gs = N // ln_groups
                yg = y.reshape(M, ln_groups, gs)
                yg = _ln(yg, g_ref[...].reshape(1, 1, gs), bl_ref[...].reshape(1, 1, gs), eps)
                y = yg.reshape(M, N)
            else:
                y = _ln(y, g_ref[...], bl_ref[...], eps)
        if act == "relu":
            y = jnp.maximum(y, 0.0)
        elif act == "gelu":
            y = _gelu(y)
        o_ref[...] = y
    return kernel


def fused_linear(x, w, *, bias=None, residual=None, ln=None, ln_groups=1, act=None, eps=1e-5):
    """act(LayerNorm(residual + x @ w + bias)) in a single Pallas kernel (MXU + epilogue).

    # TODO(synk): add an M/N/K-tiled grid + VMEM f32 accumulator when scaling toward real
    # SAM sizes (S=4096, dim=1280); at the toy sizes here every operand fits one VMEM block.
    """
    lead = x.shape[:-1]
    K = x.shape[-1]
    N = w.shape[1]
    x2 = x.reshape(-1, K).astype(jnp.float32)
    M = x2.shape[0]
    inputs = [x2, jnp.asarray(w, jnp.float32)]
    if bias is not None:
        inputs.append(jnp.asarray(bias, jnp.float32).reshape(1, N))
    if residual is not None:
        inputs.append(residual.reshape(M, N).astype(jnp.float32))
    if ln is not None:
        g, b = ln
        inputs.append(jnp.asarray(g, jnp.float32).reshape(1, -1))
        inputs.append(jnp.asarray(b, jnp.float32).reshape(1, -1))
    kernel = _make_fused_linear_kernel(bias is not None, residual is not None,
                                       ln is not None, ln_groups, act, eps)
    out = pl.pallas_call(
        kernel,
        out_shape=jax.ShapeDtypeStruct((M, N), jnp.float32),
        grid=(1,),
        in_specs=[_full_spec(a) for a in inputs],
        out_specs=pl.BlockSpec((M, N), _zmap(2)),
    )(*inputs)
    return out.reshape(lead + (N,))


# ================================ ViT encoder block kernels ==============================


def _enc_attn_kernel(x_ref, g_ref, b_ref, qkvw_ref, qkvb_ref, pw_ref, pb_ref, o_ref, *,
                     heads, eps):
    B, S, D = x_ref.shape
    dh = D // heads
    scale = 1.0 / float(np.sqrt(dh))
    x2 = x_ref[...].reshape(B * S, D)
    h = _ln(x2, g_ref[...], b_ref[...], eps)
    qkv = (_dot(h, qkvw_ref[...]) + qkvb_ref[...]).reshape(B, S, 3 * D)
    pw = pw_ref[...]
    acc = jnp.zeros((B * S, D), jnp.float32)
    for hd in range(heads):
        q = qkv[:, :, hd * dh:(hd + 1) * dh] * scale
        k = qkv[:, :, D + hd * dh:D + (hd + 1) * dh]
        v = qkv[:, :, 2 * D + hd * dh:2 * D + (hd + 1) * dh]
        s = jnp.einsum("bqd,bkd->bqk", q.astype(_BF16), k.astype(_BF16),
                       preferred_element_type=jnp.float32)
        p = _softmax_lastdim(s)
        oh = jnp.einsum("bqk,bkd->bqd", p.astype(_BF16), v.astype(_BF16),
                        preferred_element_type=jnp.float32)
        acc = acc + _dot(oh.reshape(B * S, dh), pw[hd * dh:(hd + 1) * dh, :])
    o_ref[...] = (x2 + acc + pb_ref[...]).reshape(B, S, D)


def enc_attn_block(blk, x):
    B, S, D = x.shape
    inputs = [x.astype(jnp.float32),
              blk["ln1_g"].reshape(1, D), blk["ln1_b"].reshape(1, D),
              blk["qkv_w"], blk["qkv_b"].reshape(1, 3 * D),
              blk["proj_w"], blk["proj_b"].reshape(1, D)]
    kern = functools.partial(_enc_attn_kernel, heads=ENC_HEADS, eps=1e-6)
    return pl.pallas_call(
        kern,
        out_shape=jax.ShapeDtypeStruct((B, S, D), jnp.float32),
        grid=(1,),
        in_specs=[_full_spec(a) for a in inputs],
        out_specs=pl.BlockSpec((B, S, D), _zmap(3)),
    )(*inputs)


def _enc_mlp_kernel(x_ref, g_ref, b_ref, w1_ref, b1_ref, w2_ref, b2_ref, o_ref, *, eps):
    B, S, D = x_ref.shape
    x2 = x_ref[...].reshape(B * S, D)
    h = _ln(x2, g_ref[...], b_ref[...], eps)
    h = _gelu(_dot(h, w1_ref[...]) + b1_ref[...])
    o_ref[...] = (x2 + _dot(h, w2_ref[...]) + b2_ref[...]).reshape(B, S, D)


def enc_mlp_block(blk, x):
    B, S, D = x.shape
    inputs = [x.astype(jnp.float32),
              blk["ln2_g"].reshape(1, D), blk["ln2_b"].reshape(1, D),
              blk["mlp1_w"], blk["mlp1_b"].reshape(1, -1),
              blk["mlp2_w"], blk["mlp2_b"].reshape(1, -1)]
    kern = functools.partial(_enc_mlp_kernel, eps=1e-6)
    return pl.pallas_call(
        kern,
        out_shape=jax.ShapeDtypeStruct((B, S, D), jnp.float32),
        grid=(1,),
        in_specs=[_full_spec(a) for a in inputs],
        out_specs=pl.BlockSpec((B, S, D), _zmap(3)),
    )(*inputs)


# ======================================= neck kernel =====================================


def _neck_kernel(xpad_ref, mask_ref, w1_ref, g1_ref, b1_ref, w2_ref, g2_ref, b2_ref, o_ref, *,
                 eps):
    B, HP, WP, D = xpad_ref.shape
    E = w1_ref.shape[1]
    gh, gw = HP - 2, WP - 2
    x2 = xpad_ref[...].reshape(B * HP * WP, D)
    y = _dot(x2, w1_ref[...])                       # 1x1 conv (bias=False)
    y = _ln(y, g1_ref[...], b1_ref[...], eps)
    y = y * mask_ref[...]                           # zero the halo -> true zero padding
    y = y.reshape(B, HP, WP, E)
    w2 = w2_ref[...]
    acc = jnp.zeros((B * gh * gw, E), jnp.float32)
    for di in range(3):                             # 3x3 conv via shifted VMEM reads
        for dj in range(3):
            tap = di * 3 + dj
            win = y[:, di:di + gh, dj:dj + gw, :].reshape(B * gh * gw, E)
            acc = acc + _dot(win, w2[tap * E:(tap + 1) * E, :])
    out = _ln(acc, g2_ref[...], b2_ref[...], eps)
    o_ref[...] = out.reshape(B, gh, gw, E)


def neck(params, x_hw):
    """x_hw: [B, gh, gw, ENC_DIM] -> [B, gh, gw, EMB] (conv1x1 + LN + conv3x3 + LN fused)."""
    B, gh, gw, _ = x_hw.shape
    HP, WP = gh + 2, gw + 2
    xpad = jnp.pad(x_hw.astype(jnp.float32), ((0, 0), (1, 1), (1, 1), (0, 0)))
    interior = jnp.pad(jnp.ones((gh, gw), jnp.float32), ((1, 1), (1, 1)))
    mask = jnp.broadcast_to(interior.reshape(1, HP * WP), (B, HP * WP)).reshape(B * HP * WP, 1)
    inputs = [xpad, mask,
              params["neck_conv1_w"],
              params["neck_ln1_g"].reshape(1, -1), params["neck_ln1_b"].reshape(1, -1),
              params["neck_conv2_w"],
              params["neck_ln2_g"].reshape(1, -1), params["neck_ln2_b"].reshape(1, -1)]
    kern = functools.partial(_neck_kernel, eps=1e-6)
    return pl.pallas_call(
        kern,
        out_shape=jax.ShapeDtypeStruct((B, gh, gw, EMB), jnp.float32),
        grid=(1,),
        in_specs=[_full_spec(a) for a in inputs],
        out_specs=pl.BlockSpec((B, gh, gw, EMB), _zmap(4)),
    )(*inputs)


# ================================ mask-decoder block kernels =============================


def _make_dec_attn_kernel(heads, has_res, has_ln, eps):
    def kernel(*refs):
        (q_ref, k_ref, v_ref, qw_ref, qb_ref, kw_ref, kb_ref,
         vw_ref, vb_ref, ow_ref, ob_ref) = refs[:11]
        i = 11
        r_ref = g_ref = bl_ref = None
        if has_res:
            r_ref = refs[i]; i += 1
        if has_ln:
            g_ref, bl_ref = refs[i], refs[i + 1]; i += 2
        o_ref = refs[i]
        B, Sq, E = q_ref.shape
        Sk = k_ref.shape[1]
        Ci = qw_ref.shape[1]
        dh = Ci // heads
        scale = 1.0 / float(np.sqrt(dh))
        qq = (_dot(q_ref[...].reshape(B * Sq, E), qw_ref[...]) + qb_ref[...]).reshape(B, Sq, Ci)
        kk = (_dot(k_ref[...].reshape(B * Sk, E), kw_ref[...]) + kb_ref[...]).reshape(B, Sk, Ci)
        vv = (_dot(v_ref[...].reshape(B * Sk, E), vw_ref[...]) + vb_ref[...]).reshape(B, Sk, Ci)
        ow = ow_ref[...]
        acc = jnp.zeros((B * Sq, E), jnp.float32)
        for hd in range(heads):
            qh = qq[:, :, hd * dh:(hd + 1) * dh] * scale
            kh = kk[:, :, hd * dh:(hd + 1) * dh]
            vh = vv[:, :, hd * dh:(hd + 1) * dh]
            s = jnp.einsum("bqd,bkd->bqk", qh.astype(_BF16), kh.astype(_BF16),
                           preferred_element_type=jnp.float32)
            p = _softmax_lastdim(s)
            oh = jnp.einsum("bqk,bkd->bqd", p.astype(_BF16), vh.astype(_BF16),
                            preferred_element_type=jnp.float32)
            acc = acc + _dot(oh.reshape(B * Sq, dh), ow[hd * dh:(hd + 1) * dh, :])
        y = acc + ob_ref[...]
        if has_res:
            y = y + r_ref[...].reshape(B * Sq, E)
        if has_ln:
            y = _ln(y, g_ref[...], bl_ref[...], eps)
        o_ref[...] = y.reshape(B, Sq, E)
    return kernel


def dec_attention(ap, q, k, v, *, heads=DEC_HEADS, residual=None, ln=None, eps=1e-5):
    """SAM mask-decoder Attention block, fully fused (projections + MHA + out + res + LN)."""
    B, Sq, E = q.shape
    Ci = ap["q_w"].shape[1]
    inputs = [q.astype(jnp.float32), k.astype(jnp.float32), v.astype(jnp.float32),
              ap["q_w"], ap["q_b"].reshape(1, Ci),
              ap["k_w"], ap["k_b"].reshape(1, Ci),
              ap["v_w"], ap["v_b"].reshape(1, Ci),
              ap["out_w"], ap["out_b"].reshape(1, E)]
    if residual is not None:
        inputs.append(residual.astype(jnp.float32))
    if ln is not None:
        g, b = ln
        inputs.append(g.reshape(1, E))
        inputs.append(b.reshape(1, E))
    kern = _make_dec_attn_kernel(heads, residual is not None, ln is not None, eps)
    return pl.pallas_call(
        kern,
        out_shape=jax.ShapeDtypeStruct((B, Sq, E), jnp.float32),
        grid=(1,),
        in_specs=[_full_spec(a) for a in inputs],
        out_specs=pl.BlockSpec((B, Sq, E), _zmap(3)),
    )(*inputs)


def _dec_mlp_kernel(x_ref, w1_ref, b1_ref, w2_ref, b2_ref, g_ref, b_ref, o_ref, *, eps):
    B, S, E = x_ref.shape
    x2 = x_ref[...].reshape(B * S, E)
    h = jnp.maximum(_dot(x2, w1_ref[...]) + b1_ref[...], 0.0)
    y = x2 + _dot(h, w2_ref[...]) + b2_ref[...]
    o_ref[...] = _ln(y, g_ref[...], b_ref[...], eps).reshape(B, S, E)


def dec_mlp(lp, x, eps=1e-5):
    B, S, E = x.shape
    inputs = [x.astype(jnp.float32),
              lp["mlp1_w"], lp["mlp1_b"].reshape(1, -1),
              lp["mlp2_w"], lp["mlp2_b"].reshape(1, -1),
              lp["norm3_g"].reshape(1, -1), lp["norm3_b"].reshape(1, -1)]
    kern = functools.partial(_dec_mlp_kernel, eps=eps)
    return pl.pallas_call(
        kern,
        out_shape=jax.ShapeDtypeStruct((B, S, E), jnp.float32),
        grid=(1,),
        in_specs=[_full_spec(a) for a in inputs],
        out_specs=pl.BlockSpec((B, S, E), _zmap(3)),
    )(*inputs)


# =============================== decoder heads (hyper / iou / mask) ======================


def _hyper_kernel(t_ref, w1_ref, b1_ref, w2_ref, b2_ref, w3_ref, b3_ref, o_ref):
    t = t_ref[...]
    w1, b1 = w1_ref[...], b1_ref[...]
    w2, b2 = w2_ref[...], b2_ref[...]
    w3, b3 = w3_ref[...], b3_ref[...]
    M = t.shape[1]
    for m in range(M):
        x = t[:, m, :]
        h = jnp.maximum(_dot(x, w1[m]) + b1[m:m + 1, :], 0.0)
        h = jnp.maximum(_dot(h, w2[m]) + b2[m:m + 1, :], 0.0)
        o_ref[:, m, :] = _dot(h, w3[m]) + b3[m:m + 1, :]


def hyper_mlps(params, mask_tokens_out):
    Bv, M, _ = mask_tokens_out.shape
    c8 = EMB // 8
    inputs = [mask_tokens_out.astype(jnp.float32),
              params["hyper_w1"], params["hyper_b1"],
              params["hyper_w2"], params["hyper_b2"],
              params["hyper_w3"], params["hyper_b3"]]
    return pl.pallas_call(
        _hyper_kernel,
        out_shape=jax.ShapeDtypeStruct((Bv, M, c8), jnp.float32),
        grid=(1,),
        in_specs=[_full_spec(a) for a in inputs],
        out_specs=pl.BlockSpec((Bv, M, c8), _zmap(3)),
    )(*inputs)


def _mlp3_kernel(x_ref, w1_ref, b1_ref, w2_ref, b2_ref, w3_ref, b3_ref, o_ref):
    h = jnp.maximum(_dot(x_ref[...], w1_ref[...]) + b1_ref[...], 0.0)
    h = jnp.maximum(_dot(h, w2_ref[...]) + b2_ref[...], 0.0)
    o_ref[...] = _dot(h, w3_ref[...]) + b3_ref[...]


def iou_head(params, x):
    mp = params["iou_mlp"]
    Bv = x.shape[0]
    inputs = [x.astype(jnp.float32),
              mp["w1"], mp["b1"].reshape(1, -1),
              mp["w2"], mp["b2"].reshape(1, -1),
              mp["w3"], mp["b3"].reshape(1, -1)]
    return pl.pallas_call(
        _mlp3_kernel,
        out_shape=jax.ShapeDtypeStruct((Bv, NUM_MASK_TOKENS), jnp.float32),
        grid=(1,),
        in_specs=[_full_spec(a) for a in inputs],
        out_specs=pl.BlockSpec((Bv, NUM_MASK_TOKENS), _zmap(2)),
    )(*inputs)


def _mask_head_kernel(hyper_ref, up_ref, mh_ref, mwt_ref, o_ref, *, g4):
    B = hyper_ref.shape[0]
    low = jnp.einsum("bmc,bsc->bms", hyper_ref[...].astype(_BF16), up_ref[...].astype(_BF16),
                     preferred_element_type=jnp.float32)            # [B, M, (4g)^2]
    mh = mh_ref[...]
    mwt = mwt_ref[...]
    # only mask token 0 is consumed (multimask_output=False); tokens 1..3 are unused outputs
    for b in range(B):
        m0 = low[b, 0:1, :].reshape(g4, g4)
        o_ref[b] = _dot(_dot(mh, m0), mwt)                          # fused bilinear upsample


def bilinear_matrix(n_in, n_out):
    """Interpolation matrix matching F.interpolate(mode='bilinear', align_corners=False)."""
    m = np.zeros((n_out, n_in), np.float32)
    scale = n_in / n_out
    for o in range(n_out):
        src = (o + 0.5) * scale - 0.5
        i0 = int(np.floor(src))
        frac = src - i0
        i0c = min(max(i0, 0), n_in - 1)
        i1c = min(max(i0 + 1, 0), n_in - 1)
        m[o, i0c] += 1.0 - frac
        m[o, i1c] += frac
    return jnp.asarray(m)


def mask_head(hyper_in, up_flat, out_size):
    Bv = hyper_in.shape[0]
    H, W = out_size
    g4 = 4 * GRID
    mh = bilinear_matrix(g4, H)
    mwt = bilinear_matrix(g4, W).T
    inputs = [hyper_in.astype(jnp.float32), up_flat.astype(jnp.float32), mh, mwt]
    kern = functools.partial(_mask_head_kernel, g4=g4)
    return pl.pallas_call(
        kern,
        out_shape=jax.ShapeDtypeStruct((Bv, H, W), jnp.float32),
        grid=(1,),
        in_specs=[_full_spec(a) for a in inputs],
        out_specs=pl.BlockSpec((Bv, H, W), _zmap(3)),
    )(*inputs)


# =================================== parameter initialization ============================


def init_params(seed: int = 0):
    key = jax.random.PRNGKey(seed)
    keys = iter(jax.random.split(key, 512))

    def w(shape, std=0.02):
        return std * jax.random.normal(next(keys), shape, dtype=jnp.float32)

    def zeros(*shape):
        return jnp.zeros(shape, jnp.float32)

    def ones(*shape):
        return jnp.ones(shape, jnp.float32)

    p = {}
    # ---- image encoder (ViT) ----
    p["patch_w"] = w((3 * PATCH * PATCH, ENC_DIM))
    p["patch_b"] = zeros(ENC_DIM)
    p["pos_embed"] = w((GRID * GRID, ENC_DIM))
    blocks = []
    for _ in range(ENC_DEPTH):
        blocks.append(dict(
            ln1_g=ones(ENC_DIM), ln1_b=zeros(ENC_DIM),
            qkv_w=w((ENC_DIM, 3 * ENC_DIM)), qkv_b=zeros(3 * ENC_DIM),
            proj_w=w((ENC_DIM, ENC_DIM)), proj_b=zeros(ENC_DIM),
            ln2_g=ones(ENC_DIM), ln2_b=zeros(ENC_DIM),
            mlp1_w=w((ENC_DIM, ENC_MLP)), mlp1_b=zeros(ENC_MLP),
            mlp2_w=w((ENC_MLP, ENC_DIM)), mlp2_b=zeros(ENC_DIM),
        ))
    p["blocks"] = blocks
    p["neck_conv1_w"] = w((ENC_DIM, EMB))                 # 1x1 conv, bias=False
    p["neck_ln1_g"] = ones(EMB); p["neck_ln1_b"] = zeros(EMB)
    p["neck_conv2_w"] = w((EMB * 9, EMB))                 # 3x3 conv, bias=False
    p["neck_ln2_g"] = ones(EMB); p["neck_ln2_b"] = zeros(EMB)

    # ---- prompt encoder ----
    p["pe_gaussian"] = jax.random.normal(next(keys), (2, EMB // 2), jnp.float32)
    p["point_embed_neg"] = w((EMB,))
    p["point_embed_pos"] = w((EMB,))
    p["not_a_point"] = w((EMB,))
    p["no_mask"] = w((EMB,))

    # ---- mask decoder ----
    p["iou_token"] = w((1, EMB))
    p["mask_tokens"] = w((NUM_MASK_TOKENS, EMB))

    def attn_params(dim, internal):
        return dict(q_w=w((dim, internal)), q_b=zeros(internal),
                    k_w=w((dim, internal)), k_b=zeros(internal),
                    v_w=w((dim, internal)), v_b=zeros(internal),
                    out_w=w((internal, dim)), out_b=zeros(dim))

    layers = []
    for _ in range(DEC_DEPTH):
        layers.append(dict(
            self_attn=attn_params(EMB, EMB),
            norm1_g=ones(EMB), norm1_b=zeros(EMB),
            cross_t2i=attn_params(EMB, EMB // 2),          # attention_downsample_rate=2
            norm2_g=ones(EMB), norm2_b=zeros(EMB),
            mlp1_w=w((EMB, DEC_MLP)), mlp1_b=zeros(DEC_MLP),
            mlp2_w=w((DEC_MLP, EMB)), mlp2_b=zeros(EMB),
            norm3_g=ones(EMB), norm3_b=zeros(EMB),
            cross_i2t=attn_params(EMB, EMB // 2),
            norm4_g=ones(EMB), norm4_b=zeros(EMB),
        ))
    p["transformer"] = dict(
        layers=layers,
        final_attn=attn_params(EMB, EMB // 2),
        norm_final_g=ones(EMB), norm_final_b=zeros(EMB),
    )
    c4, c8 = EMB // 4, EMB // 8
    # conv-transpose weight columns laid out as (kh, kw, c_out) so the per-pixel channel
    # LayerNorm is a contiguous grouped-LN epilogue inside the fused kernel
    p["up1_w"] = w((EMB, 4 * c4)); p["up1_b"] = zeros(c4)
    p["up_ln_g"] = ones(c4); p["up_ln_b"] = zeros(c4)
    p["up2_w"] = w((c4, 4 * c8)); p["up2_b"] = zeros(c8)
    p["hyper_w1"] = w((NUM_MASK_TOKENS, EMB, EMB)); p["hyper_b1"] = zeros(NUM_MASK_TOKENS, EMB)
    p["hyper_w2"] = w((NUM_MASK_TOKENS, EMB, EMB)); p["hyper_b2"] = zeros(NUM_MASK_TOKENS, EMB)
    p["hyper_w3"] = w((NUM_MASK_TOKENS, EMB, c8)); p["hyper_b3"] = zeros(NUM_MASK_TOKENS, c8)
    p["iou_mlp"] = dict(w1=w((EMB, EMB)), b1=zeros(EMB),
                        w2=w((EMB, EMB)), b2=zeros(EMB),
                        w3=w((EMB, NUM_MASK_TOKENS)), b3=zeros(NUM_MASK_TOKENS))
    return p


# ====================================== SAM sub-modules ==================================


def image_encoder(params, images):
    """images: [B, 3, H, W] (NCHW) -> image embeddings [B, EMB, GRID, GRID] (NCHW)."""
    B, C, H, W = images.shape
    gh, gw = H // PATCH, W // PATCH
    x = images.reshape(B, C, gh, PATCH, gw, PATCH)
    x = x.transpose(0, 2, 4, 1, 3, 5).reshape(B * gh * gw, C * PATCH * PATCH)
    x = fused_linear(x, params["patch_w"], bias=params["patch_b"])        # patch embed
    x = x.reshape(B, gh * gw, ENC_DIM) + params["pos_embed"][None]
    for blk in params["blocks"]:
        x = enc_attn_block(blk, x)
        x = enc_mlp_block(blk, x)
    out = neck(params, x.reshape(B, gh, gw, ENC_DIM))
    return out.transpose(0, 3, 1, 2)                                      # NCHW


def pe_encoding(params, coords01):
    # tiny (..,2) x (2, EMB//2) random-Fourier projection + sin/cos: left to plain JAX
    c = 2.0 * coords01 - 1.0
    c2 = jnp.matmul(c, params["pe_gaussian"]) * (2.0 * np.pi)
    return jnp.concatenate([jnp.sin(c2), jnp.cos(c2)], axis=-1)


def prompt_encoder(params, point_coords, point_labels, img_size):
    """point_coords: [Bv, N, 2]; labels: [Bv, N] -> sparse [Bv, N+1, EMB], dense [1, EMB, g, g]."""
    H, W = img_size
    Bv = point_coords.shape[0]
    pad_pt = jnp.zeros((Bv, 1, 2), jnp.float32)
    pad_lb = -jnp.ones((Bv, 1), jnp.float32)
    pts = jnp.concatenate([point_coords, pad_pt], axis=1) + 0.5
    labels = jnp.concatenate([point_labels, pad_lb], axis=1)
    coords01 = pts / jnp.array([float(W), float(H)], jnp.float32)
    pe = pe_encoding(params, coords01)
    lbl = labels[..., None]
    pe = jnp.where(lbl == -1, 0.0, pe)
    pe = pe + jnp.where(lbl == -1, params["not_a_point"][None, None], 0.0)
    pe = pe + jnp.where(lbl == 0, params["point_embed_neg"][None, None], 0.0)
    pe = pe + jnp.where(lbl == 1, params["point_embed_pos"][None, None], 0.0)
    dense = jnp.broadcast_to(params["no_mask"].reshape(1, EMB, 1, 1), (1, EMB, GRID, GRID))
    return pe, dense


def get_dense_pe(params):
    g = GRID
    ys = (jnp.arange(g, dtype=jnp.float32) + 0.5) / g
    xs = (jnp.arange(g, dtype=jnp.float32) + 0.5) / g
    gy, gx = jnp.meshgrid(ys, xs, indexing="ij")
    coords = jnp.stack([gx, gy], axis=-1)        # (x, y)
    pe = pe_encoding(params, coords)             # [g, g, EMB]
    return pe.transpose(2, 0, 1)[None]           # [1, EMB, g, g]


def two_way_transformer(tp, image_embedding, image_pe, point_embedding):
    Bv, C, h, w = image_embedding.shape
    keys = image_embedding.reshape(Bv, C, h * w).transpose(0, 2, 1)
    key_pe = image_pe.reshape(1, C, h * w).transpose(0, 2, 1)
    queries = point_embedding

    for i, lp in enumerate(tp["layers"]):
        if i == 0:   # skip_first_layer_pe: queries replaced by self-attention output
            queries = dec_attention(lp["self_attn"], queries, queries, queries,
                                    residual=None, ln=(lp["norm1_g"], lp["norm1_b"]))
        else:
            q = queries + point_embedding
            queries = dec_attention(lp["self_attn"], q, q, queries,
                                    residual=queries, ln=(lp["norm1_g"], lp["norm1_b"]))

        q = queries + point_embedding
        k = keys + key_pe
        queries = dec_attention(lp["cross_t2i"], q, k, keys,
                                residual=queries, ln=(lp["norm2_g"], lp["norm2_b"]))

        queries = dec_mlp(lp, queries)

        q = queries + point_embedding
        k = keys + key_pe
        keys = dec_attention(lp["cross_i2t"], k, q, queries,
                             residual=keys, ln=(lp["norm4_g"], lp["norm4_b"]))

    q = queries + point_embedding
    k = keys + key_pe
    queries = dec_attention(tp["final_attn"], q, k, keys,
                            residual=queries, ln=(tp["norm_final_g"], tp["norm_final_b"]))
    return queries, keys


def mask_decoder(params, image_embeddings, image_pe, sparse, dense, out_size):
    """Batched over Bv prompted images; returns upsampled mask-0 [Bv, H, W] and iou [Bv, 1]."""
    Bv = image_embeddings.shape[0]
    g = GRID
    c4, c8 = EMB // 4, EMB // 8
    output_tokens = jnp.concatenate([params["iou_token"], params["mask_tokens"]], axis=0)
    output_tokens = jnp.broadcast_to(output_tokens[None], (Bv,) + output_tokens.shape)
    tokens = jnp.concatenate([output_tokens, sparse], axis=1)         # [Bv, T, EMB]
    src = image_embeddings + dense                                    # [Bv, EMB, g, g]

    hs, src_out = two_way_transformer(params["transformer"], src, image_pe, tokens)
    iou_token_out = hs[:, 0, :]
    mask_tokens_out = hs[:, 1:1 + NUM_MASK_TOKENS, :]

    # output upscaling: two stride-2 conv-transposes as fused matmuls + spatial interleave
    up1 = fused_linear(src_out.reshape(Bv * g * g, EMB), params["up1_w"],
                       bias=jnp.tile(params["up1_b"], 4),
                       ln=(params["up_ln_g"], params["up_ln_b"]), ln_groups=4,
                       act="gelu", eps=1e-6)
    up1 = up1.reshape(Bv, g, g, 2, 2, c4).transpose(0, 1, 3, 2, 4, 5)
    up1 = up1.reshape(Bv, 2 * g, 2 * g, c4)
    up2 = fused_linear(up1.reshape(Bv * 4 * g * g, c4), params["up2_w"],
                       bias=jnp.tile(params["up2_b"], 4), act="gelu")
    up2 = up2.reshape(Bv, 2 * g, 2 * g, 2, 2, c8).transpose(0, 1, 3, 2, 4, 5)
    up_flat = up2.reshape(Bv, (4 * g) * (4 * g), c8)                  # [Bv, (4g)^2, c8]

    hyper_in = hyper_mlps(params, mask_tokens_out)                    # [Bv, M, c8]
    iou_pred = iou_head(params, iou_token_out)                        # [Bv, M]
    masks = mask_head(hyper_in, up_flat, out_size)                    # [Bv, H, W]
    return masks, iou_pred[:, 0:1]


# jitted entry points: encoder runs once per forward, decoder once per prompt-shape group
_encode_jit = jax.jit(image_encoder)
_dense_pe_jit = jax.jit(get_dense_pe)


@functools.partial(jax.jit, static_argnames=("img_h", "img_w"))
def _decode_group(params, emb, image_pe, coords, labels, *, img_h, img_w):
    sparse, dense = prompt_encoder(params, coords, labels, (img_h, img_w))
    return mask_decoder(params, emb, image_pe, sparse, dense, (img_h, img_w))


# ====================================== top-level forward =================================


def sam_forward(params, images, points=None):
    """Mirrors SAMForFineTuning.forward: images [B,3,H,W] -> (masks [B,1,H,W], metrics)."""
    B, _, H, W = images.shape
    if points is None:
        points = [np.array([[W // 2, H // 2]], dtype=np.float32) for _ in range(B)]
    points = list(points)
    if len(points) < B:
        points.extend([np.array([[0, 0]], dtype=np.float32)] * (B - len(points)))

    image_embeddings = _encode_jit(params, images)     # [B, EMB, GRID, GRID]
    image_pe = _dense_pe_jit(params)                   # [1, EMB, GRID, GRID]

    # host-side prompt filtering (mirrors the reference control flow), then group valid
    # images by valid-point count so the whole decoder pipeline runs batched per group.
    groups = {}
    for b in range(B):
        pc = points[b]
        pc_np = None if pc is None else np.asarray(pc, dtype=np.float32)
        if pc_np is None or pc_np.size == 0 or bool(np.all(pc_np == 0)):
            continue
        pc_np = pc_np.reshape(-1, 2)
        vp = pc_np[~np.all(pc_np == 0, axis=1)]
        if vp.shape[0] == 0:
            continue
        groups.setdefault(vp.shape[0], []).append((b, vp))

    per_image_mask = {}
    per_image_iou = {}
    for n_pts, items in groups.items():
        idxs = [b for b, _ in items]
        coords = jnp.asarray(np.stack([vp for _, vp in items], axis=0))   # [Bg, n, 2]
        labels = jnp.ones((len(idxs), n_pts), jnp.float32)
        emb = image_embeddings[jnp.asarray(idxs)]
        masks_g, iou_g = _decode_group(params, emb, image_pe, coords, labels,
                                       img_h=H, img_w=W)
        for j, b in enumerate(idxs):
            per_image_mask[b] = masks_g[j][None, None]                    # [1, 1, H, W]
            per_image_iou[b] = iou_g[j, 0]

    # single device->host transfer for the IoU metrics (no per-image sync inside the loop)
    iou_host = {}
    if per_image_iou:
        order = sorted(per_image_iou)
        vals = np.asarray(jax.device_get(jnp.stack([per_image_iou[b] for b in order])))
        iou_host = {b: float(v) for b, v in zip(order, vals)}

    mask_preds = []
    metrics = {"iou": [], "stability_score": []}
    for b in range(B):
        if b in per_image_mask:
            mask_preds.append(per_image_mask[b])
            metrics["iou"].append(iou_host[b])
        else:
            mask_preds.append(jnp.zeros((1, 1, H, W), jnp.float32))
            metrics["iou"].append(0.0)
        metrics["stability_score"].append(0.0)

    mask_predictions = jnp.concatenate(mask_preds, axis=0)
    return mask_predictions, metrics


if __name__ == "__main__":
    params = init_params(0)
    key = jax.random.PRNGKey(0)
    images = jax.random.normal(key, (2, 3, IMG_SIZE, IMG_SIZE), dtype=jnp.float32)

    masks, metrics = sam_forward(params, images)          # default: center point per image
    masks = jax.block_until_ready(masks)

    assert masks.shape == (2, 1, IMG_SIZE, IMG_SIZE), masks.shape
    assert len(metrics["iou"]) == 2 and len(metrics["stability_score"]) == 2
    assert all(isinstance(v, float) for v in metrics["iou"])
    assert bool(jnp.all(jnp.isfinite(masks)))
    print("KERNEL_OK")
</pallas_src>

<mosaic_0001>
module attributes {stable_mosaic.version = 11 : i64} {
  func.func @kernel(%arg0: i32, %arg1: memref<32x768xf32, #tpu.memory_space<vmem>>, %arg2: memref<768x64xf32, #tpu.memory_space<vmem>>, %arg3: memref<1x64xf32, #tpu.memory_space<vmem>>, %arg4: memref<32x64xf32, #tpu.memory_space<vmem>>) attributes {dimension_semantics = [#tpu.dimension_semantics<arbitrary>], iteration_bounds = array<i64: 1>, scalar_prefetch = 0 : i64, scratch_operands = 0 : i64, tpu.core_type = #tpu.core_type<tc>, window_params = [{pipeline_mode = #tpu.pipeline_mode<synchronous>, transform_indices = @transform_0, window_bounds = array<i64: 32, 768>}, {pipeline_mode = #tpu.pipeline_mode<synchronous>, transform_indices = @transform_1, window_bounds = array<i64: 768, 64>}, {pipeline_mode = #tpu.pipeline_mode<synchronous>, transform_indices = @transform_2, window_bounds = array<i64: 1, 64>}, {pipeline_mode = #tpu.pipeline_mode<synchronous>, transform_indices = @transform_3, window_bounds = array<i64: 32, 64>}]} {
    %c0 = arith.constant 0 : index
    %c0_0 = arith.constant 0 : index
    %0 = vector.load %arg1[%c0, %c0_0] : memref<32x768xf32, #tpu.memory_space<vmem>>, vector<32x768xf32>
    %c0_1 = arith.constant 0 : index
    %c0_2 = arith.constant 0 : index
    %1 = vector.load %arg2[%c0_1, %c0_2] : memref<768x64xf32, #tpu.memory_space<vmem>>, vector<768x64xf32>
    %2 = arith.truncf %0 : vector<32x768xf32> to vector<32x768xbf16>
    %3 = arith.truncf %1 : vector<768x64xf32> to vector<768x64xbf16>
    %cst = arith.constant dense<0.000000e+00> : vector<32x64xf32>
    %4 = tpu.matmul %2, %3, %cst {dimension_numbers = #tpu.dot_dimension_numbers<[1], [0], [0], [1], [0, 0, 1, 1], [], []>} : vector<32x768xbf16>, vector<768x64xbf16>, vector<32x64xf32> -> vector<32x64xf32>
    %c0_3 = arith.constant 0 : index
    %c0_4 = arith.constant 0 : index
    %5 = vector.load %arg3[%c0_3, %c0_4] : memref<1x64xf32, #tpu.memory_space<vmem>>, vector<1x64xf32>
    %6 = vector.broadcast %5 : vector<1x64xf32> to vector<32x64xf32>
    %7 = arith.addf %4, %6 : vector<32x64xf32>
    %c0_5 = arith.constant 0 : index
    %c0_6 = arith.constant 0 : index
    %8 = vector.load %arg4[%c0_5, %c0_6] : memref<32x64xf32, #tpu.memory_space<vmem>>, vector<32x64xf32>
    tpu.vector_store %arg4[%c0_5, %c0_6], %7 {strides = array<i32>} : memref<32x64xf32, #tpu.memory_space<vmem>>, vector<32x64xf32>,
    return
  }
  func.func @transform_0(%arg0: i32) -> (i32, i32) {
    %c0_i32 = arith.constant 0 : i32
    %c0_i32_0 = arith.constant 0 : i32
    %c0_i32_1 = arith.constant 0 : i32
    return %c0_i32, %c0_i32_0 : i32, i32
  }
  func.func @transform_1(%arg0: i32) -> (i32, i32) {
    %c0_i32 = arith.constant 0 : i32
    %c0_i32_0 = arith.constant 0 : i32
    %c0_i32_1 = arith.constant 0 : i32
    return %c0_i32, %c0_i32_0 : i32, i32
  }
  func.func @transform_2(%arg0: i32) -> (i32, i32) {
    %c0_i32 = arith.constant 0 : i32
    %c0_i32_0 = arith.constant 0 : i32
    %c0_i32_1 = arith.constant 0 : i32
    return %c0_i32, %c0_i32_0 : i32, i32
  }
  func.func @transform_3(%arg0: i32) -> (i32, i32) {
    %c0_i32 = arith.constant 0 : i32
    %c0_i32_0 = arith.constant 0 : i32
    %c0_i32_1 = arith.constant 0 : i32
    return %c0_i32, %c0_i32_0 : i32, i32
  }
}

module attributes {stable_mosaic.version = 11 : i64} {
  func.func @_enc_attn_kernel(%arg0: i32, %arg1: memref<2x16x64xf32, #tpu.memory_space<vmem>>, %arg2: memref<1x64xf32, #tpu.memory_space<vmem>>, %arg3: memref<1x64xf32, #tpu.memory_space<vmem>>, %arg4: memref<64x192xf32, #tpu.memory_space<vmem>>, %arg5: memref<1x192xf32, #tpu.memory_space<vmem>>, %arg6: memref<64x64xf32, #tpu.memory_space<vmem>>, %arg7: memref<1x64xf32, #tpu.memory_space<vmem>>, %arg8: memref<2x16x64xf32, #tpu.memory_space<vmem>>) attributes {dimension_semantics = [#tpu.dimension_semantics<arbitrary>], iteration_bounds = array<i64: 1>, scalar_prefetch = 0 : i64, scratch_operands = 0 : i64, tpu.core_type = #tpu.core_type<tc>, window_params = [{pipeline_mode = #tpu.pipeline_mode<synchronous>, transform_indices = @transform_0, window_bounds = array<i64: 2, 16, 64>}, {pipeline_mode = #tpu.pipeline_mode<synchronous>, transform_indices = @transform_1, window_bounds = array<i64: 1, 64>}, {pipeline_mode = #tpu.pipeline_mode<synchronous>, transform_indices = @transform_2, window_bounds = array<i64: 1, 64>}, {pipeline_mode = #tpu.pipeline_mode<synchronous>, transform_indices = @transform_3, window_bounds = array<i64: 64, 192>}, {pipeline_mode = #tpu.pipeline_mode<synchronous>, transform_indices = @transform_4, window_bounds = array<i64: 1, 192>}, {pipeline_mode = #tpu.pipeline_mode<synchronous>, transform_indices = @transform_5, window_bounds = array<i64: 64, 64>}, {pipeline_mode = #tpu.pipeline_mode<synchronous>, transform_indices = @transform_6, window_bounds = array<i64: 1, 64>}, {pipeline_mode = #tpu.pipeline_mode<synchronous>, transform_indices = @transform_7, window_bounds = array<i64: 2, 16, 64>}]} {
    %c0 = arith.constant 0 : index
    %c0_0 = arith.constant 0 : index
    %c0_1 = arith.constant 0 : index
    %0 = vector.load %arg1[%c0, %c0_0, %c0_1] : memref<2x16x64xf32, #tpu.memory_space<vmem>>, vector<2x16x64xf32>
    %1 = vector.shape_cast %0 : vector<2x16x64xf32> to vector<32x64xf32>
    %c0_2 = arith.constant 0 : index
    %c0_3 = arith.constant 0 : index
    %2 = vector.load %arg2[%c0_2, %c0_3] : memref<1x64xf32, #tpu.memory_space<vmem>>, vector<1x64xf32>
    %c0_4 = arith.constant 0 : index
    %c0_5 = arith.constant 0 : index
    %3 = vector.load %arg3[%c0_4, %c0_5] : memref<1x64xf32, #tpu.memory_space<vmem>>, vector<1x64xf32>
    %cst = arith.constant dense<0.000000e+00> : vector<32xf32>
    %4 = vector.multi_reduction <add>, %1, %cst [1] : vector<32x64xf32> to vector<32xf32>
    %5 = vector.shape_cast %4 : vector<32xf32> to vector<32x1xf32>
    %cst_6 = arith.constant 6.400000e+01 : f32
    %6 = vector.broadcast %cst_6 : f32 to vector<32x1xf32>
    %7 = arith.divf %5, %6 : vector<32x1xf32>
    %8 = vector.broadcast %7 : vector<32x1xf32> to vector<32x64xf32>
    %9 = arith.subf %1, %8 : vector<32x64xf32>
    %10 = arith.mulf %9, %9 : vector<32x64xf32>
    %cst_7 = arith.constant dense<0.000000e+00> : vector<32xf32>
    %11 = vector.multi_reduction <add>, %10, %cst_7 [1] : vector<32x64xf32> to vector<32xf32>
    %12 = vector.shape_cast %11 : vector<32xf32> to vector<32x1xf32>
    %cst_8 = arith.constant 6.400000e+01 : f32
    %13 = vector.broadcast %cst_8 : f32 to vector<32x1xf32>
    %14 = arith.divf %12, %13 : vector<32x1xf32>
    %15 = vector.broadcast %7 : vector<32x1xf32> to vector<32x64xf32>
    %16 = arith.subf %1, %15 : vector<32x64xf32>
    %cst_9 = arith.constant 9.99999997E-7 : f32
    %17 = vector.broadcast %cst_9 : f32 to vector<32x1xf32>
    %18 = arith.addf %14, %17 : vector<32x1xf32>
    %19 = math.rsqrt %18 : vector<32x1xf32>
    %20 = vector.broadcast %19 : vector<32x1xf32> to vector<32x64xf32>
    %21 = arith.mulf %16, %20 : vector<32x64xf32>
    %22 = vector.broadcast %2 : vector<1x64xf32> to vector<32x64xf32>
    %23 = arith.mulf %21, %22 : vector<32x64xf32>
    %24 = vector.broadcast %3 : vector<1x64xf32> to vector<32x64xf32>
    %25 = arith.addf %23, %24 : vector<32x64xf32>
    %c0_10 = arith.constant 0 : index
    %c0_11 = arith.constant 0 : index
    %26 = vector.load %arg4[%c0_10, %c0_11] : memref<64x192xf32, #tpu.memory_space<vmem>>, vector<64x192xf32>
    %27 = arith.truncf %25 : vector<32x64xf32> to vector<32x64xbf16>
    %28 = arith.truncf %26 : vector<64x192xf32> to vector<64x192xbf16>
    %cst_12 = arith.constant dense<0.000000e+00> : vector<32x192xf32>
    %29 = tpu.matmul %27, %28, %cst_12 {dimension_numbers = #tpu.dot_dimension_numbers<[1], [0], [0], [1], [0, 0, 1, 1], [], []>} : vector<32x64xbf16>, vector<64x192xbf16>, vector<32x192xf32> -> vector<32x192xf32>
    %c0_13 = arith.constant 0 : index
    %c0_14 = arith.constant 0 : index
    %30 = vector.load %arg5[%c0_13, %c0_14] : memref<1x192xf32, #tpu.memory_space<vmem>>, vector<1x192xf32>
    %31 = vector.broadcast %30 : vector<1x192xf32> to vector<32x192xf32>
    %32 = arith.addf %29, %31 : vector<32x192xf32>
    %33 = vector.shape_cast %32 : vector<32x192xf32> to vector<2x16x192xf32>
    %c0_15 = arith.constant 0 : index
    %c0_16 = arith.constant 0 : index
    %34 = vector.load %arg6[%c0_15, %c0_16] : memref<64x64xf32, #tpu.memory_space<vmem>>, vector<64x64xf32>
    %cst_17 = arith.constant 0.000000e+00 : f32
    %35 = vector.broadcast %cst_17 : f32 to vector<32x64xf32>
    %36 = vector.extract_strided_slice %33 {offsets = [0, 0, 0], sizes = [2, 16, 32], strides = [1, 1, 1]} : vector<2x16x192xf32> to vector<2x16x32xf32>
    %cst_18 = arith.constant 0.176776692 : f32
    %37 = vector.broadcast %cst_18 : f32 to vector<2x16x32xf32>
    %38 = arith.mulf %36, %37 : vector<2x16x32xf32>
    %39 = vector.extract_strided_slice %33 {offsets = [0, 0, 64], sizes = [2, 16, 32], strides = [1, 1, 1]} : vector<2x16x192xf32> to vector<2x16x32xf32>
    %40 = vector.extract_strided_slice %33 {offsets = [0, 0, 128], sizes = [2, 16, 32], strides = [1, 1, 1]} : vector<2x16x192xf32> to vector<2x16x32xf32>
    %41 = arith.truncf %38 : vector<2x16x32xf32> to vector<2x16x32xbf16>
    %42 = arith.truncf %39 : vector<2x16x32xf32> to vector<2x16x32xbf16>
    "tpu.trace_start"() <{level = 10 : i32, message = "bqd,bkd->bqk"}> : () -> ()
    %cst_19 = arith.constant dense<0.000000e+00> : vector<2x16x16xf32>
    %43 = tpu.matmul %41, %42, %cst_19 {dimension_numbers = #tpu.dot_dimension_numbers<[2], [2], [1], [1], [0, 0, 0, 1, 1, 1], [0], [0]>} : vector<2x16x32xbf16>, vector<2x16x32xbf16>, vector<2x16x16xf32> -> vector<2x16x16xf32>
    "tpu.trace_stop"() : () -> ()
    %cst_20 = arith.constant dense<0xFF800000> : vector<2x16xf32>
    %44 = vector.multi_reduction <maximumf>, %43, %cst_20 [2] : vector<2x16x16xf32> to vector<2x16xf32>
    %45 = vector.shape_cast %44 : vector<2x16xf32> to vector<2x16x1xf32>
    %46 = vector.broadcast %45 : vector<2x16x1xf32> to vector<2x16x16xf32>
    %47 = arith.subf %43, %46 : vector<2x16x16xf32>
    %48 = math.exp %47 : vector<2x16x16xf32>
    %cst_21 = arith.constant dense<0.000000e+00> : vector<2x16xf32>
    %49 = vector.multi_reduction <add>, %48, %cst_21 [2] : vector<2x16x16xf32> to vector<2x16xf32>
    %50 = vector.shape_cast %49 : vector<2x16xf32> to vector<2x16x1xf32>
    %51 = tpu.reciprocal %50 {approx = true} : vector<2x16x1xf32> -> vector<2x16x1xf32>
    %52 = vector.broadcast %51 : vector<2x16x1xf32> to vector<2x16x16xf32>
    %53 = arith.mulf %48, %52 : vector<2x16x16xf32>
    %54 = arith.truncf %53 : vector<2x16x16xf32> to vector<2x16x16xbf16>
    %55 = arith.truncf %40 : vector<2x16x32xf32> to vector<2x16x32xbf16>
    "tpu.trace_start"() <{level = 10 : i32, message = "bqk,bkd->bqd"}> : () -> ()
    %cst_22 = arith.constant dense<0.000000e+00> : vector<2x16x32xf32>
    %56 = tpu.matmul %54, %55, %cst_22 {dimension_numbers = #tpu.dot_dimension_numbers<[2], [1], [1], [2], [0, 0, 0, 1, 1, 2], [0], [0]>} : vector<2x16x16xbf16>, vector<2x16x32xbf16>, vector<2x16x32xf32> -> vector<2x16x32xf32>
    "tpu.trace_stop"() : () -> ()
    %57 = vector.shape_cast %56 : vector<2x16x32xf32> to vector<32x32xf32>
    %58 = vector.extract_strided_slice %34 {offsets = [0, 0], sizes = [32, 64], strides = [1, 1]} : vector<64x64xf32> to vector<32x64xf32>
    %59 = arith.truncf %57 : vector<32x32xf32> to vector<32x32xbf16>
    %60 = arith.truncf %58 : vector<32x64xf32> to vector<32x64xbf16>
    %cst_23 = arith.constant dense<0.000000e+00> : vector<32x64xf32>
    %61 = tpu.matmul %59, %60, %cst_23 {dimension_numbers = #tpu.dot_dimension_numbers<[1], [0], [0], [1], [0, 0, 1, 1], [], []>} : vector<32x32xbf16>, vector<32x64xbf16>, vector<32x64xf32> -> vector<32x64xf32>
    %62 = arith.addf %35, %61 : vector<32x64xf32>
    %63 = vector.extract_strided_slice %33 {offsets = [0, 0, 32], sizes = [2, 16, 32], strides = [1, 1, 1]} : vector<2x16x192xf32> to vector<2x16x32xf32>
    %cst_24 = arith.constant 0.176776692 : f32
    %64 = vector.broadcast %cst_24 : f32 to vector<2x16x32xf32>
    %65 = arith.mulf %63, %64 : vector<2x16x32xf32>
    %66 = vector.extract_strided_slice %33 {offsets = [0, 0, 96], sizes = [2, 16, 32], strides = [1, 1, 1]} : vector<2x16x192xf32> to vector<2x16x32xf32>
    %67 = vector.extract_strided_slice %33 {offsets = [0, 0, 160], sizes = [2, 16, 32], strides = [1, 1, 1]} : vector<2x16x192xf32> to vector<2x16x32xf32>
    %68 = arith.truncf %65 : vector<2x16x32xf32> to vector<2x16x32xbf16>
    %69 = arith.truncf %66 : vector<2x16x32xf32> to vector<2x16x32xbf16>
    "tpu.trace_start"() <{level = 10 : i32, message = "bqd,bkd->bqk"}> : () -> ()
    %cst_25 = arith.constant dense<0.000000e+00> : vector<2x16x16xf32>
    %70 = tpu.matmul %68, %69, %cst_25 {dimension_numbers = #tpu.dot_dimension_numbers<[2], [2], [1], [1], [0, 0, 0, 1, 1, 1], [0], [0]>} : vector<2x16x32xbf16>, vector<2x16x32xbf16>, vector<2x16x16xf32> -> vector<2x16x16xf32>
    "tpu.trace_stop"() : () -> ()
    %cst_26 = arith.constant dense<0xFF800000> : vector<2x16xf32>
    %71 = vector.multi_reduction <maximumf>, %70, %cst_26 [2] : vector<2x16x16xf32> to vector<2x16xf32>
    %72 = vector.shape_cast %71 : vector<2x16xf32> to vector<2x16x1xf32>
    %73 = vector.broadcast %72 : vector<2x16x1xf32> to vector<2x16x16xf32>
    %74 = arith.subf %70, %73 : vector<2x16x16xf32>
    %75 = math.exp %74 : vector<2x16x16xf32>
    %cst_27 = arith.constant dense<0.000000e+00> : vector<2x16xf32>
    %76 = vector.multi_reduction <add>, %75, %cst_27 [2] : vector<2x16x16xf32> to vector<2x16xf32>
    %77 = vector.shape_cast %76 : vector<2x16xf32> to vector<2x16x1xf32>
    %78 = tpu.reciprocal %77 {approx = true} : vector<2x16x1xf32> -> vector<2x16x1xf32>
    %79 = vector.broadcast %78 : vector<2x16x1xf32> to vector<2x16x16xf32>
    %80 = arith.mulf %75, %79 : vector<2x16x16xf32>
    %81 = arith.truncf %80 : vector<2x16x16xf32> to vector<2x16x16xbf16>
    %82 = arith.truncf %67 : vector<2x16x32xf32> to vector<2x16x32xbf16>
    "tpu.trace_start"() <{level = 10 : i32, message = "bqk,bkd->bqd"}> : () -> ()
    %cst_28 = arith.constant dense<0.000000e+00> : vector<2x16x32xf32>
    %83 = tpu.matmul %81, %82, %cst_28 {dimension_numbers = #tpu.dot_dimension_numbers<[2], [1], [1], [2], [0, 0, 0, 1, 1, 2], [0], [0]>} : vector<2x16x16xbf16>, vector<2x16x32xbf16>, vector<2x16x32xf32> -> vector<2x16x32xf32>
    "tpu.trace_stop"() : () -> ()
    %84 = vector.shape_cast %83 : vector<2x16x32xf32> to vector<32x32xf32>
    %85 = vector.extract_strided_slice %34 {offsets = [32, 0], sizes = [32, 64], strides = [1, 1]} : vector<64x64xf32> to vector<32x64xf32>
    %86 = arith.truncf %84 : vector<32x32xf32> to vector<32x32xbf16>
    %87 = arith.truncf %85 : vector<32x64xf32> to vector<32x64xbf16>
    %cst_29 = arith.constant dense<0.000000e+00> : vector<32x64xf32>
    %88 = tpu.matmul %86, %87, %cst_29 {dimension_numbers = #tpu.dot_dimension_numbers<[1], [0], [0], [1], [0, 0, 1, 1], [], []>} : vector<32x32xbf16>, vector<32x64xbf16>, vector<32x64xf32> -> vector<32x64xf32>
    %89 = arith.addf %62, %88 : vector<32x64xf32>
    %90 = arith.addf %1, %89 : vector<32x64xf32>
    %c0_30 = arith.constant 0 : index
    %c0_31 = arith.constant 0 : index
    %91 = vector.load %arg7[%c0_30, %c0_31] : memref<1x64xf32, #tpu.memory_space<vmem>>, vector<1x64xf32>
    %92 = vector.broadcast %91 : vector<1x64xf32> to vector<32x64xf32>
    %93 = arith.addf %90, %92 : vector<32x64xf32>
    %94 = vector.shape_cast %93 : vector<32x64xf32> to vector<2x16x64xf32>
    %c0_32 = arith.constant 0 : index
    %c0_33 = arith.constant 0 : index
    %c0_34 = arith.constant 0 : index
    %95 = vector.load %arg8[%c0_32, %c0_33, %c0_34] : memref<2x16x64xf32, #tpu.memory_space<vmem>>, vector<2x16x64xf32>
    tpu.vector_store %arg8[%c0_32, %c0_33, %c0_34], %94 {strides = array<i32>} : memref<2x16x64xf32, #tpu.memory_space<vmem>>, vector<2x16x64xf32>,
    return
  }
  func.func @transform_0(%arg0: i32) -> (i32, i32, i32) {
    %c0_i32 = arith.constant 0 : i32
    %c0_i32_0 = arith.constant 0 : i32
    %c0_i32_1 = arith.constant 0 : i32
    %c0_i32_2 = arith.constant 0 : i32
    return %c0_i32, %c0_i32_0, %c0_i32_1 : i32, i32, i32
  }
  func.func @transform_1(%arg0: i32) -> (i32, i32) {
    %c0_i32 = arith.constant 0 : i32
    %c0_i32_0 = arith.constant 0 : i32
    %c0_i32_1 = arith.constant 0 : i32
    return %c0_i32, %c0_i32_0 : i32, i32
  }
  func.func @transform_2(%arg0: i32) -> (i32, i32) {
    %c0_i32 = arith.constant 0 : i32
    %c0_i32_0 = arith.constant 0 : i32
    %c0_i32_1 = arith.constant 0 : i32
    return %c0_i32, %c0_i32_0 : i32, i32
  }
  func.func @transform_3(%arg0: i32) -> (i32, i32) {
    %c0_i32 = arith.constant 0 : i32
    %c0_i32_0 = arith.constant 0 : i32
    %c0_i32_1 = arith.constant 0 : i32
    return %c0_i32, %c0_i32_0 : i32, i32
  }
  func.func @transform_4(%arg0: i32) -> (i32, i32) {
    %c0_i32 = arith.constant 0 : i32
    %c0_i32_0 = arith.constant 0 : i32
    %c0_i32_1 = arith.constant 0 : i32
    return %c0_i32, %c0_i32_0 : i32, i32
  }
  func.func @transform_5(%arg0: i32) -> (i32, i32) {
    %c0_i32 = arith.constant 0 : i32
    %c0_i32_0 = arith.constant 0 : i32
    %c0_i32_1 = arith.constant 0 : i32
    return %c0_i32, %c0_i32_0 : i32, i32
  }
  func.func @transform_6(%arg0: i32) -> (i32, i32) {
    %c0_i32 = arith.constant 0 : i32
    %c0_i32_0 = arith.constant 0 : i32
    %c0_i32_1 = arith.constant 0 : i32
    return %c0_i32, %c0_i32_0 : i32, i32
  }
  func.func @transform_7(%arg0: i32) -> (i32, i32, i32) {
    %c0_i32 = arith.constant 0 : i32
    %c0_i32_0 = arith.constant 0 : i32
    %c0_i32_1 = arith.constant 0 : i32
    %c0_i32_2 = arith.constant 0 : i32
    return %c0_i32, %c0_i32_0, %c0_i32_1 : i32, i32, i32
  }
}

module attributes {stable_mosaic.version = 11 : i64} {
  func.func @_enc_mlp_kernel(%arg0: i32, %arg1: memref<2x16x64xf32, #tpu.memory_space<vmem>>, %arg2: memref<1x64xf32, #tpu.memory_space<vmem>>, %arg3: memref<1x64xf32, #tpu.memory_space<vmem>>, %arg4: memref<64x256xf32, #tpu.memory_space<vmem>>, %arg5: memref<1x256xf32, #tpu.memory_space<vmem>>, %arg6: memref<256x64xf32, #tpu.memory_space<vmem>>, %arg7: memref<1x64xf32, #tpu.memory_space<vmem>>, %arg8: memref<2x16x64xf32, #tpu.memory_space<vmem>>) attributes {dimension_semantics = [#tpu.dimension_semantics<arbitrary>], iteration_bounds = array<i64: 1>, scalar_prefetch = 0 : i64, scratch_operands = 0 : i64, tpu.core_type = #tpu.core_type<tc>, window_params = [{pipeline_mode = #tpu.pipeline_mode<synchronous>, transform_indices = @transform_0, window_bounds = array<i64: 2, 16, 64>}, {pipeline_mode = #tpu.pipeline_mode<synchronous>, transform_indices = @transform_1, window_bounds = array<i64: 1, 64>}, {pipeline_mode = #tpu.pipeline_mode<synchronous>, transform_indices = @transform_2, window_bounds = array<i64: 1, 64>}, {pipeline_mode = #tpu.pipeline_mode<synchronous>, transform_indices = @transform_3, window_bounds = array<i64: 64, 256>}, {pipeline_mode = #tpu.pipeline_mode<synchronous>, transform_indices = @transform_4, window_bounds = array<i64: 1, 256>}, {pipeline_mode = #tpu.pipeline_mode<synchronous>, transform_indices = @transform_5, window_bounds = array<i64: 256, 64>}, {pipeline_mode = #tpu.pipeline_mode<synchronous>, transform_indices = @transform_6, window_bounds = array<i64: 1, 64>}, {pipeline_mode = #tpu.pipeline_mode<synchronous>, transform_indices = @transform_7, window_bounds = array<i64: 2, 16, 64>}]} {
    %c0 = arith.constant 0 : index
    %c0_0 = arith.constant 0 : index
    %c0_1 = arith.constant 0 : index
    %0 = vector.load %arg1[%c0, %c0_0, %c0_1] : memref<2x16x64xf32, #tpu.memory_space<vmem>>, vector<2x16x64xf32>
    %1 = vector.shape_cast %0 : vector<2x16x64xf32> to vector<32x64xf32>
    %c0_2 = arith.constant 0 : index
    %c0_3 = arith.constant 0 : index
    %2 = vector.load %arg2[%c0_2, %c0_3] : memref<1x64xf32, #tpu.memory_space<vmem>>, vector<1x64xf32>
    %c0_4 = arith.constant 0 : index
    %c0_5 = arith.constant 0 : index
    %3 = vector.load %arg3[%c0_4, %c0_5] : memref<1x64xf32, #tpu.memory_space<vmem>>, vector<1x64xf32>
    %cst = arith.constant dense<0.000000e+00> : vector<32xf32>
    %4 = vector.multi_reduction <add>, %1, %cst [1] : vector<32x64xf32> to vector<32xf32>
    %5 = vector.shape_cast %4 : vector<32xf32> to vector<32x1xf32>
    %cst_6 = arith.constant 6.400000e+01 : f32
    %6 = vector.broadcast %cst_6 : f32 to vector<32x1xf32>
    %7 = arith.divf %5, %6 : vector<32x1xf32>
    %8 = vector.broadcast %7 : vector<32x1xf32> to vector<32x64xf32>
    %9 = arith.subf %1, %8 : vector<32x64xf32>
    %10 = arith.mulf %9, %9 : vector<32x64xf32>
    %cst_7 = arith.constant dense<0.000000e+00> : vector<32xf32>
    %11 = vector.multi_reduction <add>, %10, %cst_7 [1] : vector<32x64xf32> to vector<32xf32>
    %12 = vector.shape_cast %11 : vector<32xf32> to vector<32x1xf32>
    %cst_8 = arith.constant 6.400000e+01 : f32
    %13 = vector.broadcast %cst_8 : f32 to vector<32x1xf32>
    %14 = arith.divf %12, %13 : vector<32x1xf32>
    %15 = vector.broadcast %7 : vector<32x1xf32> to vector<32x64xf32>
    %16 = arith.subf %1, %15 : vector<32x64xf32>
    %cst_9 = arith.constant 9.99999997E-7 : f32
    %17 = vector.broadcast %cst_9 : f32 to vector<32x1xf32>
    %18 = arith.addf %14, %17 : vector<32x1xf32>
    %19 = math.rsqrt %18 : vector<32x1xf32>
    %20 = vector.broadcast %19 : vector<32x1xf32> to vector<32x64xf32>
    %21 = arith.mulf %16, %20 : vector<32x64xf32>
    %22 = vector.broadcast %2 : vector<1x64xf32> to vector<32x64xf32>
    %23 = arith.mulf %21, %22 : vector<32x64xf32>
    %24 = vector.broadcast %3 : vector<1x64xf32> to vector<32x64xf32>
    %25 = arith.addf %23, %24 : vector<32x64xf32>
    %c0_10 = arith.constant 0 : index
    %c0_11 = arith.constant 0 : index
    %26 = vector.load %arg4[%c0_10, %c0_11] : memref<64x256xf32, #tpu.memory_space<vmem>>, vector<64x256xf32>
    %27 = arith.truncf %25 : vector<32x64xf32> to vector<32x64xbf16>
    %28 = arith.truncf %26 : vector<64x256xf32> to vector<64x256xbf16>
    %cst_12 = arith.constant dense<0.000000e+00> : vector<32x256xf32>
    %29 = tpu.matmul %27, %28, %cst_12 {dimension_numbers = #tpu.dot_dimension_numbers<[1], [0], [0], [1], [0, 0, 1, 1], [], []>} : vector<32x64xbf16>, vector<64x256xbf16>, vector<32x256xf32> -> vector<32x256xf32>
    %c0_13 = arith.constant 0 : index
    %c0_14 = arith.constant 0 : index
    %30 = vector.load %arg5[%c0_13, %c0_14] : memref<1x256xf32, #tpu.memory_space<vmem>>, vector<1x256xf32>
    %31 = vector.broadcast %30 : vector<1x256xf32> to vector<32x256xf32>
    %32 = arith.addf %29, %31 : vector<32x256xf32>
    %cst_15 = arith.constant 5.000000e-01 : f32
    %33 = vector.broadcast %cst_15 : f32 to vector<32x256xf32>
    %34 = arith.mulf %33, %32 : vector<32x256xf32>
    %cst_16 = arith.constant 4.471500e-02 : f32
    %35 = vector.broadcast %cst_16 : f32 to vector<32x256xf32>
    %36 = arith.mulf %35, %32 : vector<32x256xf32>
    %37 = arith.mulf %36, %32 : vector<32x256xf32>
    %38 = arith.mulf %37, %32 : vector<32x256xf32>
    %39 = arith.addf %32, %38 : vector<32x256xf32>
    %cst_17 = arith.constant 0.797884583 : f32
    %40 = vector.broadcast %cst_17 : f32 to vector<32x256xf32>
    %41 = arith.mulf %40, %39 : vector<32x256xf32>
    %42 = math.tanh %41 : vector<32x256xf32>
    %cst_18 = arith.constant 1.000000e+00 : f32
    %43 = vector.broadcast %cst_18 : f32 to vector<32x256xf32>
    %44 = arith.addf %43, %42 : vector<32x256xf32>
    %45 = arith.mulf %34, %44 : vector<32x256xf32>
    %c0_19 = arith.constant 0 : index
    %c0_20 = arith.constant 0 : index
    %46 = vector.load %arg6[%c0_19, %c0_20] : memref<256x64xf32, #tpu.memory_space<vmem>>, vector<256x64xf32>
    %47 = arith.truncf %45 : vector<32x256xf32> to vector<32x256xbf16>
    %48 = arith.truncf %46 : vector<256x64xf32> to vector<256x64xbf16>
    %cst_21 = arith.constant dense<0.000000e+00> : vector<32x64xf32>
    %49 = tpu.matmul %47, %48, %cst_21 {dimension_numbers = #tpu.dot_dimension_numbers<[1], [0], [0], [1], [0, 0, 1, 1], [], []>} : vector<32x256xbf16>, vector<256x64xbf16>, vector<32x64xf32> -> vector<32x64xf32>
    %50 = arith.addf %1, %49 : vector<32x64xf32>
    %c0_22 = arith.constant 0 : index
    %c0_23 = arith.constant 0 : index
    %51 = vector.load %arg7[%c0_22, %c0_23] : memref<1x64xf32, #tpu.memory_space<vmem>>, vector<1x64xf32>
    %52 = vector.broadcast %51 : vector<1x64xf32> to vector<32x64xf32>
    %53 = arith.addf %50, %52 : vector<32x64xf32>
    %54 = vector.shape_cast %53 : vector<32x64xf32> to vector<2x16x64xf32>
    %c0_24 = arith.constant 0 : index
    %c0_25 = arith.constant 0 : index
    %c0_26 = arith.constant 0 : index
    %55 = vector.load %arg8[%c0_24, %c0_25, %c0_26] : memref<2x16x64xf32, #tpu.memory_space<vmem>>, vector<2x16x64xf32>
    tpu.vector_store %arg8[%c0_24, %c0_25, %c0_26], %54 {strides = array<i32>} : memref<2x16x64xf32, #tpu.memory_space<vmem>>, vector<2x16x64xf32>,
    return
  }
  func.func @transform_0(%arg0: i32) -> (i32, i32, i32) {
    %c0_i32 = arith.constant 0 : i32
    %c0_i32_0 = arith.constant 0 : i32
    %c0_i32_1 = arith.constant 0 : i32
    %c0_i32_2 = arith.constant 0 : i32
    return %c0_i32, %c0_i32_0, %c0_i32_1 : i32, i32, i32
  }
  func.func @transform_1(%arg0: i32) -> (i32, i32) {
    %c0_i32 = arith.constant 0 : i32
    %c0_i32_0 = arith.constant 0 : i32
    %c0_i32_1 = arith.constant 0 : i32
    return %c0_i32, %c0_i32_0 : i32, i32
  }
  func.func @transform_2(%arg0: i32) -> (i32, i32) {
    %c0_i32 = arith.constant 0 : i32
    %c0_i32_0 = arith.constant 0 : i32
    %c0_i32_1 = arith.constant 0 : i32
    return %c0_i32, %c0_i32_0 : i32, i32
  }
  func.func @transform_3(%arg0: i32) -> (i32, i32) {
    %c0_i32 = arith.constant 0 : i32
    %c0_i32_0 = arith.constant 0 : i32
    %c0_i32_1 = arith.constant 0 : i32
    return %c0_i32, %c0_i32_0 : i32, i32
  }
  func.func @transform_4(%arg0: i32) -> (i32, i32) {
    %c0_i32 = arith.constant 0 : i32
    %c0_i32_0 = arith.constant 0 : i32
    %c0_i32_1 = arith.constant 0 : i32
    return %c0_i32, %c0_i32_0 : i32, i32
  }
  func.func @transform_5(%arg0: i32) -> (i32, i32) {
    %c0_i32 = arith.constant 0 : i32
    %c0_i32_0 = arith.constant 0 : i32
    %c0_i32_1 = arith.constant 0 : i32
    return %c0_i32, %c0_i32_0 : i32, i32
  }
  func.func @transform_6(%arg0: i32) -> (i32, i32) {
    %c0_i32 = arith.constant 0 : i32
    %c0_i32_0 = arith.constant 0 : i32
    %c0_i32_1 = arith.constant 0 : i32
    return %c0_i32, %c0_i32_0 : i32, i32
  }
  func.func @transform_7(%arg0: i32) -> (i32, i32, i32) {
    %c0_i32 = arith.constant 0 : i32
    %c0_i32_0 = arith.constant 0 : i32
    %c0_i32_1 = arith.constant 0 : i32
    %c0_i32_2 = arith.constant 0 : i32
    return %c0_i32, %c0_i32_0, %c0_i32_1 : i32, i32, i32
  }
}

module attributes {stable_mosaic.version = 11 : i64} {
  func.func @_neck_kernel(%arg0: i32, %arg1: memref<2x6x6x64xf32, #tpu.memory_space<vmem>>, %arg2: memref<72x1xf32, #tpu.memory_space<vmem>>, %arg3: memref<64x32xf32, #tpu.memory_space<vmem>>, %arg4: memref<1x32xf32, #tpu.memory_space<vmem>>, %arg5: memref<1x32xf32, #tpu.memory_space<vmem>>, %arg6: memref<288x32xf32, #tpu.memory_space<vmem>>, %arg7: memref<1x32xf32, #tpu.memory_space<vmem>>, %arg8: memref<1x32xf32, #tpu.memory_space<vmem>>, %arg9: memref<2x4x4x32xf32, #tpu.memory_space<vmem>>) attributes {dimension_semantics = [#tpu.dimension_semantics<arbitrary>], iteration_bounds = array<i64: 1>, scalar_prefetch = 0 : i64, scratch_operands = 0 : i64, tpu.core_type = #tpu.core_type<tc>, window_params = [{pipeline_mode = #tpu.pipeline_mode<synchronous>, transform_indices = @transform_0, window_bounds = array<i64: 2, 6, 6, 64>}, {pipeline_mode = #tpu.pipeline_mode<synchronous>, transform_indices = @transform_1, window_bounds = array<i64: 72, 1>}, {pipeline_mode = #tpu.pipeline_mode<synchronous>, transform_indices = @transform_2, window_bounds = array<i64: 64, 32>}, {pipeline_mode = #tpu.pipeline_mode<synchronous>, transform_indices = @transform_3, window_bounds = array<i64: 1, 32>}, {pipeline_mode = #tpu.pipeline_mode<synchronous>, transform_indices = @transform_4, window_bounds = array<i64: 1, 32>}, {pipeline_mode = #tpu.pipeline_mode<synchronous>, transform_indices = @transform_5, window_bounds = array<i64: 288, 32>}, {pipeline_mode = #tpu.pipeline_mode<synchronous>, transform_indices = @transform_6, window_bounds = array<i64: 1, 32>}, {pipeline_mode = #tpu.pipeline_mode<synchronous>, transform_indices = @transform_7, window_bounds = array<i64: 1, 32>}, {pipeline_mode = #tpu.pipeline_mode<synchronous>, transform_indices = @transform_8, window_bounds = array<i64: 2, 4, 4, 32>}]} {
    %c0 = arith.constant 0 : index
    %c0_0 = arith.constant 0 : index
    %c0_1 = arith.constant 0 : index
    %c0_2 = arith.constant 0 : index
    %0 = vector.load %arg1[%c0, %c0_0, %c0_1, %c0_2] : memref<2x6x6x64xf32, #tpu.memory_space<vmem>>, vector<2x6x6x64xf32>
    %1 = vector.shape_cast %0 : vector<2x6x6x64xf32> to vector<72x64xf32>
    %c0_3 = arith.constant 0 : index
    %c0_4 = arith.constant 0 : index
    %2 = vector.load %arg3[%c0_3, %c0_4] : memref<64x32xf32, #tpu.memory_space<vmem>>, vector<64x32xf32>
    %3 = arith.truncf %1 : vector<72x64xf32> to vector<72x64xbf16>
    %4 = arith.truncf %2 : vector<64x32xf32> to vector<64x32xbf16>
    %cst = arith.constant dense<0.000000e+00> : vector<72x32xf32>
    %5 = tpu.matmul %3, %4, %cst {dimension_numbers = #tpu.dot_dimension_numbers<[1], [0], [0], [1], [0, 0, 1, 1], [], []>} : vector<72x64xbf16>, vector<64x32xbf16>, vector<72x32xf32> -> vector<72x32xf32>
    %c0_5 = arith.constant 0 : index
    %c0_6 = arith.constant 0 : index
    %6 = vector.load %arg4[%c0_5, %c0_6] : memref<1x32xf32, #tpu.memory_space<vmem>>, vector<1x32xf32>
    %c0_7 = arith.constant 0 : index
    %c0_8 = arith.constant 0 : index
    %7 = vector.load %arg5[%c0_7, %c0_8] : memref<1x32xf32, #tpu.memory_space<vmem>>, vector<1x32xf32>
    %cst_9 = arith.constant dense<0.000000e+00> : vector<72xf32>
    %8 = vector.multi_reduction <add>, %5, %cst_9 [1] : vector<72x32xf32> to vector<72xf32>
    %9 = vector.shape_cast %8 : vector<72xf32> to vector<72x1xf32>
    %cst_10 = arith.constant 3.200000e+01 : f32
    %10 = vector.broadcast %cst_10 : f32 to vector<72x1xf32>
    %11 = arith.divf %9, %10 : vector<72x1xf32>
    %12 = vector.broadcast %11 : vector<72x1xf32> to vector<72x32xf32>
    %13 = arith.subf %5, %12 : vector<72x32xf32>
    %14 = arith.mulf %13, %13 : vector<72x32xf32>
    %cst_11 = arith.constant dense<0.000000e+00> : vector<72xf32>
    %15 = vector.multi_reduction <add>, %14, %cst_11 [1] : vector<72x32xf32> to vector<72xf32>
    %16 = vector.shape_cast %15 : vector<72xf32> to vector<72x1xf32>
    %cst_12 = arith.constant 3.200000e+01 : f32
    %17 = vector.broadcast %cst_12 : f32 to vector<72x1xf32>
    %18 = arith.divf %16, %17 : vector<72x1xf32>
    %19 = vector.broadcast %11 : vector<72x1xf32> to vector<72x32xf32>
    %20 = arith.subf %5, %19 : vector<72x32xf32>
    %cst_13 = arith.constant 9.99999997E-7 : f32
    %21 = vector.broadcast %cst_13 : f32 to vector<72x1xf32>
    %22 = arith.addf %18, %21 : vector<72x1xf32>
    %23 = math.rsqrt %22 : vector<72x1xf32>
    %24 = vector.broadcast %23 : vector<72x1xf32> to vector<72x32xf32>
    %25 = arith.mulf %20, %24 : vector<72x32xf32>
    %26 = vector.broadcast %6 : vector<1x32xf32> to vector<72x32xf32>
    %27 = arith.mulf %25, %26 : vector<72x32xf32>
    %28 = vector.broadcast %7 : vector<1x32xf32> to vector<72x32xf32>
    %29 = arith.addf %27, %28 : vector<72x32xf32>
    %c0_14 = arith.constant 0 : index
    %c0_15 = arith.constant 0 : index
    %30 = vector.load %arg2[%c0_14, %c0_15] : memref<72x1xf32, #tpu.memory_space<vmem>>, vector<72x1xf32>
    %31 = vector.broadcast %30 : vector<72x1xf32> to vector<72x32xf32>
    %32 = arith.mulf %29, %31 : vector<72x32xf32>
    %33 = vector.shape_cast %32 : vector<72x32xf32> to vector<2x6x6x32xf32>
    %c0_16 = arith.constant 0 : index
    %c0_17 = arith.constant 0 : index
    %34 = vector.load %arg6[%c0_16, %c0_17] : memref<288x32xf32, #tpu.memory_space<vmem>>, vector<288x32xf32>
    %cst_18 = arith.constant 0.000000e+00 : f32
    %35 = vector.broadcast %cst_18 : f32 to vector<32x32xf32>
    %36 = vector.extract_strided_slice %33 {offsets = [0, 0, 0, 0], sizes = [2, 4, 4, 32], strides = [1, 1, 1, 1]} : vector<2x6x6x32xf32> to vector<2x4x4x32xf32>
    %37 = vector.shape_cast %36 : vector<2x4x4x32xf32> to vector<32x32xf32>
    %38 = vector.extract_strided_slice %34 {offsets = [0, 0], sizes = [32, 32], strides = [1, 1]} : vector<288x32xf32> to vector<32x32xf32>
    %39 = arith.truncf %37 : vector<32x32xf32> to vector<32x32xbf16>
    %40 = arith.truncf %38 : vector<32x32xf32> to vector<32x32xbf16>
    %cst_19 = arith.constant dense<0.000000e+00> : vector<32x32xf32>
    %41 = tpu.matmul %39, %40, %cst_19 {dimension_numbers = #tpu.dot_dimension_numbers<[1], [0], [0], [1], [0, 0, 1, 1], [], []>} : vector<32x32xbf16>, vector<32x32xbf16>, vector<32x32xf32> -> vector<32x32xf32>
    %42 = arith.addf %35, %41 : vector<32x32xf32>
    %43 = vector.extract_strided_slice %33 {offsets = [0, 0, 1, 0], sizes = [2, 4, 4, 32], strides = [1, 1, 1, 1]} : vector<2x6x6x32xf32> to vector<2x4x4x32xf32>
    %44 = vector.shape_cast %43 : vector<2x4x4x32xf32> to vector<32x32xf32>
    %45 = vector.extract_strided_slice %34 {offsets = [32, 0], sizes = [32, 32], strides = [1, 1]} : vector<288x32xf32> to vector<32x32xf32>
    %46 = arith.truncf %44 : vector<32x32xf32> to vector<32x32xbf16>
    %47 = arith.truncf %45 : vector<32x32xf32> to vector<32x32xbf16>
    %cst_20 = arith.constant dense<0.000000e+00> : vector<32x32xf32>
    %48 = tpu.matmul %46, %47, %cst_20 {dimension_numbers = #tpu.dot_dimension_numbers<[1], [0], [0], [1], [0, 0, 1, 1], [], []>} : vector<32x32xbf16>, vector<32x32xbf16>, vector<32x32xf32> -> vector<32x32xf32>
    %49 = arith.addf %42, %48 : vector<32x32xf32>
    %50 = vector.extract_strided_slice %33 {offsets = [0, 0, 2, 0], sizes = [2, 4, 4, 32], strides = [1, 1, 1, 1]} : vector<2x6x6x32xf32> to vector<2x4x4x32xf32>
    %51 = vector.shape_cast %50 : vector<2x4x4x32xf32> to vector<32x32xf32>
    %52 = vector.extract_strided_slice %34 {offsets = [64, 0], sizes = [32, 32], strides = [1, 1]} : vector<288x32xf32> to vector<32x32xf32>
    %53 = arith.truncf %51 : vector<32x32xf32> to vector<32x32xbf16>
    %54 = arith.truncf %52 : vector<32x32xf32> to vector<32x32xbf16>
    %cst_21 = arith.constant dense<0.000000e+00> : vector<32x32xf32>
    %55 = tpu.matmul %53, %54, %cst_21 {dimension_numbers = #tpu.dot_dimension_numbers<[1], [0], [0], [1], [0, 0, 1, 1], [], []>} : vector<32x32xbf16>, vector<32x32xbf16>, vector<32x32xf32> -> vector<32x32xf32>
    %56 = arith.addf %49, %55 : vector<32x32xf32>
    %57 = vector.extract_strided_slice %33 {offsets = [0, 1, 0, 0], sizes = [2, 4, 4, 32], strides = [1, 1, 1, 1]} : vector<2x6x6x32xf32> to vector<2x4x4x32xf32>
    %58 = vector.shape_cast %57 : vector<2x4x4x32xf32> to vector<32x32xf32>
    %59 = vector.extract_strided_slice %34 {offsets = [96, 0], sizes = [32, 32], strides = [1, 1]} : vector<288x32xf32> to vector<32x32xf32>
    %60 = arith.truncf %58 : vector<32x32xf32> to vector<32x32xbf16>
    %61 = arith.truncf %59 : vector<32x32xf32> to vector<32x32xbf16>
    %cst_22 = arith.constant dense<0.000000e+00> : vector<32x32xf32>
    %62 = tpu.matmul %60, %61, %cst_22 {dimension_numbers = #tpu.dot_dimension_numbers<[1], [0], [0], [1], [0, 0, 1, 1], [], []>} : vector<32x32xbf16>, vector<32x32xbf16>, vector<32x32xf32> -> vector<32x32xf32>
    %63 = arith.addf %56, %62 : vector<32x32xf32>
    %64 = vector.extract_strided_slice %33 {offsets = [0, 1, 1, 0], sizes = [2, 4, 4, 32], strides = [1, 1, 1, 1]} : vector<2x6x6x32xf32> to vector<2x4x4x32xf32>
    %65 = vector.shape_cast %64 : vector<2x4x4x32xf32> to vector<32x32xf32>
    %66 = vector.extract_strided_slice %34 {offsets = [128, 0], sizes = [32, 32], strides = [1, 1]} : vector<288x32xf32> to vector<32x32xf32>
    %67 = arith.truncf %65 : vector<32x32xf32> to vector<32x32xbf16>
    %68 = arith.truncf %66 : vector<32x32xf32> to vector<32x32xbf16>
    %cst_23 = arith.constant dense<0.000000e+00> : vector<32x32xf32>
    %69 = tpu.matmul %67, %68, %cst_23 {dimension_numbers = #tpu.dot_dimension_numbers<[1], [0], [0], [1], [0, 0, 1, 1], [], []>} : vector<32x32xbf16>, vector<32x32xbf16>, vector<32x32xf32> -> vector<32x32xf32>
    %70 = arith.addf %63, %69 : vector<32x32xf32>
    %71 = vector.extract_strided_slice %33 {offsets = [0, 1, 2, 0], sizes = [2, 4, 4, 32], strides = [1, 1, 1, 1]} : vector<2x6x6x32xf32> to vector<2x4x4x32xf32>
    %72 = vector.shape_cast %71 : vector<2x4x4x32xf32> to vector<32x32xf32>
    %73 = vector.extract_strided_slice %34 {offsets = [160, 0], sizes = [32, 32], strides = [1, 1]} : vector<288x32xf32> to vector<32x32xf32>
    %74 = arith.truncf %72 : vector<32x32xf32> to vector<32x32xbf16>
    %75 = arith.truncf %73 : vector<32x32xf32> to vector<32x32xbf16>
    %cst_24 = arith.constant dense<0.000000e+00> : vector<32x32xf32>
    %76 = tpu.matmul %74, %75, %cst_24 {dimension_numbers = #tpu.dot_dimension_numbers<[1], [0], [0], [1], [0, 0, 1, 1], [], []>} : vector<32x32xbf16>, vector<32x32xbf16>, vector<32x32xf32> -> vector<32x32xf32>
    %77 = arith.addf %70, %76 : vector<32x32xf32>
    %78 = vector.extract_strided_slice %33 {offsets = [0, 2, 0, 0], sizes = [2, 4, 4, 32], strides = [1, 1, 1, 1]} : vector<2x6x6x32xf32> to vector<2x4x4x32xf32>
    %79 = vector.shape_cast %78 : vector<2x4x4x32xf32> to vector<32x32xf32>
    %80 = vector.extract_strided_slice %34 {offsets = [192, 0], sizes = [32, 32], strides = [1, 1]} : vector<288x32xf32> to vector<32x32xf32>
    %81 = arith.truncf %79 : vector<32x32xf32> to vector<32x32xbf16>
    %82 = arith.truncf %80 : vector<32x32xf32> to vector<32x32xbf16>
    %cst_25 = arith.constant dense<0.000000e+00> : vector<32x32xf32>
    %83 = tpu.matmul %81, %82, %cst_25 {dimension_numbers = #tpu.dot_dimension_numbers<[1], [0], [0], [1], [0, 0, 1, 1], [], []>} : vector<32x32xbf16>, vector<32x32xbf16>, vector<32x32xf32> -> vector<32x32xf32>
    %84 = arith.addf %77, %83 : vector<32x32xf32>
    %85 = vector.extract_strided_slice %33 {offsets = [0, 2, 1, 0], sizes = [2, 4, 4, 32], strides = [1, 1, 1, 1]} : vector<2x6x6x32xf32> to vector<2x4x4x32xf32>
    %86 = vector.shape_cast %85 : vector<2x4x4x32xf32> to vector<32x32xf32>
    %87 = vector.extract_strided_slice %34 {offsets = [224, 0], sizes = [32, 32], strides = [1, 1]} : vector<288x32xf32> to vector<32x32xf32>
    %88 = arith.truncf %86 : vector<32x32xf32> to vector<32x32xbf16>
    %89 = arith.truncf %87 : vector<32x32xf32> to vector<32x32xbf16>
    %cst_26 = arith.constant dense<0.000000e+00> : vector<32x32xf32>
    %90 = tpu.matmul %88, %89, %cst_26 {dimension_numbers = #tpu.dot_dimension_numbers<[1], [0], [0], [1], [0, 0, 1, 1], [], []>} : vector<32x32xbf16>, vector<32x32xbf16>, vector<32x32xf32> -> vector<32x32xf32>
    %91 = arith.addf %84, %90 : vector<32x32xf32>
    %92 = vector.extract_strided_slice %33 {offsets = [0, 2, 2, 0], sizes = [2, 4, 4, 32], strides = [1, 1, 1, 1]} : vector<2x6x6x32xf32> to vector<2x4x4x32xf32>
    %93 = vector.shape_cast %92 : vector<2x4x4x32xf32> to vector<32x32xf32>
    %94 = vector.extract_strided_slice %34 {offsets = [256, 0], sizes = [32, 32], strides = [1, 1]} : vector<288x32xf32> to vector<32x32xf32>
    %95 = arith.truncf %93 : vector<32x32xf32> to vector<32x32xbf16>
    %96 = arith.truncf %94 : vector<32x32xf32> to vector<32x32xbf16>
    %cst_27 = arith.constant dense<0.000000e+00> : vector<32x32xf32>
    %97 = tpu.matmul %95, %96, %cst_27 {dimension_numbers = #tpu.dot_dimension_numbers<[1], [0], [0], [1], [0, 0, 1, 1], [], []>} : vector<32x32xbf16>, vector<32x32xbf16>, vector<32x32xf32> -> vector<32x32xf32>
    %98 = arith.addf %91, %97 : vector<32x32xf32>
    %c0_28 = arith.constant 0 : index
    %c0_29 = arith.constant 0 : index
    %99 = vector.load %arg7[%c0_28, %c0_29] : memref<1x32xf32, #tpu.memory_space<vmem>>, vector<1x32xf32>
    %c0_30 = arith.constant 0 : index
    %c0_31 = arith.constant 0 : index
    %100 = vector.load %arg8[%c0_30, %c0_31] : memref<1x32xf32, #tpu.memory_space<vmem>>, vector<1x32xf32>
    %cst_32 = arith.constant dense<0.000000e+00> : vector<32xf32>
    %101 = vector.multi_reduction <add>, %98, %cst_32 [1] : vector<32x32xf32> to vector<32xf32>
    %102 = vector.shape_cast %101 : vector<32xf32> to vector<32x1xf32>
    %cst_33 = arith.constant 3.200000e+01 : f32
    %103 = vector.broadcast %cst_33 : f32 to vector<32x1xf32>
    %104 = arith.divf %102, %103 : vector<32x1xf32>
    %105 = vector.broadcast %104 : vector<32x1xf32> to vector<32x32xf32>
    %106 = arith.subf %98, %105 : vector<32x32xf32>
    %107 = arith.mulf %106, %106 : vector<32x32xf32>
    %cst_34 = arith.constant dense<0.000000e+00> : vector<32xf32>
    %108 = vector.multi_reduction <add>, %107, %cst_34 [1] : vector<32x32xf32> to vector<32xf32>
    %109 = vector.shape_cast %108 : vector<32xf32> to vector<32x1xf32>
    %cst_35 = arith.constant 3.200000e+01 : f32
    %110 = vector.broadcast %cst_35 : f32 to vector<32x1xf32>
    %111 = arith.divf %109, %110 : vector<32x1xf32>
    %112 = vector.broadcast %104 : vector<32x1xf32> to vector<32x32xf32>
    %113 = arith.subf %98, %112 : vector<32x32xf32>
    %cst_36 = arith.constant 9.99999997E-7 : f32
    %114 = vector.broadcast %cst_36 : f32 to vector<32x1xf32>
    %115 = arith.addf %111, %114 : vector<32x1xf32>
    %116 = math.rsqrt %115 : vector<32x1xf32>
    %117 = vector.broadcast %116 : vector<32x1xf32> to vector<32x32xf32>
    %118 = arith.mulf %113, %117 : vector<32x32xf32>
    %119 = vector.broadcast %99 : vector<1x32xf32> to vector<32x32xf32>
    %120 = arith.mulf %118, %119 : vector<32x32xf32>
    %121 = vector.broadcast %100 : vector<1x32xf32> to vector<32x32xf32>
    %122 = arith.addf %120, %121 : vector<32x32xf32>
    %123 = vector.shape_cast %122 : vector<32x32xf32> to vector<2x4x4x32xf32>
    %c0_37 = arith.constant 0 : index
    %c0_38 = arith.constant 0 : index
    %c0_39 = arith.constant 0 : index
    %c0_40 = arith.constant 0 : index
    %124 = vector.load %arg9[%c0_37, %c0_38, %c0_39, %c0_40] : memref<2x4x4x32xf32, #tpu.memory_space<vmem>>, vector<2x4x4x32xf32>
    tpu.vector_store %arg9[%c0_37, %c0_38, %c0_39, %c0_40], %123 {strides = array<i32>} : memref<2x4x4x32xf32, #tpu.memory_space<vmem>>, vector<2x4x4x32xf32>,
    return
  }
  func.func @transform_0(%arg0: i32) -> (i32, i32, i32, i32) {
    %c0_i32 = arith.constant 0 : i32
    %c0_i32_0 = arith.constant 0 : i32
    %c0_i32_1 = arith.constant 0 : i32
    %c0_i32_2 = arith.constant 0 : i32
    %c0_i32_3 = arith.constant 0 : i32
    return %c0_i32, %c0_i32_0, %c0_i32_1, %c0_i32_2 : i32, i32, i32, i32
  }
  func.func @transform_1(%arg0: i32) -> (i32, i32) {
    %c0_i32 = arith.constant 0 : i32
    %c0_i32_0 = arith.constant 0 : i32
    %c0_i32_1 = arith.constant 0 : i32
    return %c0_i32, %c0_i32_0 : i32, i32
  }
  func.func @transform_2(%arg0: i32) -> (i32, i32) {
    %c0_i32 = arith.constant 0 : i32
    %c0_i32_0 = arith.constant 0 : i32
    %c0_i32_1 = arith.constant 0 : i32
    return %c0_i32, %c0_i32_0 : i32, i32
  }
  func.func @transform_3(%arg0: i32) -> (i32, i32) {
    %c0_i32 = arith.constant 0 : i32
    %c0_i32_0 = arith.constant 0 : i32
    %c0_i32_1 = arith.constant 0 : i32
    return %c0_i32, %c0_i32_0 : i32, i32
  }
  func.func @transform_4(%arg0: i32) -> (i32, i32) {
    %c0_i32 = arith.constant 0 : i32
    %c0_i32_0 = arith.constant 0 : i32
    %c0_i32_1 = arith.constant 0 : i32
    return %c0_i32, %c0_i32_0 : i32, i32
  }
  func.func @transform_5(%arg0: i32) -> (i32, i32) {
    %c0_i32 = arith.constant 0 : i32
    %c0_i32_0 = arith.constant 0 : i32
    %c0_i32_1 = arith.constant 0 : i32
    return %c0_i32, %c0_i32_0 : i32, i32
  }
  func.func @transform_6(%arg0: i32) -> (i32, i32) {
    %c0_i32 = arith.constant 0 : i32
    %c0_i32_0 = arith.constant 0 : i32
    %c0_i32_1 = arith.constant 0 : i32
    return %c0_i32, %c0_i32_0 : i32, i32
  }
  func.func @transform_7(%arg0: i32) -> (i32, i32) {
    %c0_i32 = arith.constant 0 : i32
    %c0_i32_0 = arith.constant 0 : i32
    %c0_i32_1 = arith.constant 0 : i32
    return %c0_i32, %c0_i32_0 : i32, i32
  }
  func.func @transform_8(%arg0: i32) -> (i32, i32, i32, i32) {
    %c0_i32 = arith.constant 0 : i32
    %c0_i32_0 = arith.constant 0 : i32
    %c0_i32_1 = arith.constant 0 : i32
    %c0_i32_2 = arith.constant 0 : i32
    %c0_i32_3 = arith.constant 0 : i32
    return %c0_i32, %c0_i32_0, %c0_i32_1, %c0_i32_2 : i32, i32, i32, i32
  }
}

</mosaic_0001>

<llo_original>
// kernel: image_encoder.6
$region0: #{image_encoder.6}
  #allocation0 [shape = 'u32[]', space=smem, size = 0x4, offset = 0x4, fixed_abs, tag = 'smem constant byte address 0x4 - core index']
  #allocation1 [shape = 'u32[144,128]{1,0:T(1,128)}', space=vmem, size = 0x12000, scoped, tag = 'internal scratch']
  %s0 = inlined_call_operand.vmem [shape: f32[32,768], index: 0, kind: input, shape index: {}]
  %s1 = inlined_call_operand.vmem [shape: f32[768,64], index: 1, kind: input, shape index: {}]
  %s2 = inlined_call_operand.vmem [shape: f32[1,64], index: 2, kind: input, shape index: {}]
  %s3 = inlined_call_operand.vmem [shape: f32[32,64], index: 3, kind: output, shape index: {}]
  %s4 = sld [smem:[#allocation0]]
  $region22: #{image_encoder.6} parent=0
    _
  %s6 = ssub.s32 1, %s4
  %s7 = scalar_select 0, %s6, %s4
  // Predicated region
  $region2: #{image_encoder.6} parent=0 // pred_check
    _
  $region3: #{image_encoder.6} parent=0 // pred_check_branch
    %9 = sbr.rel (0) target = $region5
  $region4: #{image_encoder.6} parent=0 // pred_region
    _
  $region5: #{image_encoder.6} parent=0 // pred_fallthru
    _
  // Predicated region
  $region6: #{image_encoder.6} parent=0 // pred_check
    _
  $region7: #{image_encoder.6} parent=0 // pred_check_branch
    %11 = sbr.rel (0) target = $region9
  $region8: #{image_encoder.6} parent=0 // pred_region
    _
  $region9: #{image_encoder.6} parent=0 // pred_fallthru
    _
  // Predicated region
  $region10: #{image_encoder.6} parent=0 // pred_check
    _
  $region11: #{image_encoder.6} parent=0 // pred_check_branch
    %13 = sbr.rel (0) target = $region13
  $region12: #{image_encoder.6} parent=0 // pred_region
    _
  $region13: #{image_encoder.6} parent=0 // pred_fallthru
    _
  %v15 = vld [vmem:[%s0] sm:$0xff]
  %v16 = vld [vmem:[%s0 + $0x8] sm:$0xff]
  %v17 = vld [vmem:[%s0 + $0x10] sm:$0xff]
  %v18 = vld [vmem:[%s0 + $0x18] sm:$0xff]
  %v19 = vld [vmem:[%s0 + $0x20] sm:$0xff]
  %v20 = vld [vmem:[%s0 + $0x28] sm:$0xff]
  %v21 = vld [vmem:[%s0 + $0x30] sm:$0xff]
  %v22 = vld [vmem:[%s0 + $0x38] sm:$0xff]
  %v23 = vld [vmem:[%s0 + $0x40] sm:$0xff]
  %v24 = vld [vmem:[%s0 + $0x48] sm:$0xff]
  %v25 = vld [vmem:[%s0 + $0x50] sm:$0xff]
  %v26 = vld [vmem:[%s0 + $0x58] sm:$0xff]
  %v27 = vld [vmem:[%s0 + $0x60] sm:$0xff]
  %v28 = vld [vmem:[%s0 + $0x68] sm:$0xff]
  %v29 = vld [vmem:[%s0 + $0x70] sm:$0xff]
  %v30 = vld [vmem:[%s0 + $0x78] sm:$0xff]
  %v31 = vld [vmem:[%s0 + $0x80] sm:$0xff]
  %v32 = vld [vmem:[%s0 + $0x88] sm:$0xff]
  %v33 = vld [vmem:[%s0 + $0x90] sm:$0xff]
  %v34 = vld [vmem:[%s0 + $0x98] sm:$0xff]
  %v35 = vld [vmem:[%s0 + $0xa0] sm:$0xff]
  %v36 = vld [vmem:[%s0 + $0xa8] sm:$0xff]
  %v37 = vld [vmem:[%s0 + $0xb0] sm:$0xff]
  %v38 = vld [vmem:[%s0 + $0xb8] sm:$0xff]
  %v39 = vld [vmem:[%s1] sm:$0xff]
  %v40 = vld [vmem:[%s1 + $0x8] sm:$0xff]
  %v41 = vld [vmem:[%s1 + $0x10] sm:$0xff]
  %v42 = vld [vmem:[%s1 + $0x18] sm:$0xff]
  %v43 = vld [vmem:[%s1 + $0x20] sm:$0xff]
  %v44 = vld [vmem:[%s1 + $0x28] sm:$0xff]
  %v45 = vld [vmem:[%s1 + $0x30] sm:$0xff]
  %v46 = vld [vmem:[%s1 + $0x38] sm:$0xff]
  %v47 = vld [vmem:[%s1 + $0x40] sm:$0xff]
  %v48 = vld [vmem:[%s1 + $0x48] sm:$0xff]
  %v49 = vld [vmem:[%s1 + $0x50] sm:$0xff]
  %v50 = vld [vmem:[%s1 + $0x58] sm:$0xff]
  %v51 = vld [vmem:[%s1 + $0x60] sm:$0xff]
  %v52 = vld [vmem:[%s1 + $0x68] sm:$0xff]
  %v53 = vld [vmem:[%s1 + $0x70] sm:$0xff]
  %v54 = vld [vmem:[%s1 + $0x78] sm:$0xff]
  %v55 = vld [vmem:[%s1 + $0x80] sm:$0xff]
  %v56 = vld [vmem:[%s1 + $0x88] sm:$0xff]
  %v57 = vld [vmem:[%s1 + $0x90] sm:$0xff]
  %v58 = vld [vmem:[%s1 + $0x98] sm:$0xff]
  %v59 = vld [vmem:[%s1 + $0xa0] sm:$0xff]
  %v60 = vld [vmem:[%s1 + $0xa8] sm:$0xff]
  %v61 = vld [vmem:[%s1 + $0xb0] sm:$0xff]
  %v62 = vld [vmem:[%s1 + $0xb8] sm:$0xff]
  %v63 = vld [vmem:[%s1 + $0xc0] sm:$0xff]
  %v64 = vld [vmem:[%s1 + $0xc8] sm:$0xff]
  %v65 = vld [vmem:[%s1 + $0xd0] sm:$0xff]
  %v66 = vld [vmem:[%s1 + $0xd8] sm:$0xff]
  %v67 = vld [vmem:[%s1 + $0xe0] sm:$0xff]
  %v68 = vld [vmem:[%s1 + $0xe8] sm:$0xff]
  %v69 = vld [vmem:[%s1 + $0xf0] sm:$0xff]
  %v70 = vld [vmem:[%s1 + $0xf8] sm:$0xff]
  %v71 = vld [vmem:[%s1 + $0x100] sm:$0xff]
  %v72 = vld [vmem:[%s1 + $0x108] sm:$0xff]
  %v73 = vld [vmem:[%s1 + $0x110] sm:$0xff]
  %v74 = vld [vmem:[%s1 + $0x118] sm:$0xff]
  %v75 = vld [vmem:[%s1 + $0x120] sm:$0xff]
  %v76 = vld [vmem:[%s1 + $0x128] sm:$0xff]
  %v77 = vld [vmem:[%s1 + $0x130] sm:$0xff]
  %v78 = vld [vmem:[%s1 + $0x138] sm:$0xff]
  %v79 = vld [vmem:[%s1 + $0x140] sm:$0xff]
  %v80 = vld [vmem:[%s1 + $0x148] sm:$0xff]
  %v81 = vld [vmem:[%s1 + $0x150] sm:$0xff]
  %v82 = vld [vmem:[%s1 + $0x158] sm:$0xff]
  %v83 = vld [vmem:[%s1 + $0x160] sm:$0xff]
  %v84 = vld [vmem:[%s1 + $0x168] sm:$0xff]
  %v85 = vld [vmem:[%s1 + $0x170] sm:$0xff]
  %v86 = vld [vmem:[%s1 + $0x178] sm:$0xff]
  %v87 = vld [vmem:[%s1 + $0x180] sm:$0xff]
  %v88 = vld [vmem:[%s1 + $0x188] sm:$0xff]
  %v89 = vld [vmem:[%s1 + $0x190] sm:$0xff]
  %v90 = vld [vmem:[%s1 + $0x198] sm:$0xff]
  %v91 = vld [vmem:[%s1 + $0x1a0] sm:$0xff]
  %v92 = vld [vmem:[%s1 + $0x1a8] sm:$0xff]
  %v93 = vld [vmem:[%s1 + $0x1b0] sm:$0xff]
  %v94 = vld [vmem:[%s1 + $0x1b8] sm:$0xff]
  %v95 = vld [vmem:[%s1 + $0x1c0] sm:$0xff]
  %v96 = vld [vmem:[%s1 + $0x1c8] sm:$0xff]
  %v97 = vld [vmem:[%s1 + $0x1d0] sm:$0xff]
  %v98 = vld [vmem:[%s1 + $0x1d8] sm:$0xff]
  %v99 = vld [vmem:[%s1 + $0x1e0] sm:$0xff]
  %v100 = vld [vmem:[%s1 + $0x1e8] sm:$0xff]
  %v101 = vld [vmem:[%s1 + $0x1f0] sm:$0xff]
  %v102 = vld [vmem:[%s1 + $0x1f8] sm:$0xff]
  %v103 = vld [vmem:[%s1 + $0x200] sm:$0xff]
  %v104 = vld [vmem:[%s1 + $0x208] sm:$0xff]
  %v105 = vld [vmem:[%s1 + $0x210] sm:$0xff]
  %v106 = vld [vmem:[%s1 + $0x218] sm:$0xff]
  %v107 = vld [vmem:[%s1 + $0x220] sm:$0xff]
  %v108 = vld [vmem:[%s1 + $0x228] sm:$0xff]
  %v109 = vld [vmem:[%s1 + $0x230] sm:$0xff]
  %v110 = vld [vmem:[%s1 + $0x238] sm:$0xff]
  %v111 = vld [vmem:[%s1 + $0x240] sm:$0xff]
  %v112 = vld [vmem:[%s1 + $0x248] sm:$0xff]
  %v113 = vld [vmem:[%s1 + $0x250] sm:$0xff]
  %v114 = vld [vmem:[%s1 + $0x258] sm:$0xff]
  %v115 = vld [vmem:[%s1 + $0x260] sm:$0xff]
  %v116 = vld [vmem:[%s1 + $0x268] sm:$0xff]
  %v117 = vld [vmem:[%s1 + $0x270] sm:$0xff]
  %v118 = vld [vmem:[%s1 + $0x278] sm:$0xff]
  %v119 = vld [vmem:[%s1 + $0x280] sm:$0xff]
  %v120 = vld [vmem:[%s1 + $0x288] sm:$0xff]
  %v121 = vld [vmem:[%s1 + $0x290] sm:$0xff]
  %v122 = vld [vmem:[%s1 + $0x298] sm:$0xff]
  %v123 = vld [vmem:[%s1 + $0x2a0] sm:$0xff]
  %v124 = vld [vmem:[%s1 + $0x2a8] sm:$0xff]
  %v125 = vld [vmem:[%s1 + $0x2b0] sm:$0xff]
  %v126 = vld [vmem:[%s1 + $0x2b8] sm:$0xff]
  %v127 = vld [vmem:[%s1 + $0x2c0] sm:$0xff]
  %v128 = vld [vmem:[%s1 + $0x2c8] sm:$0xff]
  %v129 = vld [vmem:[%s1 + $0x2d0] sm:$0xff]
  %v130 = vld [vmem:[%s1 + $0x2d8] sm:$0xff]
  %v131 = vld [vmem:[%s1 + $0x2e0] sm:$0xff]
  %v132 = vld [vmem:[%s1 + $0x2e8] sm:$0xff]
  %v133 = vld [vmem:[%s1 + $0x2f0] sm:$0xff]
  %v134 = vld [vmem:[%s1 + $0x2f8] sm:$0xff]
  %v135 = vpack.c.bf16 %v21, %v15
  %v136 = vpack.c.bf16 %v22, %v16
  %v137 = vpack.c.bf16 %v23, %v17
  %v138 = vpack.c.bf16 %v24, %v18
  %v139 = vpack.c.bf16 %v25, %v19
  %v140 = vpack.c.bf16 %v26, %v20
  %v141 = vpack.c.bf16 %v33, %v27
  %v142 = vpack.c.bf16 %v34, %v28
  %v143 = vpack.c.bf16 %v35, %v29
  %v144 = vpack.c.bf16 %v36, %v30
  %v145 = vpack.c.bf16 %v37, %v31
  %v146 = vpack.c.bf16 %v38, %v32
  %v147 = vpack.c.bf16 %v40, %v39
  %v148 = vpack.c.bf16 %v42, %v41
  %v149 = vpack.c.bf16 %v44, %v43
  %v150 = vpack.c.bf16 %v46, %v45
  %v151 = vpack.c.bf16 %v48, %v47
  %v152 = vpack.c.bf16 %v50, %v49
  %v153 = vpack.c.bf16 %v52, %v51
  %v154 = vpack.c.bf16 %v54, %v53
  %v155 = vpack.c.bf16 %v56, %v55
  %v156 = vpack.c.bf16 %v58, %v57
  %v157 = vpack.c.bf16 %v60, %v59
  %v158 = vpack.c.bf16 %v62, %v61
  %v159 = vpack.c.bf16 %v64, %v63
  %v160 = vpack.c.bf16 %v66, %v65
  %v161 = vpack.c.bf16 %v68, %v67
  %v162 = vpack.c.bf16 %v70, %v69
  %v163 = vpack.c.bf16 %v72, %v71
  %v164 = vpack.c.bf16 %v74, %v73
  %v165 = vpack.c.bf16 %v76, %v75
  %v166 = vpack.c.bf16 %v78, %v77
  %v167 = vpack.c.bf16 %v80, %v79
  %v168 = vpack.c.bf16 %v82, %v81
  %v169 = vpack.c.bf16 %v84, %v83
  %v170 = vpack.c.bf16 %v86, %v85
  %v171 = vpack.c.bf16 %v88, %v87
  %v172 = vpack.c.bf16 %v90, %v89
  %v173 = vpack.c.bf16 %v92, %v91
  %v174 = vpack.c.bf16 %v94, %v93
  %v175 = vpack.c.bf16 %v96, %v95
  %v176 = vpack.c.bf16 %v98, %v97
  %v177 = vpack.c.bf16 %v100, %v99
  %v178 = vpack.c.bf16 %v102, %v101
  %v179 = vpack.c.bf16 %v104, %v103
  %v180 = vpack.c.bf16 %v106, %v105
  %v181 = vpack.c.bf16 %v108, %v107
  %v182 = vpack.c.bf16 %v110, %v109
  %v183 = vpack.c.bf16 %v112, %v111
  %v184 = vpack.c.bf16 %v114, %v113
  %v185 = vpack.c.bf16 %v116, %v115
  %v186 = vpack.c.bf16 %v118, %v117
  %v187 = vpack.c.bf16 %v120, %v119
  %v188 = vpack.c.bf16 %v122, %v121
  %v189 = vpack.c.bf16 %v124, %v123
  %v190 = vpack.c.bf16 %v126, %v125
  %v191 = vpack.c.bf16 %v128, %v127
  %v192 = vpack.c.bf16 %v130, %v129
  %v193 = vpack.c.bf16 %v132, %v131
  %v194 = vpack.c.bf16 %v134, %v133
  %v195 = vld [vmem:[%s2] sm:$0x1]
  %v197 = vlaneseq
  %v198 = vshrl.u32 %v197, 7
  %v199 = vsub.s32 0, %v198
  %v200 = vrot.slane %v195, %v199
  %202 = vmatprep.subr.bf16.mxu0 0
  %203 = vmatpush1.bf16.msra.mxu0 %v147
  %204 = vmatprep.subr.bf16.mxu0 0
  %205 = vmatpush1.bf16.msra.mxu0 %v148
  %206 = vmatprep.subr.bf16.mxu0 0
  %207 = vmatpush1.bf16.msra.mxu0 %v149
  %208 = vmatprep.subr.bf16.mxu0 0
  %209 = vmatpush1.bf16.msra.mxu0 %v150
  %210 = vmatprep.subr.bf16.mxu0 0
  %211 = vmatpush1.bf16.msra.mxu0 %v151
  %212 = vmatprep.subr.bf16.mxu0 0
  %213 = vmatpush1.bf16.msra.mxu0 %v152
  %214 = vmatprep.subr.bf16.mxu0 0
  %215 = vmatpush1.bf16.msra.mxu0 %v153
  %216 = vmatprep.subr.bf16.mxu0 0
  %217 = vmatpush1.bf16.msra.mxu0 %v154
  %218 = vmatprep.subr.bf16.mxu0 0
  %219 = vmatpush1.bf16.msra.mxu0 %v155
  %220 = vmatprep.subr.bf16.mxu0 0
  %221 = vmatpush1.bf16.msra.mxu0 %v156
  %222 = vmatprep.subr.bf16.mxu0 0
  %223 = vmatpush1.bf16.msra.mxu0 %v157
  %224 = vmatprep.subr.bf16.mxu0 0
  %225 = vmatpush1.bf16.msra.mxu0 %v158
  %226 = vmatprep.subr.bf16.mxu0 0
  %227 = vmatpush1.bf16.msra.mxu0 %v159
  %228 = vmatprep.subr.bf16.mxu0 0
  %229 = vmatpush1.bf16.msra.mxu0 %v160
  %230 = vmatprep.subr.bf16.mxu0 0
  %231 = vmatpush1.bf16.msra.mxu0 %v161
  %232 = vmatprep.subr.bf16.mxu0 0
  %233 = vmatpush1.bf16.msra.mxu0 %v162
  %234 = vmatprep.mubr.bf16.mxu0 %v136
  %235 = vmatmul.mubr.bf16.gmra.mrb[0].mxu0 %v135
  %v236 = vpop.f32.mrb[0].mxu0
  %v237 = vadd.f32 %v200, %v236
  %v238 = vpop.f32.mrb[0].mxu0
  %v239 = vpop.f32.mrb[0].mxu0
  %v240 = vadd.f32 %v200, %v239
  %v241 = vpop.f32.mrb[0].mxu0
  %242 = vmatprep.mubr.bf16.mxu0 %v142
  %243 = vmatmul.mubr.bf16.gmra.mrb[0].mxu0 %v141
  %v244 = vpop.f32.mrb[0].mxu0
  %v245 = vadd.f32 %v200, %v244
  %v246 = vpop.f32.mrb[0].mxu0
  %v247 = vpop.f32.mrb[0].mxu0
  %v248 = vadd.f32 %v200, %v247
  %v249 = vpop.f32.mrb[0].mxu0
  %250 = vdwg.mxu0
  %251 = vmatprep.subr.bf16.mxu0 0
  %252 = vmatpush1.bf16.msra.mxu0 %v163
  %253 = vmatprep.subr.bf16.mxu0 0
  %254 = vmatpush1.bf16.msra.mxu0 %v164
  %255 = vmatprep.subr.bf16.mxu0 0
  %256 = vmatpush1.bf16.msra.mxu0 %v165
  %257 = vmatprep.subr.bf16.mxu0 0
  %258 = vmatpush1.bf16.msra.mxu0 %v166
  %259 = vmatprep.subr.bf16.mxu0 0
  %260 = vmatpush1.bf16.msra.mxu0 %v167
  %261 = vmatprep.subr.bf16.mxu0 0
  %262 = vmatpush1.bf16.msra.mxu0 %v168
  %263 = vmatprep.subr.bf16.mxu0 0
  %264 = vmatpush1.bf16.msra.mxu0 %v169
  %265 = vmatprep.subr.bf16.mxu0 0
  %266 = vmatpush1.bf16.msra.mxu0 %v170
  %267 = vmatprep.subr.bf16.mxu0 0
  %268 = vmatpush1.bf16.msra.mxu0 %v171
  %269 = vmatprep.subr.bf16.mxu0 0
  %270 = vmatpush1.bf16.msra.mxu0 %v172
  %271 = vmatprep.subr.bf16.mxu0 0
  %272 = vmatpush1.bf16.msra.mxu0 %v173
  %273 = vmatprep.subr.bf16.mxu0 0
  %274 = vmatpush1.bf16.msra.mxu0 %v174
  %275 = vmatprep.subr.bf16.mxu0 0
  %276 = vmatpush1.bf16.msra.mxu0 %v175
  %277 = vmatprep.subr.bf16.mxu0 0
  %278 = vmatpush1.bf16.msra.mxu0 %v176
  %279 = vmatprep.subr.bf16.mxu0 0
  %280 = vmatpush1.bf16.msra.mxu0 %v177
  %281 = vmatprep.subr.bf16.mxu0 0
  %282 = vmatpush1.bf16.msra.mxu0 %v178
  %283 = vmatprep.mubr.bf16.mxu0 %v138
  %284 = vmatmul.mubr.bf16.gmra.mrb[0].mxu0 %v137
  %v285 = vpop.f32.mrb[0].mxu0
  %v286 = vadd.f32 %v237, %v285
  %v287 = vpop.f32.mrb[0].mxu0
  %v288 = vpop.f32.mrb[0].mxu0
  %v289 = vadd.f32 %v240, %v288
  %v290 = vpop.f32.mrb[0].mxu0
  %291 = vmatprep.mubr.bf16.mxu0 %v144
  %292 = vmatmul.mubr.bf16.gmra.mrb[0].mxu0 %v143
  %v293 = vpop.f32.mrb[0].mxu0
  %v294 = vadd.f32 %v245, %v293
  %v295 = vpop.f32.mrb[0].mxu0
  %v296 = vpop.f32.mrb[0].mxu0
  %v297 = vadd.f32 %v248, %v296
  %v298 = vpop.f32.mrb[0].mxu0
  %299 = vdwg.mxu0
  %300 = vmatprep.subr.bf16.mxu0 0
  %301 = vmatpush1.bf16.msra.mxu0 %v179
  %302 = vmatprep.subr.bf16.mxu0 0
  %303 = vmatpush1.bf16.msra.mxu0 %v180
  %304 = vmatprep.subr.bf16.mxu0 0
  %305 = vmatpush1.bf16.msra.mxu0 %v181
  %306 = vmatprep.subr.bf16.mxu0 0
  %307 = vmatpush1.bf16.msra.mxu0 %v182
  %308 = vmatprep.subr.bf16.mxu0 0
  %309 = vmatpush1.bf16.msra.mxu0 %v183
  %310 = vmatprep.subr.bf16.mxu0 0
  %311 = vmatpush1.bf16.msra.mxu0 %v184
  %312 = vmatprep.subr.bf16.mxu0 0
  %313 = vmatpush1.bf16.msra.mxu0 %v185
  %314 = vmatprep.subr.bf16.mxu0 0
  %315 = vmatpush1.bf16.msra.mxu0 %v186
  %316 = vmatprep.subr.bf16.mxu0 0
  %317 = vmatpush1.bf16.msra.mxu0 %v187
  %318 = vmatprep.subr.bf16.mxu0 0
  %319 = vmatpush1.bf16.msra.mxu0 %v188
  %320 = vmatprep.subr.bf16.mxu0 0
  %321 = vmatpush1.bf16.msra.mxu0 %v189
  %322 = vmatprep.subr.bf16.mxu0 0
  %323 = vmatpush1.bf16.msra.mxu0 %v190
  %324 = vmatprep.subr.bf16.mxu0 0
  %325 = vmatpush1.bf16.msra.mxu0 %v191
  %326 = vmatprep.subr.bf16.mxu0 0
  %327 = vmatpush1.bf16.msra.mxu0 %v192
  %328 = vmatprep.subr.bf16.mxu0 0
  %329 = vmatpush1.bf16.msra.mxu0 %v193
  %330 = vmatprep.subr.bf16.mxu0 0
  %331 = vmatpush1.bf16.msra.mxu0 %v194
  %332 = vmatprep.mubr.bf16.mxu0 %v140
  %333 = vmatmul.mubr.bf16.gmra.mrb[0].mxu0 %v139
  %v334 = vpop.f32.mrb[0].mxu0
  %v335 = vadd.f32 %v286, %v334
  %v336 = vpop.f32.mrb[0].mxu0
  %v337 = vpop.f32.mrb[0].mxu0
  %v338 = vadd.f32 %v289, %v337
  %v339 = vpop.f32.mrb[0].mxu0
  %340 = vmatprep.mubr.bf16.mxu0 %v146
  %341 = vmatmul.mubr.bf16.gmra.mrb[0].mxu0 %v145
  %v342 = vpop.f32.mrb[0].mxu0
  %v343 = vadd.f32 %v294, %v342
  %v344 = vpop.f32.mrb[0].mxu0
  %v345 = vpop.f32.mrb[0].mxu0
  %v346 = vadd.f32 %v297, %v345
  %v347 = vpop.f32.mrb[0].mxu0
  %348 = vdwg.mxu0
  %vm349 = vcmask 523264
  %350 = vst.msk [vmem:[%s3] sm:$0xff] %vm349, %v335
  %351 = vst.msk [vmem:[%s3 + $0x8] sm:$0xff] %vm349, %v338
  %352 = vst.msk [vmem:[%s3 + $0x10] sm:$0xff] %vm349, %v343
  %353 = vst.msk [vmem:[%s3 + $0x18] sm:$0xff] %vm349, %v346
  // Predicated region
  $region14: #{image_encoder.6} parent=0 // pred_check
    _
  $region15: #{image_encoder.6} parent=0 // pred_check_branch
    %355 = sbr.rel (0) target = $region17
  $region16: #{image_encoder.6} parent=0 // pred_region
    _
  $region17: #{image_encoder.6} parent=0 // pred_fallthru
    _
  // Predicated region
  $region18: #{image_encoder.6} parent=0 // pred_check
    _
  $region19: #{image_encoder.6} parent=0 // pred_check_branch
    %357 = sbr.rel (0) target = $region21
  $region20: #{image_encoder.6} parent=0 // pred_region
    _
  $region21: #{image_encoder.6} parent=0 // pred_fallthru
    _

// kernel: image_encoder.7
$region0: #{image_encoder.7}
  #allocation0 [shape = 'u32[]', space=smem, size = 0x4, offset = 0x4, fixed_abs, tag = 'smem constant byte address 0x4 - core index']
  #allocation1 [shape = 'u32[144,128]{1,0:T(1,128)}', space=vmem, size = 0x12000, scoped, tag = 'internal scratch']
  %s0 = inlined_call_operand.vmem [shape: f32[2,16,64], index: 0, kind: input, shape index: {}]
  %s1 = inlined_call_operand.vmem [shape: f32[1,64], index: 1, kind: input, shape index: {}]
  %s2 = inlined_call_operand.vmem [shape: f32[1,64], index: 2, kind: input, shape index: {}]
  %s3 = inlined_call_operand.vmem [shape: f32[64,192], index: 3, kind: input, shape index: {}]
  %s4 = inlined_call_operand.vmem [shape: f32[1,192], index: 4, kind: input, shape index: {}]
  %s5 = inlined_call_operand.vmem [shape: f32[64,64], index: 5, kind: input, shape index: {}]
  %s6 = inlined_call_operand.vmem [shape: f32[1,64], index: 6, kind: input, shape index: {}]
  %s7 = inlined_call_operand.vmem [shape: f32[2,16,64], index: 7, kind: output, shape index: {}]
  %s8 = sld [smem:[#allocation0]]
  $region38: #{image_encoder.7} parent=0
    _
  %s10 = ssub.s32 1, %s8
  %s11 = scalar_select 0, %s10, %s8
  // Predicated region
  $region2: #{image_encoder.7} parent=0 // pred_check
    _
  $region3: #{image_encoder.7} parent=0 // pred_check_branch
    %13 = sbr.rel (0) target = $region5
  $region4: #{image_encoder.7} parent=0 // pred_region
    _
  $region5: #{image_encoder.7} parent=0 // pred_fallthru
    _
  // Predicated region
  $region6: #{image_encoder.7} parent=0 // pred_check
    _
  $region7: #{image_encoder.7} parent=0 // pred_check_branch
    %15 = sbr.rel (0) target = $region9
  $region8: #{image_encoder.7} parent=0 // pred_region
    _
  $region9: #{image_encoder.7} parent=0 // pred_fallthru
    _
  // Predicated region
  $region10: #{image_encoder.7} parent=0 // pred_check
    _
  $region11: #{image_encoder.7} parent=0 // pred_check_branch
    %17 = sbr.rel (0) target = $region13
  $region12: #{image_encoder.7} parent=0 // pred_region
    _
  $region13: #{image_encoder.7} parent=0 // pred_fallthru
    _
  // Predicated region
  $region14: #{image_encoder.7} parent=0 // pred_check
    _
  $region15: #{image_encoder.7} parent=0 // pred_check_branch
    %19 = sbr.rel (0) target = $region17
  $region16: #{image_encoder.7} parent=0 // pred_region
    _
  $region17: #{image_encoder.7} parent=0 // pred_fallthru
    _
  // Predicated region
  $region18: #{image_encoder.7} parent=0 // pred_check
    _
  $region19: #{image_encoder.7} parent=0 // pred_check_branch
    %21 = sbr.rel (0) target = $region21
  $region20: #{image_encoder.7} parent=0 // pred_region
    _
  $region21: #{image_encoder.7} parent=0 // pred_fallthru
    _
  // Predicated region
  $region22: #{image_encoder.7} parent=0 // pred_check
    _
  $region23: #{image_encoder.7} parent=0 // pred_check_branch
    %23 = sbr.rel (0) target = $region25
  $region24: #{image_encoder.7} parent=0 // pred_region
    _
  $region25: #{image_encoder.7} parent=0 // pred_fallthru
    _
  // Predicated region
  $region26: #{image_encoder.7} parent=0 // pred_check
    _
  $region27: #{image_encoder.7} parent=0 // pred_check_branch
    %25 = sbr.rel (0) target = $region29
  $region28: #{image_encoder.7} parent=0 // pred_region
    _
  $region29: #{image_encoder.7} parent=0 // pred_fallthru
    _
  %v27 = vld [vmem:[%s0] sm:$0xff]
  %v28 = vld [vmem:[%s0 + $0x8] sm:$0xff]
  %v29 = vld [vmem:[%s0 + $0x10] sm:$0xff]
  %v30 = vld [vmem:[%s0 + $0x18] sm:$0xff]
  %v31 = vld [vmem:[%s1] sm:$0x1]
  %v32 = vld [vmem:[%s2] sm:$0x1]
  %vm33 = vcmask 523264
  %v34 = vsel %vm33, %v27, 0.0
  %35 = vadd.xlane.f32.xlu0 %v34
  %v36 = vpop.xlane.xlu0 %35
  %v37 = vsel %vm33, %v28, 0.0
  %38 = vadd.xlane.f32.xlu0 %v37
  %v39 = vpop.xlane.xlu0 %38
  %v40 = vsel %vm33, %v29, 0.0
  %41 = vadd.xlane.f32.xlu0 %v40
  %v42 = vpop.xlane.xlu0 %41
  %v43 = vsel %vm33, %v30, 0.0
  %44 = vadd.xlane.f32.xlu0 %v43
  %v45 = vpop.xlane.xlu0 %44
  %v46 = vrcp.pop 64.0
  %v47 = vmul.f32 %v36, %v46
  %v48 = vmul.f32 %v39, %v46
  %v49 = vmul.f32 %v42, %v46
  %v50 = vmul.f32 %v45, %v46
  %v51 = vsub.f32 %v27, %v47
  %v52 = vsub.f32 %v28, %v48
  %v53 = vsub.f32 %v29, %v49
  %v54 = vsub.f32 %v30, %v50
  %v55 = vmul.f32 %v51, %v51
  %v56 = vmul.f32 %v52, %v52
  %v57 = vmul.f32 %v53, %v53
  %v58 = vmul.f32 %v54, %v54
  %v59 = vsel %vm33, %v55, 0.0
  %60 = vadd.xlane.f32.xlu0 %v59
  %v61 = vpop.xlane.xlu0 %60
  %v62 = vsel %vm33, %v56, 0.0
  %63 = vadd.xlane.f32.xlu0 %v62
  %v64 = vpop.xlane.xlu0 %63
  %v65 = vsel %vm33, %v57, 0.0
  %66 = vadd.xlane.f32.xlu0 %v65
  %v67 = vpop.xlane.xlu0 %66
  %v68 = vsel %vm33, %v58, 0.0
  %69 = vadd.xlane.f32.xlu0 %v68
  %v70 = vpop.xlane.xlu0 %69
  %v71 = vmul.f32 %v61, %v46
  %v72 = vmul.f32 %v64, %v46
  %v73 = vmul.f32 %v67, %v46
  %v74 = vmul.f32 %v70, %v46
  %v75 = vadd.f32 %v71, 1e-06
  %v76 = vadd.f32 %v72, 1e-06
  %v77 = vadd.f32 %v73, 1e-06
  %v78 = vadd.f32 %v74, 1e-06
  %v79 = vrsqrt.pop %v75
  %v80 = vrsqrt.pop %v76
  %v81 = vrsqrt.pop %v77
  %v82 = vrsqrt.pop %v78
  %v83 = vmul.f32 %v51, %v79
  %v84 = vmul.f32 %v52, %v80
  %v85 = vmul.f32 %v53, %v81
  %v86 = vmul.f32 %v54, %v82
  %v88 = vlaneseq
  %v89 = vshrl.u32 %v88, 7
  %v90 = vsub.s32 0, %v89
  %v91 = vrot.slane %v31, %v90
  %v93 = vmul.f32 %v83, %v91
  %v94 = vmul.f32 %v84, %v91
  %v95 = vmul.f32 %v85, %v91
  %v96 = vmul.f32 %v86, %v91
  %v98 = vlaneseq
  %v99 = vshrl.u32 %v98, 7
  %v100 = vsub.s32 0, %v99
  %v101 = vrot.slane %v32, %v100
  %v103 = vadd.f32 %v93, %v101
  %v104 = vadd.f32 %v94, %v101
  %v105 = vadd.f32 %v95, %v101
  %v106 = vadd.f32 %v96, %v101
  %v107 = vld [vmem:[%s3] sm:$0xff]
  %v108 = vld [vmem:[%s3 + $0x8] sm:$0xff]
  %v109 = vld [vmem:[%s3 + $0x10] sm:$0xff]
  %v110 = vld [vmem:[%s3 + $0x18] sm:$0xff]
  %v111 = vld [vmem:[%s3 + $0x20] sm:$0xff]
  %v112 = vld [vmem:[%s3 + $0x28] sm:$0xff]
  %v113 = vld [vmem:[%s3 + $0x30] sm:$0xff]
  %v114 = vld [vmem:[%s3 + $0x38] sm:$0xff]
  %v115 = vld [vmem:[%s3 + $0x40] sm:$0xff]
  %v116 = vld [vmem:[%s3 + $0x48] sm:$0xff]
  %v117 = vld [vmem:[%s3 + $0x50] sm:$0xff]
  %v118 = vld [vmem:[%s3 + $0x58] sm:$0xff]
  %v119 = vld [vmem:[%s3 + $0x60] sm:$0xff]
  %v120 = vld [vmem:[%s3 + $0x68] sm:$0xff]
  %v121 = vld [vmem:[%s3 + $0x70] sm:$0xff]
  %v122 = vld [vmem:[%s3 + $0x78] sm:$0xff]
  %v123 = vpack.c.bf16 %v104, %v103
  %v124 = vpack.c.bf16 %v106, %v105
  %v125 = vpack.c.bf16 %v109, %v107
  %v126 = vpack.c.bf16 %v110, %v108
  %v127 = vpack.c.bf16 %v113, %v111
  %v128 = vpack.c.bf16 %v114, %v112
  %v129 = vpack.c.bf16 %v117, %v115
  %v130 = vpack.c.bf16 %v118, %v116
  %v131 = vpack.c.bf16 %v121, %v119
  %v132 = vpack.c.bf16 %v122, %v120
  %v133 = vld [vmem:[%s4] sm:$0x3]
  %v135 = vlaneseq
  %v136 = vshrl.u32 %v135, 7
  %v137 = vsub.s32 0, %v136
  %v138 = vrot.slane %v133, %v137
  %v139 = vlaneseq
  %v140 = vshrl.u32 %v139, 7
  %v141 = vsub.s32 1, %v140
  %v142 = vrot.slane %v133, %v141
  %v146 = vsel %vm33, %v123, 0
  %v149 = vsel %vm33, %v124, 0
  %151 = vmatprep.subr.bf16.mxu0 %v126
  %152 = vmatpush1.bf16.msra.mxu0 %v125
  %153 = vmatprep.subr.bf16.mxu0 %v128
  %154 = vmatpush1.bf16.msra.mxu0 %v127
  %155 = vmatprep.subr.bf16.mxu0 %v130
  %156 = vmatpush1.bf16.msra.mxu0 %v129
  %157 = vmatprep.subr.bf16.mxu0 %v132
  %158 = vmatpush1.bf16.msra.mxu0 %v131
  %159 = vmatprep.subr.bf16.mxu0 0
  %160 = vmatpush1.bf16.msra.mxu0 0
  %161 = vmatprep.subr.bf16.mxu0 0
  %162 = vmatpush1.bf16.msra.mxu0 0
  %163 = vmatprep.subr.bf16.mxu0 0
  %164 = vmatpush1.bf16.msra.mxu0 0
  %165 = vmatprep.subr.bf16.mxu0 0
  %166 = vmatpush1.bf16.msra.mxu0 0
  %167 = vmatprep.subr.bf16.mxu0 0
  %168 = vmatpush1.bf16.msra.mxu0 0
  %169 = vmatprep.subr.bf16.mxu0 0
  %170 = vmatpush1.bf16.msra.mxu0 0
  %171 = vmatprep.subr.bf16.mxu0 0
  %172 = vmatpush1.bf16.msra.mxu0 0
  %173 = vmatprep.subr.bf16.mxu0 0
  %174 = vmatpush1.bf16.msra.mxu0 0
  %175 = vmatprep.subr.bf16.mxu0 0
  %176 = vmatpush1.bf16.msra.mxu0 0
  %177 = vmatprep.subr.bf16.mxu0 0
  %178 = vmatpush1.bf16.msra.mxu0 0
  %179 = vmatprep.subr.bf16.mxu0 0
  %180 = vmatpush1.bf16.msra.mxu0 0
  %181 = vmatprep.subr.bf16.mxu0 0
  %182 = vmatpush1.bf16.msra.mxu0 0
  %183 = vmatprep.mubr.bf16.mxu0 0
  %184 = vmatmul.mubr.bf16.gmra.mrb[0].mxu0 %v146
  %v185 = vpop.f32.mrb[0].mxu0
  %v186 = vadd.f32 %v138, %v185
  %v187 = vpop.f32.mrb[0].mxu0
  %v188 = vadd.f32 %v142, %v187
  %v189 = vpop.f32.mrb[0].mxu0
  %v190 = vadd.f32 %v138, %v189
  %v191 = vpop.f32.mrb[0].mxu0
  %v192 = vadd.f32 %v142, %v191
  %193 = vmatprep.mubr.bf16.mxu0 0
  %194 = vmatmul.mubr.bf16.gmra.mrb[0].mxu0 %v149
  %v195 = vpop.f32.mrb[0].mxu0
  %v196 = vadd.f32 %v138, %v195
  %v197 = vpop.f32.mrb[0].mxu0
  %v198 = vadd.f32 %v142, %v197
  %v199 = vpop.f32.mrb[0].mxu0
  %v200 = vadd.f32 %v138, %v199
  %v201 = vpop.f32.mrb[0].mxu0
  %v202 = vadd.f32 %v142, %v201
  %203 = vdwg.mxu0
  %v204 = vld [vmem:[%s5] sm:$0xff]
  %v205 = vld [vmem:[%s5 + $0x8] sm:$0xff]
  %v206 = vld [vmem:[%s5 + $0x10] sm:$0xff]
  %v207 = vld [vmem:[%s5 + $0x18] sm:$0xff]
  %v208 = vld [vmem:[%s5 + $0x20] sm:$0xff]
  %v209 = vld [vmem:[%s5 + $0x28] sm:$0xff]
  %v210 = vld [vmem:[%s5 + $0x30] sm:$0xff]
  %v211 = vld [vmem:[%s5 + $0x38] sm:$0xff]
  %v212 = vmul.f32 %v186, 0.17677669
  %v213 = vmul.f32 %v190, 0.17677669
  %v214 = vmul.f32 %v196, 0.17677669
  %v215 = vmul.f32 %v200, 0.17677669
  %v216 = vpack.c.bf16 %v213, %v212
  %v217 = vpack.c.bf16 %v215, %v214
  %v218 = vpack.c.bf16 %v190, %v186
  %v219 = vpack.c.bf16 %v200, %v196
  %221 = vrot.lane.b32.xlu0 %v218, 64
  %v222 = vpop.permute.xlu0 %221
  %vm223 = vcmask 261120
  %v225 = vsel %vm223, %v216, 0
  %v228 = vsel %vm223, %v222, 0
  %230 = vmatprep.subr.bf16.mxu0 0
  %231 = vmatpush1.bf16.xpose.msra.mxu0 %v228
  %232 = vmatprep.subr.bf16.mxu0 0
  %233 = vmatpush1.bf16.xpose.msra.mxu0 0
  %234 = vmatprep.subr.bf16.mxu0 0
  %235 = vmatpush1.bf16.xpose.msra.mxu0 0
  %236 = vmatprep.subr.bf16.mxu0 0
  %237 = vmatpush1.bf16.xpose.msra.mxu0 0
  %238 = vmatprep.subr.bf16.mxu0 0
  %239 = vmatpush1.bf16.xpose.msra.mxu0 0
  %240 = vmatprep.subr.bf16.mxu0 0
  %241 = vmatpush1.bf16.xpose.msra.mxu0 0
  %242 = vmatprep.subr.bf16.mxu0 0
  %243 = vmatpush1.bf16.xpose.msra.mxu0 0
  %244 = vmatprep.subr.bf16.mxu0 0
  %245 = vmatpush1.bf16.xpose.msra.mxu0 0
  %246 = vmatprep.subr.bf16.mxu0 0
  %247 = vmatpush1.bf16.xpose.msra.mxu0 0
  %248 = vmatprep.subr.bf16.mxu0 0
  %249 = vmatpush1.bf16.xpose.msra.mxu0 0
  %250 = vmatprep.subr.bf16.mxu0 0
  %251 = vmatpush1.bf16.xpose.msra.mxu0 0
  %252 = vmatprep.subr.bf16.mxu0 0
  %253 = vmatpush1.bf16.xpose.msra.mxu0 0
  %254 = vmatprep.subr.bf16.mxu0 0
  %255 = vmatpush1.bf16.xpose.msra.mxu0 0
  %256 = vmatprep.subr.bf16.mxu0 0
  %257 = vmatpush1.bf16.xpose.msra.mxu0 0
  %258 = vmatprep.subr.bf16.mxu0 0
  %259 = vmatpush1.bf16.xpose.msra.mxu0 0
  %260 = vmatprep.subr.bf16.mxu0 0
  %261 = vmatpush1.bf16.xpose.msra.mxu0 0
  %262 = vmatprep.mubr.bf16.mxu0 0
  %263 = vmatmul.mubr.bf16.gmra.mrb[0].mxu0 %v225
  %v264 = vpop.f32.mrb[0].mxu0
  %v265 = vadd.f32 0.0, %v264
  %v266 = vpop.f32.mrb[0].mxu0
  %v267 = vpop.f32.mrb[0].mxu0
  %v268 = vadd.f32 0.0, %v267
  %v269 = vpop.f32.mrb[0].mxu0
  %270 = vdwg.mxu0
  %272 = vrot.lane.b32.xlu0 %v219, 64
  %v273 = vpop.permute.xlu0 %272
  %v275 = vsel %vm223, %v217, 0
  %v278 = vsel %vm223, %v273, 0
  %280 = vmatprep.subr.bf16.mxu0 0
  %281 = vmatpush1.bf16.xpose.msra.mxu0 %v278
  %282 = vmatprep.subr.bf16.mxu0 0
  %283 = vmatpush1.bf16.xpose.msra.mxu0 0
  %284 = vmatprep.subr.bf16.mxu0 0
  %285 = vmatpush1.bf16.xpose.msra.mxu0 0
  %286 = vmatprep.subr.bf16.mxu0 0
  %287 = vmatpush1.bf16.xpose.msra.mxu0 0
  %288 = vmatprep.subr.bf16.mxu0 0
  %289 = vmatpush1.bf16.xpose.msra.mxu0 0
  %290 = vmatprep.subr.bf16.mxu0 0
  %291 = vmatpush1.bf16.xpose.msra.mxu0 0
  %292 = vmatprep.subr.bf16.mxu0 0
  %293 = vmatpush1.bf16.xpose.msra.mxu0 0
  %294 = vmatprep.subr.bf16.mxu0 0
  %295 = vmatpush1.bf16.xpose.msra.mxu0 0
  %296 = vmatprep.subr.bf16.mxu0 0
  %297 = vmatpush1.bf16.xpose.msra.mxu0 0
  %298 = vmatprep.subr.bf16.mxu0 0
  %299 = vmatpush1.bf16.xpose.msra.mxu0 0
  %300 = vmatprep.subr.bf16.mxu0 0
  %301 = vmatpush1.bf16.xpose.msra.mxu0 0
  %302 = vmatprep.subr.bf16.mxu0 0
  %303 = vmatpush1.bf16.xpose.msra.mxu0 0
  %304 = vmatprep.subr.bf16.mxu0 0
  %305 = vmatpush1.bf16.xpose.msra.mxu0 0
  %306 = vmatprep.subr.bf16.mxu0 0
  %307 = vmatpush1.bf16.xpose.msra.mxu0 0
  %308 = vmatprep.subr.bf16.mxu0 0
  %309 = vmatpush1.bf16.xpose.msra.mxu0 0
  %310 = vmatprep.subr.bf16.mxu0 0
  %311 = vmatpush1.bf16.xpose.msra.mxu0 0
  %312 = vmatprep.mubr.bf16.mxu0 0
  %313 = vmatmul.mubr.bf16.gmra.mrb[0].mxu0 %v275
  %v314 = vpop.f32.mrb[0].mxu0
  %v315 = vadd.f32 0.0, %v314
  %v316 = vpop.f32.mrb[0].mxu0
  %v317 = vpop.f32.mrb[0].mxu0
  %v318 = vadd.f32 0.0, %v317
  %v319 = vpop.f32.mrb[0].mxu0
  %320 = vdwg.mxu0
  %vm321 = vcmask 130048
  %v322 = vsel %vm321, %v265, -inf
  %323 = vmax.xlane.f32.xlu0 %v322
  %v324 = vpop.xlane.xlu0 %323
  %v325 = vsel %vm321, %v268, -inf
  %326 = vmax.xlane.f32.xlu0 %v325
  %v327 = vpop.xlane.xlu0 %326
  %v328 = vsel %vm321, %v315, -inf
  %329 = vmax.xlane.f32.xlu0 %v328
  %v330 = vpop.xlane.xlu0 %329
  %v331 = vsel %vm321, %v318, -inf
  %332 = vmax.xlane.f32.xlu0 %v331
  %v333 = vpop.xlane.xlu0 %332
  %v334 = vsub.f32 %v265, %v324
  %v335 = vsub.f32 %v268, %v327
  %v336 = vsub.f32 %v315, %v330
  %v337 = vsub.f32 %v318, %v333
  %v338 = vmul.f32 %v334, 1.442695
  %v339 = vpow.pop %v338
  %v340 = vmul.f32 %v335, 1.442695
  %v341 = vpow.pop %v340
  %v342 = vmul.f32 %v336, 1.442695
  %v343 = vpow.pop %v342
  %v344 = vmul.f32 %v337, 1.442695
  %v345 = vpow.pop %v344
  %v346 = vsel %vm321, %v339, 0.0
  %347 = vadd.xlane.f32.xlu0 %v346
  %v348 = vpop.xlane.xlu0 %347
  %v349 = vsel %vm321, %v341, 0.0
  %350 = vadd.xlane.f32.xlu0 %v349
  %v351 = vpop.xlane.xlu0 %350
  %v352 = vsel %vm321, %v343, 0.0
  %353 = vadd.xlane.f32.xlu0 %v352
  %v354 = vpop.xlane.xlu0 %353
  %v355 = vsel %vm321, %v345, 0.0
  %356 = vadd.xlane.f32.xlu0 %v355
  %v357 = vpop.xlane.xlu0 %356
  %v358 = vrcp.pop %v348
  %v359 = vrcp.pop %v351
  %v360 = vrcp.pop %v354
  %v361 = vrcp.pop %v357
  %v362 = vmul.f32 %v339, %v358
  %v363 = vmul.f32 %v341, %v359
  %v364 = vmul.f32 %v343, %v360
  %v365 = vmul.f32 %v345, %v361
  %v366 = vpack.c.bf16 %v363, %v362
  %v367 = vpack.c.bf16 %v365, %v364
  %v368 = vpack.c.bf16 %v192, %v188
  %v369 = vpack.c.bf16 %v202, %v198
  %v371 = vsel %vm321, %v366, 0
  %373 = vmatprep.subr.bf16.mxu0 0
  %374 = vmatpush1.bf16.msra.mxu0 %v368
  %375 = vmatprep.subr.bf16.mxu0 0
  %376 = vmatpush1.bf16.msra.mxu0 0
  %377 = vmatprep.subr.bf16.mxu0 0
  %378 = vmatpush1.bf16.msra.mxu0 0
  %379 = vmatprep.subr.bf16.mxu0 0
  %380 = vmatpush1.bf16.msra.mxu0 0
  %381 = vmatprep.subr.bf16.mxu0 0
  %382 = vmatpush1.bf16.msra.mxu0 0
  %383 = vmatprep.subr.bf16.mxu0 0
  %384 = vmatpush1.bf16.msra.mxu0 0
  %385 = vmatprep.subr.bf16.mxu0 0
  %386 = vmatpush1.bf16.msra.mxu0 0
  %387 = vmatprep.subr.bf16.mxu0 0
  %388 = vmatpush1.bf16.msra.mxu0 0
  %389 = vmatprep.subr.bf16.mxu0 0
  %390 = vmatpush1.bf16.msra.mxu0 0
  %391 = vmatprep.subr.bf16.mxu0 0
  %392 = vmatpush1.bf16.msra.mxu0 0
  %393 = vmatprep.subr.bf16.mxu0 0
  %394 = vmatpush1.bf16.msra.mxu0 0
  %395 = vmatprep.subr.bf16.mxu0 0
  %396 = vmatpush1.bf16.msra.mxu0 0
  %397 = vmatprep.subr.bf16.mxu0 0
  %398 = vmatpush1.bf16.msra.mxu0 0
  %399 = vmatprep.subr.bf16.mxu0 0
  %400 = vmatpush1.bf16.msra.mxu0 0
  %401 = vmatprep.subr.bf16.mxu0 0
  %402 = vmatpush1.bf16.msra.mxu0 0
  %403 = vmatprep.subr.bf16.mxu0 0
  %404 = vmatpush1.bf16.msra.mxu0 0
  %405 = vmatprep.mubr.bf16.mxu0 0
  %406 = vmatmul.mubr.bf16.gmra.mrb[0].mxu0 %v371
  %v407 = vpop.f32.mrb[0].mxu0
  %v408 = vadd.f32 0.0, %v407
  %v409 = vpop.f32.mrb[0].mxu0
  %v410 = vpop.f32.mrb[0].mxu0
  %v411 = vadd.f32 0.0, %v410
  %v412 = vpop.f32.mrb[0].mxu0
  %413 = vdwg.mxu0
  %v415 = vsel %vm321, %v367, 0
  %417 = vmatprep.subr.bf16.mxu0 0
  %418 = vmatpush1.bf16.msra.mxu0 %v369
  %419 = vmatprep.subr.bf16.mxu0 0
  %420 = vmatpush1.bf16.msra.mxu0 0
  %421 = vmatprep.subr.bf16.mxu0 0
  %422 = vmatpush1.bf16.msra.mxu0 0
  %423 = vmatprep.subr.bf16.mxu0 0
  %424 = vmatpush1.bf16.msra.mxu0 0
  %425 = vmatprep.subr.bf16.mxu0 0
  %426 = vmatpush1.bf16.msra.mxu0 0
  %427 = vmatprep.subr.bf16.mxu0 0
  %428 = vmatpush1.bf16.msra.mxu0 0
  %429 = vmatprep.subr.bf16.mxu0 0
  %430 = vmatpush1.bf16.msra.mxu0 0
  %431 = vmatprep.subr.bf16.mxu0 0
  %432 = vmatpush1.bf16.msra.mxu0 0
  %433 = vmatprep.subr.bf16.mxu0 0
  %434 = vmatpush1.bf16.msra.mxu0 0
  %435 = vmatprep.subr.bf16.mxu0 0
  %436 = vmatpush1.bf16.msra.mxu0 0
  %437 = vmatprep.subr.bf16.mxu0 0
  %438 = vmatpush1.bf16.msra.mxu0 0
  %439 = vmatprep.subr.bf16.mxu0 0
  %440 = vmatpush1.bf16.msra.mxu0 0
  %441 = vmatprep.subr.bf16.mxu0 0
  %442 = vmatpush1.bf16.msra.mxu0 0
  %443 = vmatprep.subr.bf16.mxu0 0
  %444 = vmatpush1.bf16.msra.mxu0 0
  %445 = vmatprep.subr.bf16.mxu0 0
  %446 = vmatpush1.bf16.msra.mxu0 0
  %447 = vmatprep.subr.bf16.mxu0 0
  %448 = vmatpush1.bf16.msra.mxu0 0
  %449 = vmatprep.mubr.bf16.mxu0 0
  %450 = vmatmul.mubr.bf16.gmra.mrb[0].mxu0 %v415
  %v451 = vpop.f32.mrb[0].mxu0
  %v452 = vadd.f32 0.0, %v451
  %v453 = vpop.f32.mrb[0].mxu0
  %v454 = vpop.f32.mrb[0].mxu0
  %v455 = vadd.f32 0.0, %v454
  %v456 = vpop.f32.mrb[0].mxu0
  %457 = vdwg.mxu0
  %v458 = vpack.c.bf16 %v411, %v408
  %v459 = vpack.c.bf16 %v455, %v452
  %v460 = vpack.c.bf16 %v205, %v204
  %v461 = vpack.c.bf16 %v207, %v206
  %463 = vrot.lane.b32.xlu0 %v216, 96
  %v464 = vpop.permute.xlu0 %463
  %465 = vrot.lane.b32.xlu0 %v218, 32
  %v466 = vpop.permute.xlu0 %465
  %v468 = vsel %vm223, %v464, 0
  %v471 = vsel %vm223, %v466, 0
  %473 = vmatprep.subr.bf16.mxu0 0
  %474 = vmatpush1.bf16.xpose.msra.mxu0 %v471
  %475 = vmatprep.subr.bf16.mxu0 0
  %476 = vmatpush1.bf16.xpose.msra.mxu0 0
  %477 = vmatprep.subr.bf16.mxu0 0
  %478 = vmatpush1.bf16.xpose.msra.mxu0 0
  %479 = vmatprep.subr.bf16.mxu0 0
  %480 = vmatpush1.bf16.xpose.msra.mxu0 0
  %481 = vmatprep.subr.bf16.mxu0 0
  %482 = vmatpush1.bf16.xpose.msra.mxu0 0
  %483 = vmatprep.subr.bf16.mxu0 0
  %484 = vmatpush1.bf16.xpose.msra.mxu0 0
  %485 = vmatprep.subr.bf16.mxu0 0
  %486 = vmatpush1.bf16.xpose.msra.mxu0 0
  %487 = vmatprep.subr.bf16.mxu0 0
  %488 = vmatpush1.bf16.xpose.msra.mxu0 0
  %489 = vmatprep.subr.bf16.mxu0 0
  %490 = vmatpush1.bf16.xpose.msra.mxu0 0
  %491 = vmatprep.subr.bf16.mxu0 0
  %492 = vmatpush1.bf16.xpose.msra.mxu0 0
  %493 = vmatprep.subr.bf16.mxu0 0
  %494 = vmatpush1.bf16.xpose.msra.mxu0 0
  %495 = vmatprep.subr.bf16.mxu0 0
  %496 = vmatpush1.bf16.xpose.msra.mxu0 0
  %497 = vmatprep.subr.bf16.mxu0 0
  %498 = vmatpush1.bf16.xpose.msra.mxu0 0
  %499 = vmatprep.subr.bf16.mxu0 0
  %500 = vmatpush1.bf16.xpose.msra.mxu0 0
  %501 = vmatprep.subr.bf16.mxu0 0
  %502 = vmatpush1.bf16.xpose.msra.mxu0 0
  %503 = vmatprep.subr.bf16.mxu0 0
  %504 = vmatpush1.bf16.xpose.msra.mxu0 0
  %505 = vmatprep.mubr.bf16.mxu0 0
  %506 = vmatmul.mubr.bf16.gmra.mrb[0].mxu0 %v468
  %v507 = vpop.f32.mrb[0].mxu0
  %v508 = vadd.f32 0.0, %v507
  %v509 = vpop.f32.mrb[0].mxu0
  %v510 = vpop.f32.mrb[0].mxu0
  %v511 = vadd.f32 0.0, %v510
  %v512 = vpop.f32.mrb[0].mxu0
  %513 = vdwg.mxu0
  %515 = vrot.lane.b32.xlu0 %v217, 96
  %v516 = vpop.permute.xlu0 %515
  %517 = vrot.lane.b32.xlu0 %v219, 32
  %v518 = vpop.permute.xlu0 %517
  %v520 = vsel %vm223, %v516, 0
  %v523 = vsel %vm223, %v518, 0
  %525 = vmatprep.subr.bf16.mxu0 0
  %526 = vmatpush1.bf16.xpose.msra.mxu0 %v523
  %527 = vmatprep.subr.bf16.mxu0 0
  %528 = vmatpush1.bf16.xpose.msra.mxu0 0
  %529 = vmatprep.subr.bf16.mxu0 0
  %530 = vmatpush1.bf16.xpose.msra.mxu0 0
  %531 = vmatprep.subr.bf16.mxu0 0
  %532 = vmatpush1.bf16.xpose.msra.mxu0 0
  %533 = vmatprep.subr.bf16.mxu0 0
  %534 = vmatpush1.bf16.xpose.msra.mxu0 0
  %535 = vmatprep.subr.bf16.mxu0 0
  %536 = vmatpush1.bf16.xpose.msra.mxu0 0
  %537 = vmatprep.subr.bf16.mxu0 0
  %538 = vmatpush1.bf16.xpose.msra.mxu0 0
  %539 = vmatprep.subr.bf16.mxu0 0
  %540 = vmatpush1.bf16.xpose.msra.mxu0 0
  %541 = vmatprep.subr.bf16.mxu0 0
  %542 = vmatpush1.bf16.xpose.msra.mxu0 0
  %543 = vmatprep.subr.bf16.mxu0 0
  %544 = vmatpush1.bf16.xpose.msra.mxu0 0
  %545 = vmatprep.subr.bf16.mxu0 0
  %546 = vmatpush1.bf16.xpose.msra.mxu0 0
  %547 = vmatprep.subr.bf16.mxu0 0
  %548 = vmatpush1.bf16.xpose.msra.mxu0 0
  %549 = vmatprep.subr.bf16.mxu0 0
  %550 = vmatpush1.bf16.xpose.msra.mxu0 0
  %551 = vmatprep.subr.bf16.mxu0 0
  %552 = vmatpush1.bf16.xpose.msra.mxu0 0
  %553 = vmatprep.subr.bf16.mxu0 0
  %554 = vmatpush1.bf16.xpose.msra.mxu0 0
  %555 = vmatprep.subr.bf16.mxu0 0
  %556 = vmatpush1.bf16.xpose.msra.mxu0 0
  %557 = vmatprep.mubr.bf16.mxu0 0
  %558 = vmatmul.mubr.bf16.gmra.mrb[0].mxu0 %v520
  %v559 = vpop.f32.mrb[0].mxu0
  %v560 = vadd.f32 0.0, %v559
  %v561 = vpop.f32.mrb[0].mxu0
  %v562 = vpop.f32.mrb[0].mxu0
  %v563 = vadd.f32 0.0, %v562
  %v564 = vpop.f32.mrb[0].mxu0
  %565 = vdwg.mxu0
  %v566 = vsel %vm321, %v508, -inf
  %567 = vmax.xlane.f32.xlu0 %v566
  %v568 = vpop.xlane.xlu0 %567
  %v569 = vsel %vm321, %v511, -inf
  %570 = vmax.xlane.f32.xlu0 %v569
  %v571 = vpop.xlane.xlu0 %570
  %v572 = vsel %vm321, %v560, -inf
  %573 = vmax.xlane.f32.xlu0 %v572
  %v574 = vpop.xlane.xlu0 %573
  %v575 = vsel %vm321, %v563, -inf
  %576 = vmax.xlane.f32.xlu0 %v575
  %v577 = vpop.xlane.xlu0 %576
  %v578 = vsub.f32 %v508, %v568
  %v579 = vsub.f32 %v511, %v571
  %v580 = vsub.f32 %v560, %v574
  %v581 = vsub.f32 %v563, %v577
  %v582 = vmul.f32 %v578, 1.442695
  %v583 = vpow.pop %v582
  %v584 = vmul.f32 %v579, 1.442695
  %v585 = vpow.pop %v584
  %v586 = vmul.f32 %v580, 1.442695
  %v587 = vpow.pop %v586
  %v588 = vmul.f32 %v581, 1.442695
  %v589 = vpow.pop %v588
  %v590 = vsel %vm321, %v583, 0.0
  %591 = vadd.xlane.f32.xlu0 %v590
  %v592 = vpop.xlane.xlu0 %591
  %v593 = vsel %vm321, %v585, 0.0
  %594 = vadd.xlane.f32.xlu0 %v593
  %v595 = vpop.xlane.xlu0 %594
  %v596 = vsel %vm321, %v587, 0.0
  %597 = vadd.xlane.f32.xlu0 %v596
  %v598 = vpop.xlane.xlu0 %597
  %v599 = vsel %vm321, %v589, 0.0
  %600 = vadd.xlane.f32.xlu0 %v599
  %v601 = vpop.xlane.xlu0 %600
  %v602 = vrcp.pop %v592
  %v603 = vrcp.pop %v595
  %v604 = vrcp.pop %v598
  %v605 = vrcp.pop %v601
  %v606 = vmul.f32 %v583, %v602
  %v607 = vmul.f32 %v585, %v603
  %v608 = vmul.f32 %v587, %v604
  %v609 = vmul.f32 %v589, %v605
  %v610 = vpack.c.bf16 %v607, %v606
  %v611 = vpack.c.bf16 %v609, %v608
  %613 = vrot.lane.b32.xlu0 %v368, 96
  %v614 = vpop.permute.xlu0 %613
  %v617 = vsel %vm321, %v610, 0
  %619 = vmatprep.subr.bf16.mxu0 0
  %620 = vmatpush1.bf16.msra.mxu0 %v614
  %621 = vmatprep.subr.bf16.mxu0 0
  %622 = vmatpush1.bf16.msra.mxu0 0
  %623 = vmatprep.subr.bf16.mxu0 0
  %624 = vmatpush1.bf16.msra.mxu0 0
  %625 = vmatprep.subr.bf16.mxu0 0
  %626 = vmatpush1.bf16.msra.mxu0 0
  %627 = vmatprep.subr.bf16.mxu0 0
  %628 = vmatpush1.bf16.msra.mxu0 0
  %629 = vmatprep.subr.bf16.mxu0 0
  %630 = vmatpush1.bf16.msra.mxu0 0
  %631 = vmatprep.subr.bf16.mxu0 0
  %632 = vmatpush1.bf16.msra.mxu0 0
  %633 = vmatprep.subr.bf16.mxu0 0
  %634 = vmatpush1.bf16.msra.mxu0 0
  %635 = vmatprep.subr.bf16.mxu0 0
  %636 = vmatpush1.bf16.msra.mxu0 0
  %637 = vmatprep.subr.bf16.mxu0 0
  %638 = vmatpush1.bf16.msra.mxu0 0
  %639 = vmatprep.subr.bf16.mxu0 0
  %640 = vmatpush1.bf16.msra.mxu0 0
  %641 = vmatprep.subr.bf16.mxu0 0
  %642 = vmatpush1.bf16.msra.mxu0 0
  %643 = vmatprep.subr.bf16.mxu0 0
  %644 = vmatpush1.bf16.msra.mxu0 0
  %645 = vmatprep.subr.bf16.mxu0 0
  %646 = vmatpush1.bf16.msra.mxu0 0
  %647 = vmatprep.subr.bf16.mxu0 0
  %648 = vmatpush1.bf16.msra.mxu0 0
  %649 = vmatprep.subr.bf16.mxu0 0
  %650 = vmatpush1.bf16.msra.mxu0 0
  %651 = vmatprep.mubr.bf16.mxu0 0
  %652 = vmatmul.mubr.bf16.gmra.mrb[0].mxu0 %v617
  %v653 = vpop.f32.mrb[0].mxu0
  %v654 = vadd.f32 0.0, %v653
  %v655 = vpop.f32.mrb[0].mxu0
  %v656 = vpop.f32.mrb[0].mxu0
  %v657 = vadd.f32 0.0, %v656
  %v658 = vpop.f32.mrb[0].mxu0
  %659 = vdwg.mxu0
  %661 = vrot.lane.b32.xlu0 %v369, 96
  %v662 = vpop.permute.xlu0 %661
  %v665 = vsel %vm321, %v611, 0
  %667 = vmatprep.subr.bf16.mxu0 0
  %668 = vmatpush1.bf16.msra.mxu0 %v662
  %669 = vmatprep.subr.bf16.mxu0 0
  %670 = vmatpush1.bf16.msra.mxu0 0
  %671 = vmatprep.subr.bf16.mxu0 0
  %672 = vmatpush1.bf16.msra.mxu0 0
  %673 = vmatprep.subr.bf16.mxu0 0
  %674 = vmatpush1.bf16.msra.mxu0 0
  %675 = vmatprep.subr.bf16.mxu0 0
  %676 = vmatpush1.bf16.msra.mxu0 0
  %677 = vmatprep.subr.bf16.mxu0 0
  %678 = vmatpush1.bf16.msra.mxu0 0
  %679 = vmatprep.subr.bf16.mxu0 0
  %680 = vmatpush1.bf16.msra.mxu0 0
  %681 = vmatprep.subr.bf16.mxu0 0
  %682 = vmatpush1.bf16.msra.mxu0 0
  %683 = vmatprep.subr.bf16.mxu0 0
  %684 = vmatpush1.bf16.msra.mxu0 0
  %685 = vmatprep.subr.bf16.mxu0 0
  %686 = vmatpush1.bf16.msra.mxu0 0
  %687 = vmatprep.subr.bf16.mxu0 0
  %688 = vmatpush1.bf16.msra.mxu0 0
  %689 = vmatprep.subr.bf16.mxu0 0
  %690 = vmatpush1.bf16.msra.mxu0 0
  %691 = vmatprep.subr.bf16.mxu0 0
  %692 = vmatpush1.bf16.msra.mxu0 0
  %693 = vmatprep.subr.bf16.mxu0 0
  %694 = vmatpush1.bf16.msra.mxu0 0
  %695 = vmatprep.subr.bf16.mxu0 0
  %696 = vmatpush1.bf16.msra.mxu0 0
  %697 = vmatprep.subr.bf16.mxu0 0
  %698 = vmatpush1.bf16.msra.mxu0 0
  %699 = vmatprep.mubr.bf16.mxu0 0
  %700 = vmatmul.mubr.bf16.gmra.mrb[0].mxu0 %v665
  %v701 = vpop.f32.mrb[0].mxu0
  %v702 = vadd.f32 0.0, %v701
  %v703 = vpop.f32.mrb[0].mxu0
  %v704 = vpop.f32.mrb[0].mxu0
  %v705 = vadd.f32 0.0, %v704
  %v706 = vpop.f32.mrb[0].mxu0
  %707 = vdwg.mxu0
  %v708 = vpack.c.bf16 %v657, %v654
  %v709 = vpack.c.bf16 %v705, %v702
  %v710 = vpack.c.bf16 %v209, %v208
  %v711 = vpack.c.bf16 %v211, %v210
  %v713 = vsel %vm223, %v708, 0
  %v716 = vsel %vm223, %v709, 0
  %718 = vmatprep.subr.bf16.mxu0 0
  %719 = vmatpush1.bf16.msra.mxu0 %v710
  %720 = vmatprep.subr.bf16.mxu0 0
  %721 = vmatpush1.bf16.msra.mxu0 %v711
  %722 = vmatprep.subr.bf16.mxu0 0
  %723 = vmatpush1.bf16.msra.mxu0 0
  %724 = vmatprep.subr.bf16.mxu0 0
  %725 = vmatpush1.bf16.msra.mxu0 0
  %726 = vmatprep.subr.bf16.mxu0 0
  %727 = vmatpush1.bf16.msra.mxu0 0
  %728 = vmatprep.subr.bf16.mxu0 0
  %729 = vmatpush1.bf16.msra.mxu0 0
  %730 = vmatprep.subr.bf16.mxu0 0
  %731 = vmatpush1.bf16.msra.mxu0 0
  %732 = vmatprep.subr.bf16.mxu0 0
  %733 = vmatpush1.bf16.msra.mxu0 0
  %734 = vmatprep.subr.bf16.mxu0 0
  %735 = vmatpush1.bf16.msra.mxu0 0
  %736 = vmatprep.subr.bf16.mxu0 0
  %737 = vmatpush1.bf16.msra.mxu0 0
  %738 = vmatprep.subr.bf16.mxu0 0
  %739 = vmatpush1.bf16.msra.mxu0 0
  %740 = vmatprep.subr.bf16.mxu0 0
  %741 = vmatpush1.bf16.msra.mxu0 0
  %742 = vmatprep.subr.bf16.mxu0 0
  %743 = vmatpush1.bf16.msra.mxu0 0
  %744 = vmatprep.subr.bf16.mxu0 0
  %745 = vmatpush1.bf16.msra.mxu0 0
  %746 = vmatprep.subr.bf16.mxu0 0
  %747 = vmatpush1.bf16.msra.mxu0 0
  %748 = vmatprep.subr.bf16.mxu0 0
  %749 = vmatpush1.bf16.msra.mxu0 0
  %750 = vmatprep.mubr.bf16.mxu0 0
  %751 = vmatmul.mubr.bf16.gmra.mrb[0].mxu0 %v713
  %v752 = vpop.f32.mrb[0].mxu0
  %v753 = vadd.f32 0.0, %v752
  %v754 = vpop.f32.mrb[0].mxu0
  %v755 = vpop.f32.mrb[0].mxu0
  %v756 = vadd.f32 0.0, %v755
  %v757 = vpop.f32.mrb[0].mxu0
  %758 = vmatprep.mubr.bf16.mxu0 0
  %759 = vmatmul.mubr.bf16.gmra.mrb[0].mxu0 %v716
  %v760 = vpop.f32.mrb[0].mxu0
  %v761 = vadd.f32 0.0, %v760
  %v762 = vpop.f32.mrb[0].mxu0
  %v763 = vpop.f32.mrb[0].mxu0
  %v764 = vadd.f32 0.0, %v763
  %v765 = vpop.f32.mrb[0].mxu0
  %766 = vdwg.mxu0
  %v768 = vsel %vm223, %v458, 0
  %v771 = vsel %vm223, %v459, 0
  %773 = vmatprep.subr.bf16.mxu0 0
  %774 = vmatpush1.bf16.msra.mxu0 %v460
  %775 = vmatprep.subr.bf16.mxu0 0
  %776 = vmatpush1.bf16.msra.mxu0 %v461
  %777 = vmatprep.subr.bf16.mxu0 0
  %778 = vmatpush1.bf16.msra.mxu0 0
  %779 = vmatprep.subr.bf16.mxu0 0
  %780 = vmatpush1.bf16.msra.mxu0 0
  %781 = vmatprep.subr.bf16.mxu0 0
  %782 = vmatpush1.bf16.msra.mxu0 0
  %783 = vmatprep.subr.bf16.mxu0 0
  %784 = vmatpush1.bf16.msra.mxu0 0
  %785 = vmatprep.subr.bf16.mxu0 0
  %786 = vmatpush1.bf16.msra.mxu0 0
  %787 = vmatprep.subr.bf16.mxu0 0
  %788 = vmatpush1.bf16.msra.mxu0 0
  %789 = vmatprep.subr.bf16.mxu0 0
  %790 = vmatpush1.bf16.msra.mxu0 0
  %791 = vmatprep.subr.bf16.mxu0 0
  %792 = vmatpush1.bf16.msra.mxu0 0
  %793 = vmatprep.subr.bf16.mxu0 0
  %794 = vmatpush1.bf16.msra.mxu0 0
  %795 = vmatprep.subr.bf16.mxu0 0
  %796 = vmatpush1.bf16.msra.mxu0 0
  %797 = vmatprep.subr.bf16.mxu0 0
  %798 = vmatpush1.bf16.msra.mxu0 0
  %799 = vmatprep.subr.bf16.mxu0 0
  %800 = vmatpush1.bf16.msra.mxu0 0
  %801 = vmatprep.subr.bf16.mxu0 0
  %802 = vmatpush1.bf16.msra.mxu0 0
  %803 = vmatprep.subr.bf16.mxu0 0
  %804 = vmatpush1.bf16.msra.mxu0 0
  %805 = vmatprep.mubr.bf16.mxu0 0
  %806 = vmatmul.mubr.bf16.gmra.mrb[0].mxu0 %v768
  %v807 = vpop.f32.mrb[0].mxu0
  %v808 = vadd.f32 %v753, %v807
  %v809 = vpop.f32.mrb[0].mxu0
  %v810 = vpop.f32.mrb[0].mxu0
  %v811 = vadd.f32 %v756, %v810
  %v812 = vpop.f32.mrb[0].mxu0
  %813 = vmatprep.mubr.bf16.mxu0 0
  %814 = vmatmul.mubr.bf16.gmra.mrb[0].mxu0 %v771
  %v815 = vpop.f32.mrb[0].mxu0
  %v816 = vadd.f32 %v761, %v815
  %v817 = vpop.f32.mrb[0].mxu0
  %v818 = vpop.f32.mrb[0].mxu0
  %v819 = vadd.f32 %v764, %v818
  %v820 = vpop.f32.mrb[0].mxu0
  %821 = vdwg.mxu0
  %v822 = vadd.f32 %v27, %v808
  %v823 = vadd.f32 %v28, %v811
  %v824 = vadd.f32 %v29, %v816
  %v825 = vadd.f32 %v30, %v819
  %v826 = vld [vmem:[%s6] sm:$0x1]
  %v828 = vlaneseq
  %v829 = vshrl.u32 %v828, 7
  %v830 = vsub.s32 0, %v829
  %v831 = vrot.slane %v826, %v830
  %v833 = vadd.f32 %v822, %v831
  %v834 = vadd.f32 %v823, %v831
  %v835 = vadd.f32 %v824, %v831
  %v836 = vadd.f32 %v825, %v831
  %837 = vst.msk [vmem:[%s7] sm:$0xff] %vm33, %v833
  %838 = vst.msk [vmem:[%s7 + $0x8] sm:$0xff] %vm33, %v834
  %839 = vst.msk [vmem:[%s7 + $0x10] sm:$0xff] %vm33, %v835
  %840 = vst.msk [vmem:[%s7 + $0x18] sm:$0xff] %vm33, %v836
  // Predicated region
  $region30: #{image_encoder.7} parent=0 // pred_check
    _
  $region31: #{image_encoder.7} parent=0 // pred_check_branch
    %842 = sbr.rel (0) target = $region33
  $region32: #{image_encoder.7} parent=0 // pred_region
    _
  $region33: #{image_encoder.7} parent=0 // pred_fallthru
    _
  // Predicated region
  $region34: #{image_encoder.7} parent=0 // pred_check
    _
  $region35: #{image_encoder.7} parent=0 // pred_check_branch
    %844 = sbr.rel (0) target = $region37
  $region36: #{image_encoder.7} parent=0 // pred_region
    _
  $region37: #{image_encoder.7} parent=0 // pred_fallthru
    _

// kernel: image_encoder.8
$region0: #{image_encoder.8}
  #allocation0 [shape = 'u32[]', space=smem, size = 0x4, offset = 0x4, fixed_abs, tag = 'smem constant byte address 0x4 - core index']
  #allocation1 [shape = 'u32[144,128]{1,0:T(1,128)}', space=vmem, size = 0x12000, scoped, tag = 'internal scratch']
  %s0 = inlined_call_operand.vmem [shape: f32[2,16,64], index: 0, kind: input, shape index: {}]
  %s1 = inlined_call_operand.vmem [shape: f32[1,64], index: 1, kind: input, shape index: {}]
  %s2 = inlined_call_operand.vmem [shape: f32[1,64], index: 2, kind: input, shape index: {}]
  %s3 = inlined_call_operand.vmem [shape: f32[64,256], index: 3, kind: input, shape index: {}]
  %s4 = inlined_call_operand.vmem [shape: f32[1,256], index: 4, kind: input, shape index: {}]
  %s5 = inlined_call_operand.vmem [shape: f32[256,64], index: 5, kind: input, shape index: {}]
  %s6 = inlined_call_operand.vmem [shape: f32[1,64], index: 6, kind: input, shape index: {}]
  %s7 = inlined_call_operand.vmem [shape: f32[2,16,64], index: 7, kind: output, shape index: {}]
  %s8 = sld [smem:[#allocation0]]
  $region38: #{image_encoder.8} parent=0
    _
  %s10 = ssub.s32 1, %s8
  %s11 = scalar_select 0, %s10, %s8
  // Predicated region
  $region2: #{image_encoder.8} parent=0 // pred_check
    _
  $region3: #{image_encoder.8} parent=0 // pred_check_branch
    %13 = sbr.rel (0) target = $region5
  $region4: #{image_encoder.8} parent=0 // pred_region
    _
  $region5: #{image_encoder.8} parent=0 // pred_fallthru
    _
  // Predicated region
  $region6: #{image_encoder.8} parent=0 // pred_check
    _
  $region7: #{image_encoder.8} parent=0 // pred_check_branch
    %15 = sbr.rel (0) target = $region9
  $region8: #{image_encoder.8} parent=0 // pred_region
    _
  $region9: #{image_encoder.8} parent=0 // pred_fallthru
    _
  // Predicated region
  $region10: #{image_encoder.8} parent=0 // pred_check
    _
  $region11: #{image_encoder.8} parent=0 // pred_check_branch
    %17 = sbr.rel (0) target = $region13
  $region12: #{image_encoder.8} parent=0 // pred_region
    _
  $region13: #{image_encoder.8} parent=0 // pred_fallthru
    _
  // Predicated region
  $region14: #{image_encoder.8} parent=0 // pred_check
    _
  $region15: #{image_encoder.8} parent=0 // pred_check_branch
    %19 = sbr.rel (0) target = $region17
  $region16: #{image_encoder.8} parent=0 // pred_region
    _
  $region17: #{image_encoder.8} parent=0 // pred_fallthru
    _
  // Predicated region
  $region18: #{image_encoder.8} parent=0 // pred_check
    _
  $region19: #{image_encoder.8} parent=0 // pred_check_branch
    %21 = sbr.rel (0) target = $region21
  $region20: #{image_encoder.8} parent=0 // pred_region
    _
  $region21: #{image_encoder.8} parent=0 // pred_fallthru
    _
  // Predicated region
  $region22: #{image_encoder.8} parent=0 // pred_check
    _
  $region23: #{image_encoder.8} parent=0 // pred_check_branch
    %23 = sbr.rel (0) target = $region25
  $region24: #{image_encoder.8} parent=0 // pred_region
    _
  $region25: #{image_encoder.8} parent=0 // pred_fallthru
    _
  // Predicated region
  $region26: #{image_encoder.8} parent=0 // pred_check
    _
  $region27: #{image_encoder.8} parent=0 // pred_check_branch
    %25 = sbr.rel (0) target = $region29
  $region28: #{image_encoder.8} parent=0 // pred_region
    _
  $region29: #{image_encoder.8} parent=0 // pred_fallthru
    _
  %v27 = vld [vmem:[%s0] sm:$0xff]
  %v28 = vld [vmem:[%s0 + $0x8] sm:$0xff]
  %v29 = vld [vmem:[%s0 + $0x10] sm:$0xff]
  %v30 = vld [vmem:[%s0 + $0x18] sm:$0xff]
  %v31 = vld [vmem:[%s1] sm:$0x1]
  %v32 = vld [vmem:[%s2] sm:$0x1]
  %vm33 = vcmask 523264
  %v34 = vsel %vm33, %v27, 0.0
  %35 = vadd.xlane.f32.xlu0 %v34
  %v36 = vpop.xlane.xlu0 %35
  %v37 = vsel %vm33, %v28, 0.0
  %38 = vadd.xlane.f32.xlu0 %v37
  %v39 = vpop.xlane.xlu0 %38
  %v40 = vsel %vm33, %v29, 0.0
  %41 = vadd.xlane.f32.xlu0 %v40
  %v42 = vpop.xlane.xlu0 %41
  %v43 = vsel %vm33, %v30, 0.0
  %44 = vadd.xlane.f32.xlu0 %v43
  %v45 = vpop.xlane.xlu0 %44
  %v46 = vrcp.pop 64.0
  %v47 = vmul.f32 %v36, %v46
  %v48 = vmul.f32 %v39, %v46
  %v49 = vmul.f32 %v42, %v46
  %v50 = vmul.f32 %v45, %v46
  %v51 = vsub.f32 %v27, %v47
  %v52 = vsub.f32 %v28, %v48
  %v53 = vsub.f32 %v29, %v49
  %v54 = vsub.f32 %v30, %v50
  %v55 = vmul.f32 %v51, %v51
  %v56 = vmul.f32 %v52, %v52
  %v57 = vmul.f32 %v53, %v53
  %v58 = vmul.f32 %v54, %v54
  %v59 = vsel %vm33, %v55, 0.0
  %60 = vadd.xlane.f32.xlu0 %v59
  %v61 = vpop.xlane.xlu0 %60
  %v62 = vsel %vm33, %v56, 0.0
  %63 = vadd.xlane.f32.xlu0 %v62
  %v64 = vpop.xlane.xlu0 %63
  %v65 = vsel %vm33, %v57, 0.0
  %66 = vadd.xlane.f32.xlu0 %v65
  %v67 = vpop.xlane.xlu0 %66
  %v68 = vsel %vm33, %v58, 0.0
  %69 = vadd.xlane.f32.xlu0 %v68
  %v70 = vpop.xlane.xlu0 %69
  %v71 = vmul.f32 %v61, %v46
  %v72 = vmul.f32 %v64, %v46
  %v73 = vmul.f32 %v67, %v46
  %v74 = vmul.f32 %v70, %v46
  %v75 = vadd.f32 %v71, 1e-06
  %v76 = vadd.f32 %v72, 1e-06
  %v77 = vadd.f32 %v73, 1e-06
  %v78 = vadd.f32 %v74, 1e-06
  %v79 = vrsqrt.pop %v75
  %v80 = vrsqrt.pop %v76
  %v81 = vrsqrt.pop %v77
  %v82 = vrsqrt.pop %v78
  %v83 = vmul.f32 %v51, %v79
  %v84 = vmul.f32 %v52, %v80
  %v85 = vmul.f32 %v53, %v81
  %v86 = vmul.f32 %v54, %v82
  %v88 = vlaneseq
  %v89 = vshrl.u32 %v88, 7
  %v90 = vsub.s32 0, %v89
  %v91 = vrot.slane %v31, %v90
  %v93 = vmul.f32 %v83, %v91
  %v94 = vmul.f32 %v84, %v91
  %v95 = vmul.f32 %v85, %v91
  %v96 = vmul.f32 %v86, %v91
  %v98 = vlaneseq
  %v99 = vshrl.u32 %v98, 7
  %v100 = vsub.s32 0, %v99
  %v101 = vrot.slane %v32, %v100
  %v103 = vadd.f32 %v93, %v101
  %v104 = vadd.f32 %v94, %v101
  %v105 = vadd.f32 %v95, %v101
  %v106 = vadd.f32 %v96, %v101
  %v107 = vld [vmem:[%s3] sm:$0xff]
  %v108 = vld [vmem:[%s3 + $0x8] sm:$0xff]
  %v109 = vld [vmem:[%s3 + $0x10] sm:$0xff]
  %v110 = vld [vmem:[%s3 + $0x18] sm:$0xff]
  %v111 = vld [vmem:[%s3 + $0x20] sm:$0xff]
  %v112 = vld [vmem:[%s3 + $0x28] sm:$0xff]
  %v113 = vld [vmem:[%s3 + $0x30] sm:$0xff]
  %v114 = vld [vmem:[%s3 + $0x38] sm:$0xff]
  %v115 = vld [vmem:[%s3 + $0x40] sm:$0xff]
  %v116 = vld [vmem:[%s3 + $0x48] sm:$0xff]
  %v117 = vld [vmem:[%s3 + $0x50] sm:$0xff]
  %v118 = vld [vmem:[%s3 + $0x58] sm:$0xff]
  %v119 = vld [vmem:[%s3 + $0x60] sm:$0xff]
  %v120 = vld [vmem:[%s3 + $0x68] sm:$0xff]
  %v121 = vld [vmem:[%s3 + $0x70] sm:$0xff]
  %v122 = vld [vmem:[%s3 + $0x78] sm:$0xff]
  %v123 = vpack.c.bf16 %v104, %v103
  %v124 = vpack.c.bf16 %v106, %v105
  %v125 = vpack.c.bf16 %v109, %v107
  %v126 = vpack.c.bf16 %v110, %v108
  %v127 = vpack.c.bf16 %v113, %v111
  %v128 = vpack.c.bf16 %v114, %v112
  %v129 = vpack.c.bf16 %v117, %v115
  %v130 = vpack.c.bf16 %v118, %v116
  %v131 = vpack.c.bf16 %v121, %v119
  %v132 = vpack.c.bf16 %v122, %v120
  %v133 = vld [vmem:[%s4] sm:$0x3]
  %v135 = vlaneseq
  %v136 = vshrl.u32 %v135, 7
  %v137 = vsub.s32 0, %v136
  %v138 = vrot.slane %v133, %v137
  %v139 = vlaneseq
  %v140 = vshrl.u32 %v139, 7
  %v141 = vsub.s32 1, %v140
  %v142 = vrot.slane %v133, %v141
  %v146 = vsel %vm33, %v123, 0
  %v149 = vsel %vm33, %v124, 0
  %151 = vmatprep.subr.bf16.mxu0 %v126
  %152 = vmatpush1.bf16.msra.mxu0 %v125
  %153 = vmatprep.subr.bf16.mxu0 %v128
  %154 = vmatpush1.bf16.msra.mxu0 %v127
  %155 = vmatprep.subr.bf16.mxu0 %v130
  %156 = vmatpush1.bf16.msra.mxu0 %v129
  %157 = vmatprep.subr.bf16.mxu0 %v132
  %158 = vmatpush1.bf16.msra.mxu0 %v131
  %159 = vmatprep.subr.bf16.mxu0 0
  %160 = vmatpush1.bf16.msra.mxu0 0
  %161 = vmatprep.subr.bf16.mxu0 0
  %162 = vmatpush1.bf16.msra.mxu0 0
  %163 = vmatprep.subr.bf16.mxu0 0
  %164 = vmatpush1.bf16.msra.mxu0 0
  %165 = vmatprep.subr.bf16.mxu0 0
  %166 = vmatpush1.bf16.msra.mxu0 0
  %167 = vmatprep.subr.bf16.mxu0 0
  %168 = vmatpush1.bf16.msra.mxu0 0
  %169 = vmatprep.subr.bf16.mxu0 0
  %170 = vmatpush1.bf16.msra.mxu0 0
  %171 = vmatprep.subr.bf16.mxu0 0
  %172 = vmatpush1.bf16.msra.mxu0 0
  %173 = vmatprep.subr.bf16.mxu0 0
  %174 = vmatpush1.bf16.msra.mxu0 0
  %175 = vmatprep.subr.bf16.mxu0 0
  %176 = vmatpush1.bf16.msra.mxu0 0
  %177 = vmatprep.subr.bf16.mxu0 0
  %178 = vmatpush1.bf16.msra.mxu0 0
  %179 = vmatprep.subr.bf16.mxu0 0
  %180 = vmatpush1.bf16.msra.mxu0 0
  %181 = vmatprep.subr.bf16.mxu0 0
  %182 = vmatpush1.bf16.msra.mxu0 0
  %183 = vmatprep.mubr.bf16.mxu0 0
  %184 = vmatmul.mubr.bf16.gmra.mrb[0].mxu0 %v146
  %v185 = vpop.f32.mrb[0].mxu0
  %v186 = vadd.f32 %v138, %v185
  %v187 = vpop.f32.mrb[0].mxu0
  %v188 = vadd.f32 %v142, %v187
  %v189 = vpop.f32.mrb[0].mxu0
  %v190 = vadd.f32 %v138, %v189
  %v191 = vpop.f32.mrb[0].mxu0
  %v192 = vadd.f32 %v142, %v191
  %193 = vmatprep.mubr.bf16.mxu0 0
  %194 = vmatmul.mubr.bf16.gmra.mrb[0].mxu0 %v149
  %v195 = vpop.f32.mrb[0].mxu0
  %v196 = vadd.f32 %v138, %v195
  %v197 = vpop.f32.mrb[0].mxu0
  %v198 = vadd.f32 %v142, %v197
  %v199 = vpop.f32.mrb[0].mxu0
  %v200 = vadd.f32 %v138, %v199
  %v201 = vpop.f32.mrb[0].mxu0
  %v202 = vadd.f32 %v142, %v201
  %203 = vdwg.mxu0
  %v204 = vmul.f32 %v186, 0.5
  %v205 = vmul.f32 %v188, 0.5
  %v206 = vmul.f32 %v190, 0.5
  %v207 = vmul.f32 %v192, 0.5
  %v208 = vmul.f32 %v196, 0.5
  %v209 = vmul.f32 %v198, 0.5
  %v210 = vmul.f32 %v200, 0.5
  %v211 = vmul.f32 %v202, 0.5
  %v212 = vmul.f32 %v186, 0.044715
  %v213 = vmul.f32 %v188, 0.044715
  %v214 = vmul.f32 %v190, 0.044715
  %v215 = vmul.f32 %v192, 0.044715
  %v216 = vmul.f32 %v196, 0.044715
  %v217 = vmul.f32 %v198, 0.044715
  %v218 = vmul.f32 %v200, 0.044715
  %v219 = vmul.f32 %v202, 0.044715
  %v220 = vmul.f32 %v212, %v186
  %v221 = vmul.f32 %v213, %v188
  %v222 = vmul.f32 %v214, %v190
  %v223 = vmul.f32 %v215, %v192
  %v224 = vmul.f32 %v216, %v196
  %v225 = vmul.f32 %v217, %v198
  %v226 = vmul.f32 %v218, %v200
  %v227 = vmul.f32 %v219, %v202
  %v228 = vmul.f32 %v220, %v186
  %v229 = vmul.f32 %v221, %v188
  %v230 = vmul.f32 %v222, %v190
  %v231 = vmul.f32 %v223, %v192
  %v232 = vmul.f32 %v224, %v196
  %v233 = vmul.f32 %v225, %v198
  %v234 = vmul.f32 %v226, %v200
  %v235 = vmul.f32 %v227, %v202
  %v236 = vadd.f32 %v186, %v228
  %v237 = vadd.f32 %v188, %v229
  %v238 = vadd.f32 %v190, %v230
  %v239 = vadd.f32 %v192, %v231
  %v240 = vadd.f32 %v196, %v232
  %v241 = vadd.f32 %v198, %v233
  %v242 = vadd.f32 %v200, %v234
  %v243 = vadd.f32 %v202, %v235
  %v244 = vmul.f32 %v236, 0.7978846
  %v245 = vmul.f32 %v237, 0.7978846
  %v246 = vmul.f32 %v238, 0.7978846
  %v247 = vmul.f32 %v239, 0.7978846
  %v248 = vmul.f32 %v240, 0.7978846
  %v249 = vmul.f32 %v241, 0.7978846
  %v250 = vmul.f32 %v242, 0.7978846
  %v251 = vmul.f32 %v243, 0.7978846
  %v252 = vtanh.pop %v244
  %v253 = vtanh.pop %v245
  %v254 = vtanh.pop %v246
  %v255 = vtanh.pop %v247
  %v256 = vtanh.pop %v248
  %v257 = vtanh.pop %v249
  %v258 = vtanh.pop %v250
  %v259 = vtanh.pop %v251
  %v260 = vadd.f32 %v252, 1.0
  %v261 = vadd.f32 %v253, 1.0
  %v262 = vadd.f32 %v254, 1.0
  %v263 = vadd.f32 %v255, 1.0
  %v264 = vadd.f32 %v256, 1.0
  %v265 = vadd.f32 %v257, 1.0
  %v266 = vadd.f32 %v258, 1.0
  %v267 = vadd.f32 %v259, 1.0
  %v268 = vmul.f32 %v204, %v260
  %v269 = vmul.f32 %v205, %v261
  %v270 = vmul.f32 %v206, %v262
  %v271 = vmul.f32 %v207, %v263
  %v272 = vmul.f32 %v208, %v264
  %v273 = vmul.f32 %v209, %v265
  %v274 = vmul.f32 %v210, %v266
  %v275 = vmul.f32 %v211, %v267
  %v276 = vld [vmem:[%s5] sm:$0xff]
  %v277 = vld [vmem:[%s5 + $0x8] sm:$0xff]
  %v278 = vld [vmem:[%s5 + $0x10] sm:$0xff]
  %v279 = vld [vmem:[%s5 + $0x18] sm:$0xff]
  %v280 = vld [vmem:[%s5 + $0x20] sm:$0xff]
  %v281 = vld [vmem:[%s5 + $0x28] sm:$0xff]
  %v282 = vld [vmem:[%s5 + $0x30] sm:$0xff]
  %v283 = vld [vmem:[%s5 + $0x38] sm:$0xff]
  %v284 = vld [vmem:[%s5 + $0x40] sm:$0xff]
  %v285 = vld [vmem:[%s5 + $0x48] sm:$0xff]
  %v286 = vld [vmem:[%s5 + $0x50] sm:$0xff]
  %v287 = vld [vmem:[%s5 + $0x58] sm:$0xff]
  %v288 = vld [vmem:[%s5 + $0x60] sm:$0xff]
  %v289 = vld [vmem:[%s5 + $0x68] sm:$0xff]
  %v290 = vld [vmem:[%s5 + $0x70] sm:$0xff]
  %v291 = vld [vmem:[%s5 + $0x78] sm:$0xff]
  %v292 = vld [vmem:[%s5 + $0x80] sm:$0xff]
  %v293 = vld [vmem:[%s5 + $0x88] sm:$0xff]
  %v294 = vld [vmem:[%s5 + $0x90] sm:$0xff]
  %v295 = vld [vmem:[%s5 + $0x98] sm:$0xff]
  %v296 = vld [vmem:[%s5 + $0xa0] sm:$0xff]
  %v297 = vld [vmem:[%s5 + $0xa8] sm:$0xff]
  %v298 = vld [vmem:[%s5 + $0xb0] sm:$0xff]
  %v299 = vld [vmem:[%s5 + $0xb8] sm:$0xff]
  %v300 = vld [vmem:[%s5 + $0xc0] sm:$0xff]
  %v301 = vld [vmem:[%s5 + $0xc8] sm:$0xff]
  %v302 = vld [vmem:[%s5 + $0xd0] sm:$0xff]
  %v303 = vld [vmem:[%s5 + $0xd8] sm:$0xff]
  %v304 = vld [vmem:[%s5 + $0xe0] sm:$0xff]
  %v305 = vld [vmem:[%s5 + $0xe8] sm:$0xff]
  %v306 = vld [vmem:[%s5 + $0xf0] sm:$0xff]
  %v307 = vld [vmem:[%s5 + $0xf8] sm:$0xff]
  %v308 = vpack.c.bf16 %v270, %v268
  %v309 = vpack.c.bf16 %v271, %v269
  %v310 = vpack.c.bf16 %v274, %v272
  %v311 = vpack.c.bf16 %v275, %v273
  %v312 = vpack.c.bf16 %v277, %v276
  %v313 = vpack.c.bf16 %v279, %v278
  %v314 = vpack.c.bf16 %v281, %v280
  %v315 = vpack.c.bf16 %v283, %v282
  %v316 = vpack.c.bf16 %v285, %v284
  %v317 = vpack.c.bf16 %v287, %v286
  %v318 = vpack.c.bf16 %v289, %v288
  %v319 = vpack.c.bf16 %v291, %v290
  %v320 = vpack.c.bf16 %v293, %v292
  %v321 = vpack.c.bf16 %v295, %v294
  %v322 = vpack.c.bf16 %v297, %v296
  %v323 = vpack.c.bf16 %v299, %v298
  %v324 = vpack.c.bf16 %v301, %v300
  %v325 = vpack.c.bf16 %v303, %v302
  %v326 = vpack.c.bf16 %v305, %v304
  %v327 = vpack.c.bf16 %v307, %v306
  %328 = vmatprep.subr.bf16.mxu0 0
  %329 = vmatpush1.bf16.msra.mxu0 %v312
  %330 = vmatprep.subr.bf16.mxu0 0
  %331 = vmatpush1.bf16.msra.mxu0 %v313
  %332 = vmatprep.subr.bf16.mxu0 0
  %333 = vmatpush1.bf16.msra.mxu0 %v314
  %334 = vmatprep.subr.bf16.mxu0 0
  %335 = vmatpush1.bf16.msra.mxu0 %v315
  %336 = vmatprep.subr.bf16.mxu0 0
  %337 = vmatpush1.bf16.msra.mxu0 %v316
  %338 = vmatprep.subr.bf16.mxu0 0
  %339 = vmatpush1.bf16.msra.mxu0 %v317
  %340 = vmatprep.subr.bf16.mxu0 0
  %341 = vmatpush1.bf16.msra.mxu0 %v318
  %342 = vmatprep.subr.bf16.mxu0 0
  %343 = vmatpush1.bf16.msra.mxu0 %v319
  %344 = vmatprep.subr.bf16.mxu0 0
  %345 = vmatpush1.bf16.msra.mxu0 %v320
  %346 = vmatprep.subr.bf16.mxu0 0
  %347 = vmatpush1.bf16.msra.mxu0 %v321
  %348 = vmatprep.subr.bf16.mxu0 0
  %349 = vmatpush1.bf16.msra.mxu0 %v322
  %350 = vmatprep.subr.bf16.mxu0 0
  %351 = vmatpush1.bf16.msra.mxu0 %v323
  %352 = vmatprep.subr.bf16.mxu0 0
  %353 = vmatpush1.bf16.msra.mxu0 %v324
  %354 = vmatprep.subr.bf16.mxu0 0
  %355 = vmatpush1.bf16.msra.mxu0 %v325
  %356 = vmatprep.subr.bf16.mxu0 0
  %357 = vmatpush1.bf16.msra.mxu0 %v326
  %358 = vmatprep.subr.bf16.mxu0 0
  %359 = vmatpush1.bf16.msra.mxu0 %v327
  %360 = vmatprep.mubr.bf16.mxu0 %v309
  %361 = vmatmul.mubr.bf16.gmra.mrb[0].mxu0 %v308
  %v362 = vpop.f32.mrb[0].mxu0
  %v363 = vadd.f32 0.0, %v362
  %v364 = vpop.f32.mrb[0].mxu0
  %v365 = vpop.f32.mrb[0].mxu0
  %v366 = vadd.f32 0.0, %v365
  %v367 = vpop.f32.mrb[0].mxu0
  %368 = vmatprep.mubr.bf16.mxu0 %v311
  %369 = vmatmul.mubr.bf16.gmra.mrb[0].mxu0 %v310
  %v370 = vpop.f32.mrb[0].mxu0
  %v371 = vadd.f32 0.0, %v370
  %v372 = vpop.f32.mrb[0].mxu0
  %v373 = vpop.f32.mrb[0].mxu0
  %v374 = vadd.f32 0.0, %v373
  %v375 = vpop.f32.mrb[0].mxu0
  %376 = vdwg.mxu0
  %v377 = vadd.f32 %v27, %v363
  %v378 = vadd.f32 %v28, %v366
  %v379 = vadd.f32 %v29, %v371
  %v380 = vadd.f32 %v30, %v374
  %v381 = vld [vmem:[%s6] sm:$0x1]
  %v383 = vlaneseq
  %v384 = vshrl.u32 %v383, 7
  %v385 = vsub.s32 0, %v384
  %v386 = vrot.slane %v381, %v385
  %v388 = vadd.f32 %v377, %v386
  %v389 = vadd.f32 %v378, %v386
  %v390 = vadd.f32 %v379, %v386
  %v391 = vadd.f32 %v380, %v386
  %392 = vst.msk [vmem:[%s7] sm:$0xff] %vm33, %v388
  %393 = vst.msk [vmem:[%s7 + $0x8] sm:$0xff] %vm33, %v389
  %394 = vst.msk [vmem:[%s7 + $0x10] sm:$0xff] %vm33, %v390
  %395 = vst.msk [vmem:[%s7 + $0x18] sm:$0xff] %vm33, %v391
  // Predicated region
  $region30: #{image_encoder.8} parent=0 // pred_check
    _
  $region31: #{image_encoder.8} parent=0 // pred_check_branch
    %397 = sbr.rel (0) target = $region33
  $region32: #{image_encoder.8} parent=0 // pred_region
    _
  $region33: #{image_encoder.8} parent=0 // pred_fallthru
    _
  // Predicated region
  $region34: #{image_encoder.8} parent=0 // pred_check
    _
  $region35: #{image_encoder.8} parent=0 // pred_check_branch
    %399 = sbr.rel (0) target = $region37
  $region36: #{image_encoder.8} parent=0 // pred_region
    _
  $region37: #{image_encoder.8} parent=0 // pred_fallthru
    _

// kernel: image_encoder.11
$region0: #{image_encoder.11}
  #allocation0 [shape = 'u32[]', space=smem, size = 0x4, offset = 0x4, fixed_abs, tag = 'smem constant byte address 0x4 - core index']
  #allocation1 [shape = 'u32[144,128]{1,0:T(1,128)}', space=vmem, size = 0x12000, scoped, tag = 'internal scratch']
  %s0 = inlined_call_operand.vmem [shape: f32[2,6,6,64], index: 0, kind: input, shape index: {}]
  %s1 = inlined_call_operand.vmem [shape: f32[72,1], index: 1, kind: input, shape index: {}]
  %s2 = inlined_call_operand.vmem [shape: f32[64,32], index: 2, kind: input, shape index: {}]
  %s3 = inlined_call_operand.vmem [shape: f32[1,32], index: 3, kind: input, shape index: {}]
  %s4 = inlined_call_operand.vmem [shape: f32[1,32], index: 4, kind: input, shape index: {}]
  %s5 = inlined_call_operand.vmem [shape: f32[288,32], index: 5, kind: input, shape index: {}]
  %s6 = inlined_call_operand.vmem [shape: f32[1,32], index: 6, kind: input, shape index: {}]
  %s7 = inlined_call_operand.vmem [shape: f32[1,32], index: 7, kind: input, shape index: {}]
  %s8 = inlined_call_operand.hbm [shape: f32[2,4,4,32], index: 8, kind: output, shape index: {}]
  %s9 = sld [smem:[#allocation0]]
  $region42: #{image_encoder.11} parent=0
    _
  %s11 = ssub.s32 1, %s9
  %s12 = scalar_select 0, %s11, %s9
  $region1: #{image_encoder.11} parent=0
    #allocation2 [shape = 'u8[16384]{0}', space=vmem, size = 0x4000, scoped, tag = 'output window, operand 0, single buffered']
    #allocation3 [shape = 's32[1]{0}', space=sflag, size = 0x4, scoped, tag = 'scoped memory for image_encoder.11']
    %13 = vsyncpa [#allocation3], 0
    // Predicated region
    $region2: #{image_encoder.11} parent=1 // pred_check
      _
    $region3: #{image_encoder.11} parent=1 // pred_check_branch
      %15 = sbr.rel (0) target = $region5
    $region4: #{image_encoder.11} parent=1 // pred_region
      _
    $region5: #{image_encoder.11} parent=1 // pred_fallthru
      _
    // Predicated region
    $region6: #{image_encoder.11} parent=1 // pred_check
      _
    $region7: #{image_encoder.11} parent=1 // pred_check_branch
      %17 = sbr.rel (0) target = $region9
    $region8: #{image_encoder.11} parent=1 // pred_region
      _
    $region9: #{image_encoder.11} parent=1 // pred_fallthru
      _
    // Predicated region
    $region10: #{image_encoder.11} parent=1 // pred_check
      _
    $region11: #{image_encoder.11} parent=1 // pred_check_branch
      %19 = sbr.rel (0) target = $region13
    $region12: #{image_encoder.11} parent=1 // pred_region
      _
    $region13: #{image_encoder.11} parent=1 // pred_fallthru
      _
    // Predicated region
    $region14: #{image_encoder.11} parent=1 // pred_check
      _
    $region15: #{image_encoder.11} parent=1 // pred_check_branch
      %21 = sbr.rel (0) target = $region17
    $region16: #{image_encoder.11} parent=1 // pred_region
      _
    $region17: #{image_encoder.11} parent=1 // pred_fallthru
      _
    // Predicated region
    $region18: #{image_encoder.11} parent=1 // pred_check
      _
    $region19: #{image_encoder.11} parent=1 // pred_check_branch
      %23 = sbr.rel (0) target = $region21
    $region20: #{image_encoder.11} parent=1 // pred_region
      _
    $region21: #{image_encoder.11} parent=1 // pred_fallthru
      _
    // Predicated region
    $region22: #{image_encoder.11} parent=1 // pred_check
      _
    $region23: #{image_encoder.11} parent=1 // pred_check_branch
      %25 = sbr.rel (0) target = $region25
    $region24: #{image_encoder.11} parent=1 // pred_region
      _
    $region25: #{image_encoder.11} parent=1 // pred_fallthru
      _
    // Predicated region
    $region26: #{image_encoder.11} parent=1 // pred_check
      _
    $region27: #{image_encoder.11} parent=1 // pred_check_branch
      %27 = sbr.rel (0) target = $region29
    $region28: #{image_encoder.11} parent=1 // pred_region
      _
    $region29: #{image_encoder.11} parent=1 // pred_fallthru
      _
    // Predicated region
    $region30: #{image_encoder.11} parent=1 // pred_check
      _
    $region31: #{image_encoder.11} parent=1 // pred_check_branch
      %29 = sbr.rel (0) target = $region33
    $region32: #{image_encoder.11} parent=1 // pred_region
      _
    $region33: #{image_encoder.11} parent=1 // pred_fallthru
      _
    %v31 = vld [vmem:[%s0] sm:$0x3f]
    %v32 = vld [vmem:[%s0 + $0x8] sm:$0x3f]
    %v33 = vld [vmem:[%s0 + $0x10] sm:$0x3f]
    %v34 = vld [vmem:[%s0 + $0x18] sm:$0x3f]
    %v35 = vld [vmem:[%s0 + $0x20] sm:$0x3f]
    %v36 = vld [vmem:[%s0 + $0x28] sm:$0x3f]
    %v37 = vld [vmem:[%s0 + $0x30] sm:$0x3f]
    %v38 = vld [vmem:[%s0 + $0x38] sm:$0x3f]
    %v39 = vld [vmem:[%s0 + $0x40] sm:$0x3f]
    %v40 = vld [vmem:[%s0 + $0x48] sm:$0x3f]
    %v41 = vld [vmem:[%s0 + $0x50] sm:$0x3f]
    %v42 = vld [vmem:[%s0 + $0x58] sm:$0x3f]
    %v55 = vcombine.high %v31, %v31
    %v57 = vunpack.c.l.s4 1983009808
    %v58 = vunpack.c.0.s8 %v57
    %v59 = vlaneseq
    %v60 = vshrl.u32 %v59, 7
    %v61 = vsub.s32 %v58, %v60
    %v62 = vrot.slane %v31, %v61
    %v64 = vunpack.c.l.s4 1983009808
    %v65 = vunpack.c.0.s8 %v64
    %v66 = vlaneseq
    %v67 = vshrl.u32 %v66, 7
    %v68 = vsub.s32 %v65, %v67
    %v69 = vrot.slane %v55, %v68
    %v70 = vcombine.high %v62, %v62
    %v71 = vcombine.high %v32, %v32
    %v73 = vunpack.c.l.s4 1983009808
    %v74 = vunpack.c.0.s8 %v73
    %v75 = vlaneseq
    %v76 = vshrl.u32 %v75, 7
    %v77 = vsub.s32 %v74, %v76
    %v78 = vrot.slane %v32, %v77
    %v80 = vunpack.c.l.s4 1983009808
    %v81 = vunpack.c.0.s8 %v80
    %v82 = vlaneseq
    %v83 = vshrl.u32 %v82, 7
    %v84 = vsub.s32 %v81, %v83
    %v85 = vrot.slane %v71, %v84
    %v86 = vcombine.high %v78, %v78
    %v87 = vcombine.high %v33, %v33
    %v89 = vunpack.c.l.s4 1983009808
    %v90 = vunpack.c.0.s8 %v89
    %v91 = vlaneseq
    %v92 = vshrl.u32 %v91, 7
    %v93 = vsub.s32 %v90, %v92
    %v94 = vrot.slane %v33, %v93
    %v96 = vunpack.c.l.s4 1983009808
    %v97 = vunpack.c.0.s8 %v96
    %v98 = vlaneseq
    %v99 = vshrl.u32 %v98, 7
    %v100 = vsub.s32 %v97, %v99
    %v101 = vrot.slane %v87, %v100
    %v102 = vcombine.high %v94, %v94
    %v103 = vcombine.high %v34, %v34
    %v105 = vunpack.c.l.s4 1983009808
    %v106 = vunpack.c.0.s8 %v105
    %v107 = vlaneseq
    %v108 = vshrl.u32 %v107, 7
    %v109 = vsub.s32 %v106, %v108
    %v110 = vrot.slane %v34, %v109
    %v112 = vunpack.c.l.s4 1983009808
    %v113 = vunpack.c.0.s8 %v112
    %v114 = vlaneseq
    %v115 = vshrl.u32 %v114, 7
    %v116 = vsub.s32 %v113, %v115
    %v117 = vrot.slane %v103, %v116
    %v118 = vcombine.high %v110, %v110
    %v119 = vcombine.high %v35, %v35
    %v121 = vunpack.c.l.s4 1983009808
    %v122 = vunpack.c.0.s8 %v121
    %v123 = vlaneseq
    %v124 = vshrl.u32 %v123, 7
    %v125 = vsub.s32 %v122, %v124
    %v126 = vrot.slane %v35, %v125
    %v128 = vunpack.c.l.s4 1983009808
    %v129 = vunpack.c.0.s8 %v128
    %v130 = vlaneseq
    %v131 = vshrl.u32 %v130, 7
    %v132 = vsub.s32 %v129, %v131
    %v133 = vrot.slane %v119, %v132
    %v134 = vcombine.high %v126, %v126
    %v135 = vcombine.high %v36, %v36
    %v137 = vunpack.c.l.s4 1983009808
    %v138 = vunpack.c.0.s8 %v137
    %v139 = vlaneseq
    %v140 = vshrl.u32 %v139, 7
    %v141 = vsub.s32 %v138, %v140
    %v142 = vrot.slane %v36, %v141
    %v144 = vunpack.c.l.s4 1983009808
    %v145 = vunpack.c.0.s8 %v144
    %v146 = vlaneseq
    %v147 = vshrl.u32 %v146, 7
    %v148 = vsub.s32 %v145, %v147
    %v149 = vrot.slane %v135, %v148
    %v150 = vcombine.high %v142, %v142
    %v151 = vcombine.high %v37, %v37
    %v153 = vunpack.c.l.s4 1983009808
    %v154 = vunpack.c.0.s8 %v153
    %v155 = vlaneseq
    %v156 = vshrl.u32 %v155, 7
    %v157 = vsub.s32 %v154, %v156
    %v158 = vrot.slane %v37, %v157
    %v160 = vunpack.c.l.s4 1983009808
    %v161 = vunpack.c.0.s8 %v160
    %v162 = vlaneseq
    %v163 = vshrl.u32 %v162, 7
    %v164 = vsub.s32 %v161, %v163
    %v165 = vrot.slane %v151, %v164
    %v166 = vcombine.high %v158, %v158
    %v167 = vcombine.high %v38, %v38
    %v169 = vunpack.c.l.s4 1983009808
    %v170 = vunpack.c.0.s8 %v169
    %v171 = vlaneseq
    %v172 = vshrl.u32 %v171, 7
    %v173 = vsub.s32 %v170, %v172
    %v174 = vrot.slane %v38, %v173
    %v176 = vunpack.c.l.s4 1983009808
    %v177 = vunpack.c.0.s8 %v176
    %v178 = vlaneseq
    %v179 = vshrl.u32 %v178, 7
    %v180 = vsub.s32 %v177, %v179
    %v181 = vrot.slane %v167, %v180
    %v182 = vcombine.high %v174, %v174
    %v183 = vcombine.high %v39, %v39
    %v185 = vunpack.c.l.s4 1983009808
    %v186 = vunpack.c.0.s8 %v185
    %v187 = vlaneseq
    %v188 = vshrl.u32 %v187, 7
    %v189 = vsub.s32 %v186, %v188
    %v190 = vrot.slane %v39, %v189
    %v192 = vunpack.c.l.s4 1983009808
    %v193 = vunpack.c.0.s8 %v192
    %v194 = vlaneseq
    %v195 = vshrl.u32 %v194, 7
    %v196 = vsub.s32 %v193, %v195
    %v197 = vrot.slane %v183, %v196
    %v198 = vcombine.high %v190, %v190
    %v199 = vcombine.high %v40, %v40
    %v201 = vunpack.c.l.s4 1983009808
    %v202 = vunpack.c.0.s8 %v201
    %v203 = vlaneseq
    %v204 = vshrl.u32 %v203, 7
    %v205 = vsub.s32 %v202, %v204
    %v206 = vrot.slane %v40, %v205
    %v208 = vunpack.c.l.s4 1983009808
    %v209 = vunpack.c.0.s8 %v208
    %v210 = vlaneseq
    %v211 = vshrl.u32 %v210, 7
    %v212 = vsub.s32 %v209, %v211
    %v213 = vrot.slane %v199, %v212
    %v214 = vcombine.high %v206, %v206
    %v215 = vcombine.high %v41, %v41
    %v217 = vunpack.c.l.s4 1983009808
    %v218 = vunpack.c.0.s8 %v217
    %v219 = vlaneseq
    %v220 = vshrl.u32 %v219, 7
    %v221 = vsub.s32 %v218, %v220
    %v222 = vrot.slane %v41, %v221
    %v224 = vunpack.c.l.s4 1983009808
    %v225 = vunpack.c.0.s8 %v224
    %v226 = vlaneseq
    %v227 = vshrl.u32 %v226, 7
    %v228 = vsub.s32 %v225, %v227
    %v229 = vrot.slane %v215, %v228
    %v230 = vcombine.high %v222, %v222
    %v231 = vcombine.high %v42, %v42
    %v233 = vunpack.c.l.s4 1983009808
    %v234 = vunpack.c.0.s8 %v233
    %v235 = vlaneseq
    %v236 = vshrl.u32 %v235, 7
    %v237 = vsub.s32 %v234, %v236
    %v238 = vrot.slane %v42, %v237
    %v240 = vunpack.c.l.s4 1983009808
    %v241 = vunpack.c.0.s8 %v240
    %v242 = vlaneseq
    %v243 = vshrl.u32 %v242, 7
    %v244 = vsub.s32 %v241, %v243
    %v245 = vrot.slane %v231, %v244
    %v246 = vcombine.high %v238, %v238
    %v247 = vld [vmem:[%s2] sm:$0xff]
    %v248 = vld [vmem:[%s2 + $0x8] sm:$0xff]
    %v249 = vld [vmem:[%s2 + $0x10] sm:$0xff]
    %v250 = vld [vmem:[%s2 + $0x18] sm:$0xff]
    %v251 = vld [vmem:[%s2 + $0x20] sm:$0xff]
    %v252 = vld [vmem:[%s2 + $0x28] sm:$0xff]
    %v253 = vld [vmem:[%s2 + $0x30] sm:$0xff]
    %v254 = vld [vmem:[%s2 + $0x38] sm:$0xff]
    %v255 = vcombine.low %v62, %v70
    %v256 = vcombine.low %v69, %v78
    %v258 = vunpack.c.l.s4 1983009808
    %v259 = vunpack.c.0.s8 %v258
    %v260 = vlaneseq
    %v261 = vshrl.u32 %v260, 7
    %v262 = vsub.s32 %v259, %v261
    %v263 = vrot.slane %v255, %v262
    %v265 = vunpack.c.l.s4 1983009808
    %v266 = vunpack.c.0.s8 %v265
    %v267 = vlaneseq
    %v268 = vshrl.u32 %v267, 7
    %v269 = vsub.s32 %v266, %v268
    %v270 = vrot.slane %v256, %v269
    %v271 = vcombine.low %v263, %v270
    %v272 = vcombine.low %v86, %v85
    %v273 = vcombine.low %v94, %v102
    %v275 = vunpack.c.l.s4 1983009808
    %v276 = vunpack.c.0.s8 %v275
    %v277 = vlaneseq
    %v278 = vshrl.u32 %v277, 7
    %v279 = vsub.s32 %v276, %v278
    %v280 = vrot.slane %v272, %v279
    %v282 = vunpack.c.l.s4 1983009808
    %v283 = vunpack.c.0.s8 %v282
    %v284 = vlaneseq
    %v285 = vshrl.u32 %v284, 7
    %v286 = vsub.s32 %v283, %v285
    %v287 = vrot.slane %v273, %v286
    %v288 = vcombine.low %v280, %v287
    %v289 = vcombine.low %v101, %v110
    %v290 = vcombine.low %v118, %v117
    %v292 = vunpack.c.l.s4 1983009808
    %v293 = vunpack.c.0.s8 %v292
    %v294 = vlaneseq
    %v295 = vshrl.u32 %v294, 7
    %v296 = vsub.s32 %v293, %v295
    %v297 = vrot.slane %v289, %v296
    %v299 = vunpack.c.l.s4 1983009808
    %v300 = vunpack.c.0.s8 %v299
    %v301 = vlaneseq
    %v302 = vshrl.u32 %v301, 7
    %v303 = vsub.s32 %v300, %v302
    %v304 = vrot.slane %v290, %v303
    %v305 = vcombine.low %v297, %v304
    %v306 = vcombine.low %v126, %v134
    %v307 = vcombine.low %v133, %v142
    %v309 = vunpack.c.l.s4 1983009808
    %v310 = vunpack.c.0.s8 %v309
    %v311 = vlaneseq
    %v312 = vshrl.u32 %v311, 7
    %v313 = vsub.s32 %v310, %v312
    %v314 = vrot.slane %v306, %v313
    %v316 = vunpack.c.l.s4 1983009808
    %v317 = vunpack.c.0.s8 %v316
    %v318 = vlaneseq
    %v319 = vshrl.u32 %v318, 7
    %v320 = vsub.s32 %v317, %v319
    %v321 = vrot.slane %v307, %v320
    %v322 = vcombine.low %v314, %v321
    %v323 = vcombine.low %v150, %v149
    %v324 = vcombine.low %v158, %v166
    %v326 = vunpack.c.l.s4 1983009808
    %v327 = vunpack.c.0.s8 %v326
    %v328 = vlaneseq
    %v329 = vshrl.u32 %v328, 7
    %v330 = vsub.s32 %v327, %v329
    %v331 = vrot.slane %v323, %v330
    %v333 = vunpack.c.l.s4 1983009808
    %v334 = vunpack.c.0.s8 %v333
    %v335 = vlaneseq
    %v336 = vshrl.u32 %v335, 7
    %v337 = vsub.s32 %v334, %v336
    %v338 = vrot.slane %v324, %v337
    %v339 = vcombine.low %v331, %v338
    %v340 = vcombine.low %v165, %v174
    %v341 = vcombine.low %v182, %v181
    %v343 = vunpack.c.l.s4 1983009808
    %v344 = vunpack.c.0.s8 %v343
    %v345 = vlaneseq
    %v346 = vshrl.u32 %v345, 7
    %v347 = vsub.s32 %v344, %v346
    %v348 = vrot.slane %v340, %v347
    %v350 = vunpack.c.l.s4 1983009808
    %v351 = vunpack.c.0.s8 %v350
    %v352 = vlaneseq
    %v353 = vshrl.u32 %v352, 7
    %v354 = vsub.s32 %v351, %v353
    %v355 = vrot.slane %v341, %v354
    %v356 = vcombine.low %v348, %v355
    %v357 = vcombine.low %v190, %v198
    %v358 = vcombine.low %v197, %v206
    %v360 = vunpack.c.l.s4 1983009808
    %v361 = vunpack.c.0.s8 %v360
    %v362 = vlaneseq
    %v363 = vshrl.u32 %v362, 7
    %v364 = vsub.s32 %v361, %v363
    %v365 = vrot.slane %v357, %v364
    %v367 = vunpack.c.l.s4 1983009808
    %v368 = vunpack.c.0.s8 %v367
    %v369 = vlaneseq
    %v370 = vshrl.u32 %v369, 7
    %v371 = vsub.s32 %v368, %v370
    %v372 = vrot.slane %v358, %v371
    %v373 = vcombine.low %v365, %v372
    %v374 = vcombine.low %v214, %v213
    %v375 = vcombine.low %v222, %v230
    %v377 = vunpack.c.l.s4 1983009808
    %v378 = vunpack.c.0.s8 %v377
    %v379 = vlaneseq
    %v380 = vshrl.u32 %v379, 7
    %v381 = vsub.s32 %v378, %v380
    %v382 = vrot.slane %v374, %v381
    %v384 = vunpack.c.l.s4 1983009808
    %v385 = vunpack.c.0.s8 %v384
    %v386 = vlaneseq
    %v387 = vshrl.u32 %v386, 7
    %v388 = vsub.s32 %v385, %v387
    %v389 = vrot.slane %v375, %v388
    %v390 = vcombine.low %v382, %v389
    %v391 = vcombine.low %v229, %v238
    %v392 = vcombine.low %v246, %v245
    %v394 = vunpack.c.l.s4 1983009808
    %v395 = vunpack.c.0.s8 %v394
    %v396 = vlaneseq
    %v397 = vshrl.u32 %v396, 7
    %v398 = vsub.s32 %v395, %v397
    %v399 = vrot.slane %v391, %v398
    %v401 = vunpack.c.l.s4 1983009808
    %v402 = vunpack.c.0.s8 %v401
    %v403 = vlaneseq
    %v404 = vshrl.u32 %v403, 7
    %v405 = vsub.s32 %v402, %v404
    %v406 = vrot.slane %v392, %v405
    %v407 = vcombine.low %v399, %v406
    %v417 = vpack.c.bf16 %v288, %v271
    %v418 = vpack.c.bf16 %v322, %v305
    %v419 = vpack.c.bf16 %v356, %v339
    %v420 = vpack.c.bf16 %v390, %v373
    %v421 = vpack.c.bf16 %v407, %v407
    %v422 = vpack.c.bf16 %v248, %v247
    %v423 = vpack.c.bf16 %v250, %v249
    %v424 = vpack.c.bf16 %v252, %v251
    %v425 = vpack.c.bf16 %v254, %v253
    %vm426 = vcmask 523264
    %v428 = vsel %vm426, %v417, 0
    %v431 = vsel %vm426, %v418, 0
    %v434 = vsel %vm426, %v419, 0
    %v437 = vsel %vm426, %v420, 0
    %v440 = vsel %vm426, %v421, 0
    %442 = vmatprep.subr.bf16.mxu0 0
    %443 = vmatpush1.bf16.msra.mxu0 %v422
    %444 = vmatprep.subr.bf16.mxu0 0
    %445 = vmatpush1.bf16.msra.mxu0 %v423
    %446 = vmatprep.subr.bf16.mxu0 0
    %447 = vmatpush1.bf16.msra.mxu0 %v424
    %448 = vmatprep.subr.bf16.mxu0 0
    %449 = vmatpush1.bf16.msra.mxu0 %v425
    %450 = vmatprep.subr.bf16.mxu0 0
    %451 = vmatpush1.bf16.msra.mxu0 0
    %452 = vmatprep.subr.bf16.mxu0 0
    %453 = vmatpush1.bf16.msra.mxu0 0
    %454 = vmatprep.subr.bf16.mxu0 0
    %455 = vmatpush1.bf16.msra.mxu0 0
    %456 = vmatprep.subr.bf16.mxu0 0
    %457 = vmatpush1.bf16.msra.mxu0 0
    %458 = vmatprep.subr.bf16.mxu0 0
    %459 = vmatpush1.bf16.msra.mxu0 0
    %460 = vmatprep.subr.bf16.mxu0 0
    %461 = vmatpush1.bf16.msra.mxu0 0
    %462 = vmatprep.subr.bf16.mxu0 0
    %463 = vmatpush1.bf16.msra.mxu0 0
    %464 = vmatprep.subr.bf16.mxu0 0
    %465 = vmatpush1.bf16.msra.mxu0 0
    %466 = vmatprep.subr.bf16.mxu0 0
    %467 = vmatpush1.bf16.msra.mxu0 0
    %468 = vmatprep.subr.bf16.mxu0 0
    %469 = vmatpush1.bf16.msra.mxu0 0
    %470 = vmatprep.subr.bf16.mxu0 0
    %471 = vmatpush1.bf16.msra.mxu0 0
    %472 = vmatprep.subr.bf16.mxu0 0
    %473 = vmatpush1.bf16.msra.mxu0 0
    %474 = vmatprep.mubr.bf16.mxu0 0
    %475 = vmatmul.mubr.bf16.gmra.mrb[0].mxu0 %v428
    %v476 = vpop.f32.mrb[0].mxu0
    %v477 = vadd.f32 0.0, %v476
    %v478 = vpop.f32.mrb[0].mxu0
    %v479 = vpop.f32.mrb[0].mxu0
    %v480 = vadd.f32 0.0, %v479
    %v481 = vpop.f32.mrb[0].mxu0
    %482 = vmatprep.mubr.bf16.mxu0 0
    %483 = vmatmul.mubr.bf16.gmra.mrb[0].mxu0 %v431
    %v484 = vpop.f32.mrb[0].mxu0
    %v485 = vadd.f32 0.0, %v484
    %v486 = vpop.f32.mrb[0].mxu0
    %v487 = vpop.f32.mrb[0].mxu0
    %v488 = vadd.f32 0.0, %v487
    %v489 = vpop.f32.mrb[0].mxu0
    %490 = vmatprep.mubr.bf16.mxu0 0
    %491 = vmatmul.mubr.bf16.gmra.mrb[0].mxu0 %v434
    %v492 = vpop.f32.mrb[0].mxu0
    %v493 = vadd.f32 0.0, %v492
    %v494 = vpop.f32.mrb[0].mxu0
    %v495 = vpop.f32.mrb[0].mxu0
    %v496 = vadd.f32 0.0, %v495
    %v497 = vpop.f32.mrb[0].mxu0
    %498 = vmatprep.mubr.bf16.mxu0 0
    %499 = vmatmul.mubr.bf16.gmra.mrb[0].mxu0 %v437
    %v500 = vpop.f32.mrb[0].mxu0
    %v501 = vadd.f32 0.0, %v500
    %v502 = vpop.f32.mrb[0].mxu0
    %v503 = vpop.f32.mrb[0].mxu0
    %v504 = vadd.f32 0.0, %v503
    %v505 = vpop.f32.mrb[0].mxu0
    %506 = vmatprep.mubr.bf16.mxu0 0
    %507 = vmatmul.mubr.bf16.gmra.mrb[0].mxu0 %v440
    %v508 = vpop.f32.mrb[0].mxu0
    %v509 = vadd.f32 0.0, %v508
    %v510 = vpop.f32.mrb[0].mxu0
    %v511 = vpop.f32.mrb[0].mxu0
    %v512 = vpop.f32.mrb[0].mxu0
    %513 = vdwg.mxu0
    %v514 = vld [vmem:[%s3] sm:$0x1]
    %v515 = vld [vmem:[%s4] sm:$0x1]
    %vm516 = vcmask 261120
    %v517 = vsel %vm516, %v477, 0.0
    %518 = vadd.xlane.f32.xlu0 %v517
    %v519 = vpop.xlane.xlu0 %518
    %v520 = vsel %vm516, %v480, 0.0
    %521 = vadd.xlane.f32.xlu0 %v520
    %v522 = vpop.xlane.xlu0 %521
    %v523 = vsel %vm516, %v485, 0.0
    %524 = vadd.xlane.f32.xlu0 %v523
    %v525 = vpop.xlane.xlu0 %524
    %v526 = vsel %vm516, %v488, 0.0
    %527 = vadd.xlane.f32.xlu0 %v526
    %v528 = vpop.xlane.xlu0 %527
    %v529 = vsel %vm516, %v493, 0.0
    %530 = vadd.xlane.f32.xlu0 %v529
    %v531 = vpop.xlane.xlu0 %530
    %v532 = vsel %vm516, %v496, 0.0
    %533 = vadd.xlane.f32.xlu0 %v532
    %v534 = vpop.xlane.xlu0 %533
    %v535 = vsel %vm516, %v501, 0.0
    %536 = vadd.xlane.f32.xlu0 %v535
    %v537 = vpop.xlane.xlu0 %536
    %v538 = vsel %vm516, %v504, 0.0
    %539 = vadd.xlane.f32.xlu0 %v538
    %v540 = vpop.xlane.xlu0 %539
    %v541 = vsel %vm516, %v509, 0.0
    %542 = vadd.xlane.f32.xlu0 %v541
    %v543 = vpop.xlane.xlu0 %542
    %v544 = vrcp.pop 32.0
    %v545 = vmul.f32 %v519, %v544
    %v546 = vmul.f32 %v522, %v544
    %v547 = vmul.f32 %v525, %v544
    %v548 = vmul.f32 %v528, %v544
    %v549 = vmul.f32 %v531, %v544
    %v550 = vmul.f32 %v534, %v544
    %v551 = vmul.f32 %v537, %v544
    %v552 = vmul.f32 %v540, %v544
    %v553 = vmul.f32 %v543, %v544
    %v554 = vsub.f32 %v477, %v545
    %v555 = vsub.f32 %v480, %v546
    %v556 = vsub.f32 %v485, %v547
    %v557 = vsub.f32 %v488, %v548
    %v558 = vsub.f32 %v493, %v549
    %v559 = vsub.f32 %v496, %v550
    %v560 = vsub.f32 %v501, %v551
    %v561 = vsub.f32 %v504, %v552
    %v562 = vsub.f32 %v509, %v553
    %v563 = vmul.f32 %v554, %v554
    %v564 = vmul.f32 %v555, %v555
    %v565 = vmul.f32 %v556, %v556
    %v566 = vmul.f32 %v557, %v557
    %v567 = vmul.f32 %v558, %v558
    %v568 = vmul.f32 %v559, %v559
    %v569 = vmul.f32 %v560, %v560
    %v570 = vmul.f32 %v561, %v561
    %v571 = vmul.f32 %v562, %v562
    %v572 = vsel %vm516, %v563, 0.0
    %573 = vadd.xlane.f32.xlu0 %v572
    %v574 = vpop.xlane.xlu0 %573
    %v575 = vsel %vm516, %v564, 0.0
    %576 = vadd.xlane.f32.xlu0 %v575
    %v577 = vpop.xlane.xlu0 %576
    %v578 = vsel %vm516, %v565, 0.0
    %579 = vadd.xlane.f32.xlu0 %v578
    %v580 = vpop.xlane.xlu0 %579
    %v581 = vsel %vm516, %v566, 0.0
    %582 = vadd.xlane.f32.xlu0 %v581
    %v583 = vpop.xlane.xlu0 %582
    %v584 = vsel %vm516, %v567, 0.0
    %585 = vadd.xlane.f32.xlu0 %v584
    %v586 = vpop.xlane.xlu0 %585
    %v587 = vsel %vm516, %v568, 0.0
    %588 = vadd.xlane.f32.xlu0 %v587
    %v589 = vpop.xlane.xlu0 %588
    %v590 = vsel %vm516, %v569, 0.0
    %591 = vadd.xlane.f32.xlu0 %v590
    %v592 = vpop.xlane.xlu0 %591
    %v593 = vsel %vm516, %v570, 0.0
    %594 = vadd.xlane.f32.xlu0 %v593
    %v595 = vpop.xlane.xlu0 %594
    %v596 = vsel %vm516, %v571, 0.0
    %597 = vadd.xlane.f32.xlu0 %v596
    %v598 = vpop.xlane.xlu0 %597
    %v599 = vmul.f32 %v574, %v544
    %v600 = vmul.f32 %v577, %v544
    %v601 = vmul.f32 %v580, %v544
    %v602 = vmul.f32 %v583, %v544
    %v603 = vmul.f32 %v586, %v544
    %v604 = vmul.f32 %v589, %v544
    %v605 = vmul.f32 %v592, %v544
    %v606 = vmul.f32 %v595, %v544
    %v607 = vmul.f32 %v598, %v544
    %v608 = vadd.f32 %v599, 1e-06
    %v609 = vadd.f32 %v600, 1e-06
    %v610 = vadd.f32 %v601, 1e-06
    %v611 = vadd.f32 %v602, 1e-06
    %v612 = vadd.f32 %v603, 1e-06
    %v613 = vadd.f32 %v604, 1e-06
    %v614 = vadd.f32 %v605, 1e-06
    %v615 = vadd.f32 %v606, 1e-06
    %v616 = vadd.f32 %v607, 1e-06
    %v617 = vrsqrt.pop %v608
    %v618 = vrsqrt.pop %v609
    %v619 = vrsqrt.pop %v610
    %v620 = vrsqrt.pop %v611
    %v621 = vrsqrt.pop %v612
    %v622 = vrsqrt.pop %v613
    %v623 = vrsqrt.pop %v614
    %v624 = vrsqrt.pop %v615
    %v625 = vrsqrt.pop %v616
    %v626 = vmul.f32 %v554, %v617
    %v627 = vmul.f32 %v555, %v618
    %v628 = vmul.f32 %v556, %v619
    %v629 = vmul.f32 %v557, %v620
    %v630 = vmul.f32 %v558, %v621
    %v631 = vmul.f32 %v559, %v622
    %v632 = vmul.f32 %v560, %v623
    %v633 = vmul.f32 %v561, %v624
    %v634 = vmul.f32 %v562, %v625
    %v636 = vlaneseq
    %v637 = vshrl.u32 %v636, 7
    %v638 = vsub.s32 0, %v637
    %v639 = vrot.slane %v514, %v638
    %v641 = vmul.f32 %v626, %v639
    %v642 = vmul.f32 %v627, %v639
    %v643 = vmul.f32 %v628, %v639
    %v644 = vmul.f32 %v629, %v639
    %v645 = vmul.f32 %v630, %v639
    %v646 = vmul.f32 %v631, %v639
    %v647 = vmul.f32 %v632, %v639
    %v648 = vmul.f32 %v633, %v639
    %v649 = vmul.f32 %v634, %v639
    %v651 = vlaneseq
    %v652 = vshrl.u32 %v651, 7
    %v653 = vsub.s32 0, %v652
    %v654 = vrot.slane %v515, %v653
    %v656 = vadd.f32 %v641, %v654
    %v657 = vadd.f32 %v642, %v654
    %v658 = vadd.f32 %v643, %v654
    %v659 = vadd.f32 %v644, %v654
    %v660 = vadd.f32 %v645, %v654
    %v661 = vadd.f32 %v646, %v654
    %v662 = vadd.f32 %v647, %v654
    %v663 = vadd.f32 %v648, %v654
    %v664 = vadd.f32 %v649, %v654
    %v665 = vld [vmem:[%s1] sm:$0xff]
    %v666 = vld [vmem:[%s1 + $0x8] sm:$0xff]
    %v667 = vld [vmem:[%s1 + $0x10] sm:$0xff]
    %v668 = vld [vmem:[%s1 + $0x18] sm:$0xff]
    %v669 = vld [vmem:[%s1 + $0x20] sm:$0xff]
    %v670 = vld [vmem:[%s1 + $0x28] sm:$0xff]
    %v671 = vld [vmem:[%s1 + $0x30] sm:$0xff]
    %v672 = vld [vmem:[%s1 + $0x38] sm:$0xff]
    %v673 = vld [vmem:[%s1 + $0x40] sm:$0xff]
    %675 = vset.pattern.permute.xlu0 0
    %676 = vperm.xlu0 %675, %v665
    %v677 = vpop.permute.xlu0 %676
    %680 = vset.pattern.permute.xlu0 0
    %681 = vperm.xlu0 %680, %v666
    %v682 = vpop.permute.xlu0 %681
    %685 = vset.pattern.permute.xlu0 0
    %686 = vperm.xlu0 %685, %v667
    %v687 = vpop.permute.xlu0 %686
    %690 = vset.pattern.permute.xlu0 0
    %691 = vperm.xlu0 %690, %v668
    %v692 = vpop.permute.xlu0 %691
    %695 = vset.pattern.permute.xlu0 0
    %696 = vperm.xlu0 %695, %v669
    %v697 = vpop.permute.xlu0 %696
    %700 = vset.pattern.permute.xlu0 0
    %701 = vperm.xlu0 %700, %v670
    %v702 = vpop.permute.xlu0 %701
    %705 = vset.pattern.permute.xlu0 0
    %706 = vperm.xlu0 %705, %v671
    %v707 = vpop.permute.xlu0 %706
    %710 = vset.pattern.permute.xlu0 0
    %711 = vperm.xlu0 %710, %v672
    %v712 = vpop.permute.xlu0 %711
    %715 = vset.pattern.permute.xlu0 0
    %716 = vperm.xlu0 %715, %v673
    %v717 = vpop.permute.xlu0 %716
    %v719 = vmul.f32 %v656, %v677
    %v720 = vmul.f32 %v657, %v682
    %v721 = vmul.f32 %v658, %v687
    %v722 = vmul.f32 %v659, %v692
    %v723 = vmul.f32 %v660, %v697
    %v724 = vmul.f32 %v661, %v702
    %v725 = vmul.f32 %v662, %v707
    %v726 = vmul.f32 %v663, %v712
    %v727 = vmul.f32 %v664, %v717
    %v737 = vcombine.high %v719, %v719
    %v739 = vunpack.c.l.s4 1983009808
    %v740 = vunpack.c.0.s8 %v739
    %v741 = vlaneseq
    %v742 = vshrl.u32 %v741, 7
    %v743 = vsub.s32 %v740, %v742
    %v744 = vrot.slane %v719, %v743
    %v746 = vunpack.c.l.s4 1983009808
    %v747 = vunpack.c.0.s8 %v746
    %v748 = vlaneseq
    %v749 = vshrl.u32 %v748, 7
    %v750 = vsub.s32 %v747, %v749
    %v751 = vrot.slane %v737, %v750
    %v752 = vcombine.high %v744, %v744
    %v753 = vcombine.high %v751, %v751
    %v754 = vcombine.high %v720, %v720
    %v756 = vunpack.c.l.s4 1983009808
    %v757 = vunpack.c.0.s8 %v756
    %v758 = vlaneseq
    %v759 = vshrl.u32 %v758, 7
    %v760 = vsub.s32 %v757, %v759
    %v761 = vrot.slane %v720, %v760
    %v763 = vunpack.c.l.s4 1983009808
    %v764 = vunpack.c.0.s8 %v763
    %v765 = vlaneseq
    %v766 = vshrl.u32 %v765, 7
    %v767 = vsub.s32 %v764, %v766
    %v768 = vrot.slane %v754, %v767
    %v769 = vcombine.high %v761, %v761
    %v770 = vcombine.high %v768, %v768
    %v771 = vcombine.high %v721, %v721
    %v773 = vunpack.c.l.s4 1983009808
    %v774 = vunpack.c.0.s8 %v773
    %v775 = vlaneseq
    %v776 = vshrl.u32 %v775, 7
    %v777 = vsub.s32 %v774, %v776
    %v778 = vrot.slane %v721, %v777
    %v780 = vunpack.c.l.s4 1983009808
    %v781 = vunpack.c.0.s8 %v780
    %v782 = vlaneseq
    %v783 = vshrl.u32 %v782, 7
    %v784 = vsub.s32 %v781, %v783
    %v785 = vrot.slane %v771, %v784
    %v786 = vcombine.high %v778, %v778
    %v787 = vcombine.high %v785, %v785
    %v788 = vcombine.high %v722, %v722
    %v790 = vunpack.c.l.s4 1983009808
    %v791 = vunpack.c.0.s8 %v790
    %v792 = vlaneseq
    %v793 = vshrl.u32 %v792, 7
    %v794 = vsub.s32 %v791, %v793
    %v795 = vrot.slane %v722, %v794
    %v797 = vunpack.c.l.s4 1983009808
    %v798 = vunpack.c.0.s8 %v797
    %v799 = vlaneseq
    %v800 = vshrl.u32 %v799, 7
    %v801 = vsub.s32 %v798, %v800
    %v802 = vrot.slane %v788, %v801
    %v803 = vcombine.high %v795, %v795
    %v804 = vcombine.high %v802, %v802
    %v805 = vcombine.high %v723, %v723
    %v807 = vunpack.c.l.s4 1983009808
    %v808 = vunpack.c.0.s8 %v807
    %v809 = vlaneseq
    %v810 = vshrl.u32 %v809, 7
    %v811 = vsub.s32 %v808, %v810
    %v812 = vrot.slane %v723, %v811
    %v814 = vunpack.c.l.s4 1983009808
    %v815 = vunpack.c.0.s8 %v814
    %v816 = vlaneseq
    %v817 = vshrl.u32 %v816, 7
    %v818 = vsub.s32 %v815, %v817
    %v819 = vrot.slane %v805, %v818
    %v820 = vcombine.high %v812, %v812
    %v821 = vcombine.high %v819, %v819
    %v822 = vcombine.high %v724, %v724
    %v824 = vunpack.c.l.s4 1983009808
    %v825 = vunpack.c.0.s8 %v824
    %v826 = vlaneseq
    %v827 = vshrl.u32 %v826, 7
    %v828 = vsub.s32 %v825, %v827
    %v829 = vrot.slane %v724, %v828
    %v831 = vunpack.c.l.s4 1983009808
    %v832 = vunpack.c.0.s8 %v831
    %v833 = vlaneseq
    %v834 = vshrl.u32 %v833, 7
    %v835 = vsub.s32 %v832, %v834
    %v836 = vrot.slane %v822, %v835
    %v837 = vcombine.high %v829, %v829
    %v838 = vcombine.high %v836, %v836
    %v839 = vcombine.high %v725, %v725
    %v841 = vunpack.c.l.s4 1983009808
    %v842 = vunpack.c.0.s8 %v841
    %v843 = vlaneseq
    %v844 = vshrl.u32 %v843, 7
    %v845 = vsub.s32 %v842, %v844
    %v846 = vrot.slane %v725, %v845
    %v848 = vunpack.c.l.s4 1983009808
    %v849 = vunpack.c.0.s8 %v848
    %v850 = vlaneseq
    %v851 = vshrl.u32 %v850, 7
    %v852 = vsub.s32 %v849, %v851
    %v853 = vrot.slane %v839, %v852
    %v854 = vcombine.high %v846, %v846
    %v855 = vcombine.high %v853, %v853
    %v856 = vcombine.high %v726, %v726
    %v858 = vunpack.c.l.s4 1983009808
    %v859 = vunpack.c.0.s8 %v858
    %v860 = vlaneseq
    %v861 = vshrl.u32 %v860, 7
    %v862 = vsub.s32 %v859, %v861
    %v863 = vrot.slane %v726, %v862
    %v865 = vunpack.c.l.s4 1983009808
    %v866 = vunpack.c.0.s8 %v865
    %v867 = vlaneseq
    %v868 = vshrl.u32 %v867, 7
    %v869 = vsub.s32 %v866, %v868
    %v870 = vrot.slane %v856, %v869
    %v871 = vcombine.high %v863, %v863
    %v872 = vcombine.high %v870, %v870
    %v873 = vcombine.high %v727, %v727
    %v875 = vunpack.c.l.s4 1983009808
    %v876 = vunpack.c.0.s8 %v875
    %v877 = vlaneseq
    %v878 = vshrl.u32 %v877, 7
    %v879 = vsub.s32 %v876, %v878
    %v880 = vrot.slane %v727, %v879
    %v882 = vunpack.c.l.s4 1983009808
    %v883 = vunpack.c.0.s8 %v882
    %v884 = vlaneseq
    %v885 = vshrl.u32 %v884, 7
    %v886 = vsub.s32 %v883, %v885
    %v887 = vrot.slane %v873, %v886
    %v888 = vcombine.high %v880, %v880
    %v889 = vcombine.high %v887, %v887
    %v890 = vld [vmem:[%s5] sm:$0xff]
    %v891 = vld [vmem:[%s5 + $0x8] sm:$0xff]
    %v892 = vld [vmem:[%s5 + $0x10] sm:$0xff]
    %v893 = vld [vmem:[%s5 + $0x18] sm:$0xff]
    %v894 = vld [vmem:[%s5 + $0x20] sm:$0xff]
    %v895 = vld [vmem:[%s5 + $0x28] sm:$0xff]
    %v896 = vld [vmem:[%s5 + $0x30] sm:$0xff]
    %v897 = vld [vmem:[%s5 + $0x38] sm:$0xff]
    %v898 = vld [vmem:[%s5 + $0x40] sm:$0xff]
    %v899 = vld [vmem:[%s5 + $0x48] sm:$0xff]
    %v900 = vld [vmem:[%s5 + $0x50] sm:$0xff]
    %v901 = vld [vmem:[%s5 + $0x58] sm:$0xff]
    %v902 = vld [vmem:[%s5 + $0x60] sm:$0xff]
    %v903 = vld [vmem:[%s5 + $0x68] sm:$0xff]
    %v904 = vld [vmem:[%s5 + $0x70] sm:$0xff]
    %v905 = vld [vmem:[%s5 + $0x78] sm:$0xff]
    %v906 = vld [vmem:[%s5 + $0x80] sm:$0xff]
    %v907 = vld [vmem:[%s5 + $0x88] sm:$0xff]
    %v908 = vld [vmem:[%s5 + $0x90] sm:$0xff]
    %v909 = vld [vmem:[%s5 + $0x98] sm:$0xff]
    %v910 = vld [vmem:[%s5 + $0xa0] sm:$0xff]
    %v911 = vld [vmem:[%s5 + $0xa8] sm:$0xff]
    %v912 = vld [vmem:[%s5 + $0xb0] sm:$0xff]
    %v913 = vld [vmem:[%s5 + $0xb8] sm:$0xff]
    %v914 = vld [vmem:[%s5 + $0xc0] sm:$0xff]
    %v915 = vld [vmem:[%s5 + $0xc8] sm:$0xff]
    %v916 = vld [vmem:[%s5 + $0xd0] sm:$0xff]
    %v917 = vld [vmem:[%s5 + $0xd8] sm:$0xff]
    %v918 = vld [vmem:[%s5 + $0xe0] sm:$0xff]
    %v919 = vld [vmem:[%s5 + $0xe8] sm:$0xff]
    %v920 = vld [vmem:[%s5 + $0xf0] sm:$0xff]
    %v921 = vld [vmem:[%s5 + $0xf8] sm:$0xff]
    %v922 = vld [vmem:[%s5 + $0x100] sm:$0xff]
    %v923 = vld [vmem:[%s5 + $0x108] sm:$0xff]
    %v924 = vld [vmem:[%s5 + $0x110] sm:$0xff]
    %v925 = vld [vmem:[%s5 + $0x118] sm:$0xff]
    %v926 = vcombine.low %v744, %v752
    %v927 = vcombine.low %v753, %v761
    %v929 = vunpack.c.l.s4 1983009808
    %v930 = vunpack.c.0.s8 %v929
    %v931 = vlaneseq
    %v932 = vshrl.u32 %v931, 7
    %v933 = vsub.s32 %v930, %v932
    %v934 = vrot.slane %v926, %v933
    %v936 = vunpack.c.l.s4 1983009808
    %v937 = vunpack.c.0.s8 %v936
    %v938 = vlaneseq
    %v939 = vshrl.u32 %v938, 7
    %v940 = vsub.s32 %v937, %v939
    %v941 = vrot.slane %v927, %v940
    %v942 = vcombine.low %v934, %v941
    %v943 = vcombine.low %v768, %v770
    %v944 = vcombine.low %v786, %v785
    %v946 = vunpack.c.l.s4 1983009808
    %v947 = vunpack.c.0.s8 %v946
    %v948 = vlaneseq
    %v949 = vshrl.u32 %v948, 7
    %v950 = vsub.s32 %v947, %v949
    %v951 = vrot.slane %v943, %v950
    %v953 = vunpack.c.l.s4 1983009808
    %v954 = vunpack.c.0.s8 %v953
    %v955 = vlaneseq
    %v956 = vshrl.u32 %v955, 7
    %v957 = vsub.s32 %v954, %v956
    %v958 = vrot.slane %v944, %v957
    %v959 = vcombine.low %v951, %v958
    %v960 = vcombine.low %v819, %v821
    %v961 = vcombine.low %v837, %v836
    %v963 = vunpack.c.l.s4 1983009808
    %v964 = vunpack.c.0.s8 %v963
    %v965 = vlaneseq
    %v966 = vshrl.u32 %v965, 7
    %v967 = vsub.s32 %v964, %v966
    %v968 = vrot.slane %v960, %v967
    %v970 = vunpack.c.l.s4 1983009808
    %v971 = vunpack.c.0.s8 %v970
    %v972 = vlaneseq
    %v973 = vshrl.u32 %v972, 7
    %v974 = vsub.s32 %v971, %v973
    %v975 = vrot.slane %v961, %v974
    %v976 = vcombine.low %v968, %v975
    %v977 = vcombine.low %v846, %v854
    %v978 = vcombine.low %v855, %v863
    %v980 = vunpack.c.l.s4 1983009808
    %v981 = vunpack.c.0.s8 %v980
    %v982 = vlaneseq
    %v983 = vshrl.u32 %v982, 7
    %v984 = vsub.s32 %v981, %v983
    %v985 = vrot.slane %v977, %v984
    %v987 = vunpack.c.l.s4 1983009808
    %v988 = vunpack.c.0.s8 %v987
    %v989 = vlaneseq
    %v990 = vshrl.u32 %v989, 7
    %v991 = vsub.s32 %v988, %v990
    %v992 = vrot.slane %v978, %v991
    %v993 = vcombine.low %v985, %v992
    %v998 = vpack.c.bf16 %v959, %v942
    %v999 = vpack.c.bf16 %v993, %v976
    %v1000 = vpack.c.bf16 %v891, %v890
    %v1001 = vpack.c.bf16 %v893, %v892
    %vm1002 = vcmask 1040384
    %vm1003 = vcmask 1042434
    %vm1004 = vmor %vm1002, %vm1003
    %vm1005 = vcmask 1044484
    %vm1006 = vmor %vm1004, %vm1005
    %vm1007 = vcmask 1046534
    %vm1008 = vmor %vm1006, %vm1007
    %v1009 = vrot.slane %v744, 7
    %v1010 = vrot.slane %v1009, 2
    %v1011 = vrot.slane %v752, 7
    %v1012 = vsel %vm1008, %v1010, %v1011
    %v1013 = vrot.slane %v1011, 2
    %v1014 = vrot.slane %v751, 7
    %v1015 = vsel %vm1008, %v1013, %v1014
    %v1016 = vrot.slane %v753, 7
    %v1017 = vrot.slane %v1016, 2
    %v1018 = vrot.slane %v761, 7
    %v1019 = vsel %vm1008, %v1017, %v1018
    %v1020 = vrot.slane %v1018, 2
    %v1021 = vrot.slane %v769, 7
    %v1022 = vsel %vm1008, %v1020, %v1021
    %v1023 = vrot.slane %v768, 7
    %v1024 = vrot.slane %v1023, 2
    %v1025 = vrot.slane %v770, 7
    %v1026 = vsel %vm1008, %v1024, %v1025
    %v1027 = vrot.slane %v1025, 2
    %v1028 = vrot.slane %v778, 7
    %v1029 = vsel %vm1008, %v1027, %v1028
    %v1030 = vrot.slane %v786, 7
    %v1031 = vrot.slane %v1030, 2
    %v1032 = vrot.slane %v785, 7
    %v1033 = vsel %vm1008, %v1031, %v1032
    %v1034 = vrot.slane %v1032, 2
    %v1035 = vrot.slane %v787, 7
    %v1036 = vsel %vm1008, %v1034, %v1035
    %v1037 = vrot.slane %v819, 7
    %v1038 = vrot.slane %v1037, 2
    %v1039 = vrot.slane %v821, 7
    %v1040 = vsel %vm1008, %v1038, %v1039
    %v1041 = vrot.slane %v1039, 2
    %v1042 = vrot.slane %v829, 7
    %v1043 = vsel %vm1008, %v1041, %v1042
    %v1044 = vrot.slane %v837, 7
    %v1045 = vrot.slane %v1044, 2
    %v1046 = vrot.slane %v836, 7
    %v1047 = vsel %vm1008, %v1045, %v1046
    %v1048 = vrot.slane %v1046, 2
    %v1049 = vrot.slane %v838, 7
    %v1050 = vsel %vm1008, %v1048, %v1049
    %v1051 = vrot.slane %v846, 7
    %v1052 = vrot.slane %v1051, 2
    %v1053 = vrot.slane %v854, 7
    %v1054 = vsel %vm1008, %v1052, %v1053
    %v1055 = vrot.slane %v1053, 2
    %v1056 = vrot.slane %v853, 7
    %v1057 = vsel %vm1008, %v1055, %v1056
    %v1058 = vrot.slane %v855, 7
    %v1059 = vrot.slane %v1058, 2
    %v1060 = vrot.slane %v863, 7
    %v1061 = vsel %vm1008, %v1059, %v1060
    %v1062 = vrot.slane %v1060, 2
    %v1063 = vrot.slane %v871, 7
    %v1064 = vsel %vm1008, %v1062, %v1063
    %v1065 = vcombine.low %v1012, %v1015
    %v1066 = vcombine.low %v1019, %v1022
    %v1068 = vunpack.c.l.s4 1983009808
    %v1069 = vunpack.c.0.s8 %v1068
    %v1070 = vlaneseq
    %v1071 = vshrl.u32 %v1070, 7
    %v1072 = vsub.s32 %v1069, %v1071
    %v1073 = vrot.slane %v1065, %v1072
    %v1075 = vunpack.c.l.s4 1983009808
    %v1076 = vunpack.c.0.s8 %v1075
    %v1077 = vlaneseq
    %v1078 = vshrl.u32 %v1077, 7
    %v1079 = vsub.s32 %v1076, %v1078
    %v1080 = vrot.slane %v1066, %v1079
    %v1081 = vcombine.low %v1073, %v1080
    %v1082 = vcombine.low %v1026, %v1029
    %v1083 = vcombine.low %v1033, %v1036
    %v1085 = vunpack.c.l.s4 1983009808
    %v1086 = vunpack.c.0.s8 %v1085
    %v1087 = vlaneseq
    %v1088 = vshrl.u32 %v1087, 7
    %v1089 = vsub.s32 %v1086, %v1088
    %v1090 = vrot.slane %v1082, %v1089
    %v1092 = vunpack.c.l.s4 1983009808
    %v1093 = vunpack.c.0.s8 %v1092
    %v1094 = vlaneseq
    %v1095 = vshrl.u32 %v1094, 7
    %v1096 = vsub.s32 %v1093, %v1095
    %v1097 = vrot.slane %v1083, %v1096
    %v1098 = vcombine.low %v1090, %v1097
    %v1099 = vcombine.low %v1040, %v1043
    %v1100 = vcombine.low %v1047, %v1050
    %v1102 = vunpack.c.l.s4 1983009808
    %v1103 = vunpack.c.0.s8 %v1102
    %v1104 = vlaneseq
    %v1105 = vshrl.u32 %v1104, 7
    %v1106 = vsub.s32 %v1103, %v1105
    %v1107 = vrot.slane %v1099, %v1106
    %v1109 = vunpack.c.l.s4 1983009808
    %v1110 = vunpack.c.0.s8 %v1109
    %v1111 = vlaneseq
    %v1112 = vshrl.u32 %v1111, 7
    %v1113 = vsub.s32 %v1110, %v1112
    %v1114 = vrot.slane %v1100, %v1113
    %v1115 = vcombine.low %v1107, %v1114
    %v1116 = vcombine.low %v1054, %v1057
    %v1117 = vcombine.low %v1061, %v1064
    %v1119 = vunpack.c.l.s4 1983009808
    %v1120 = vunpack.c.0.s8 %v1119
    %v1121 = vlaneseq
    %v1122 = vshrl.u32 %v1121, 7
    %v1123 = vsub.s32 %v1120, %v1122
    %v1124 = vrot.slane %v1116, %v1123
    %v1126 = vunpack.c.l.s4 1983009808
    %v1127 = vunpack.c.0.s8 %v1126
    %v1128 = vlaneseq
    %v1129 = vshrl.u32 %v1128, 7
    %v1130 = vsub.s32 %v1127, %v1129
    %v1131 = vrot.slane %v1117, %v1130
    %v1132 = vcombine.low %v1124, %v1131
    %v1137 = vpack.c.bf16 %v1098, %v1081
    %v1138 = vpack.c.bf16 %v1132, %v1115
    %v1139 = vpack.c.bf16 %v895, %v894
    %v1140 = vpack.c.bf16 %v897, %v896
    %v1142 = vsel %vm516, %v1137, 0
    %v1145 = vsel %vm516, %v1138, 0
    %1147 = vmatprep.subr.bf16.mxu0 0
    %1148 = vmatpush1.bf16.msra.mxu0 %v1139
    %1149 = vmatprep.subr.bf16.mxu0 0
    %1150 = vmatpush1.bf16.msra.mxu0 %v1140
    %1151 = vmatprep.subr.bf16.mxu0 0
    %1152 = vmatpush1.bf16.msra.mxu0 0
    %1153 = vmatprep.subr.bf16.mxu0 0
    %1154 = vmatpush1.bf16.msra.mxu0 0
    %1155 = vmatprep.subr.bf16.mxu0 0
    %1156 = vmatpush1.bf16.msra.mxu0 0
    %1157 = vmatprep.subr.bf16.mxu0 0
    %1158 = vmatpush1.bf16.msra.mxu0 0
    %1159 = vmatprep.subr.bf16.mxu0 0
    %1160 = vmatpush1.bf16.msra.mxu0 0
    %1161 = vmatprep.subr.bf16.mxu0 0
    %1162 = vmatpush1.bf16.msra.mxu0 0
    %1163 = vmatprep.subr.bf16.mxu0 0
    %1164 = vmatpush1.bf16.msra.mxu0 0
    %1165 = vmatprep.subr.bf16.mxu0 0
    %1166 = vmatpush1.bf16.msra.mxu0 0
    %1167 = vmatprep.subr.bf16.mxu0 0
    %1168 = vmatpush1.bf16.msra.mxu0 0
    %1169 = vmatprep.subr.bf16.mxu0 0
    %1170 = vmatpush1.bf16.msra.mxu0 0
    %1171 = vmatprep.subr.bf16.mxu0 0
    %1172 = vmatpush1.bf16.msra.mxu0 0
    %1173 = vmatprep.subr.bf16.mxu0 0
    %1174 = vmatpush1.bf16.msra.mxu0 0
    %1175 = vmatprep.subr.bf16.mxu0 0
    %1176 = vmatpush1.bf16.msra.mxu0 0
    %1177 = vmatprep.subr.bf16.mxu0 0
    %1178 = vmatpush1.bf16.msra.mxu0 0
    %1179 = vmatprep.mubr.bf16.mxu0 0
    %1180 = vmatmul.mubr.bf16.gmra.mrb[0].mxu0 %v1142
    %v1181 = vpop.f32.mrb[0].mxu0
    %v1182 = vadd.f32 0.0, %v1181
    %v1183 = vpop.f32.mrb[0].mxu0
    %v1184 = vpop.f32.mrb[0].mxu0
    %v1185 = vadd.f32 0.0, %v1184
    %v1186 = vpop.f32.mrb[0].mxu0
    %1187 = vmatprep.mubr.bf16.mxu0 0
    %1188 = vmatmul.mubr.bf16.gmra.mrb[0].mxu0 %v1145
    %v1189 = vpop.f32.mrb[0].mxu0
    %v1190 = vadd.f32 0.0, %v1189
    %v1191 = vpop.f32.mrb[0].mxu0
    %v1192 = vpop.f32.mrb[0].mxu0
    %v1193 = vadd.f32 0.0, %v1192
    %v1194 = vpop.f32.mrb[0].mxu0
    %1195 = vdwg.mxu0
    %v1197 = vsel %vm516, %v998, 0
    %v1200 = vsel %vm516, %v999, 0
    %1202 = vmatprep.subr.bf16.mxu0 0
    %1203 = vmatpush1.bf16.msra.mxu0 %v1000
    %1204 = vmatprep.subr.bf16.mxu0 0
    %1205 = vmatpush1.bf16.msra.mxu0 %v1001
    %1206 = vmatprep.subr.bf16.mxu0 0
    %1207 = vmatpush1.bf16.msra.mxu0 0
    %1208 = vmatprep.subr.bf16.mxu0 0
    %1209 = vmatpush1.bf16.msra.mxu0 0
    %1210 = vmatprep.subr.bf16.mxu0 0
    %1211 = vmatpush1.bf16.msra.mxu0 0
    %1212 = vmatprep.subr.bf16.mxu0 0
    %1213 = vmatpush1.bf16.msra.mxu0 0
    %1214 = vmatprep.subr.bf16.mxu0 0
    %1215 = vmatpush1.bf16.msra.mxu0 0
    %1216 = vmatprep.subr.bf16.mxu0 0
    %1217 = vmatpush1.bf16.msra.mxu0 0
    %1218 = vmatprep.subr.bf16.mxu0 0
    %1219 = vmatpush1.bf16.msra.mxu0 0
    %1220 = vmatprep.subr.bf16.mxu0 0
    %1221 = vmatpush1.bf16.msra.mxu0 0
    %1222 = vmatprep.subr.bf16.mxu0 0
    %1223 = vmatpush1.bf16.msra.mxu0 0
    %1224 = vmatprep.subr.bf16.mxu0 0
    %1225 = vmatpush1.bf16.msra.mxu0 0
    %1226 = vmatprep.subr.bf16.mxu0 0
    %1227 = vmatpush1.bf16.msra.mxu0 0
    %1228 = vmatprep.subr.bf16.mxu0 0
    %1229 = vmatpush1.bf16.msra.mxu0 0
    %1230 = vmatprep.subr.bf16.mxu0 0
    %1231 = vmatpush1.bf16.msra.mxu0 0
    %1232 = vmatprep.subr.bf16.mxu0 0
    %1233 = vmatpush1.bf16.msra.mxu0 0
    %1234 = vmatprep.mubr.bf16.mxu0 0
    %1235 = vmatmul.mubr.bf16.gmra.mrb[0].mxu0 %v1197
    %v1236 = vpop.f32.mrb[0].mxu0
    %v1237 = vadd.f32 %v1182, %v1236
    %v1238 = vpop.f32.mrb[0].mxu0
    %v1239 = vpop.f32.mrb[0].mxu0
    %v1240 = vadd.f32 %v1185, %v1239
    %v1241 = vpop.f32.mrb[0].mxu0
    %1242 = vmatprep.mubr.bf16.mxu0 0
    %1243 = vmatmul.mubr.bf16.gmra.mrb[0].mxu0 %v1200
    %v1244 = vpop.f32.mrb[0].mxu0
    %v1245 = vadd.f32 %v1190, %v1244
    %v1246 = vpop.f32.mrb[0].mxu0
    %v1247 = vpop.f32.mrb[0].mxu0
    %v1248 = vadd.f32 %v1193, %v1247
    %v1249 = vpop.f32.mrb[0].mxu0
    %1250 = vdwg.mxu0
    %v1251 = vcombine.low %v752, %v751
    %v1252 = vcombine.low %v761, %v769
    %v1254 = vunpack.c.l.s4 1983009808
    %v1255 = vunpack.c.0.s8 %v1254
    %v1256 = vlaneseq
    %v1257 = vshrl.u32 %v1256, 7
    %v1258 = vsub.s32 %v1255, %v1257
    %v1259 = vrot.slane %v1251, %v1258
    %v1261 = vunpack.c.l.s4 1983009808
    %v1262 = vunpack.c.0.s8 %v1261
    %v1263 = vlaneseq
    %v1264 = vshrl.u32 %v1263, 7
    %v1265 = vsub.s32 %v1262, %v1264
    %v1266 = vrot.slane %v1252, %v1265
    %v1267 = vcombine.low %v1259, %v1266
    %v1268 = vcombine.low %v770, %v778
    %v1269 = vcombine.low %v785, %v787
    %v1271 = vunpack.c.l.s4 1983009808
    %v1272 = vunpack.c.0.s8 %v1271
    %v1273 = vlaneseq
    %v1274 = vshrl.u32 %v1273, 7
    %v1275 = vsub.s32 %v1272, %v1274
    %v1276 = vrot.slane %v1268, %v1275
    %v1278 = vunpack.c.l.s4 1983009808
    %v1279 = vunpack.c.0.s8 %v1278
    %v1280 = vlaneseq
    %v1281 = vshrl.u32 %v1280, 7
    %v1282 = vsub.s32 %v1279, %v1281
    %v1283 = vrot.slane %v1269, %v1282
    %v1284 = vcombine.low %v1276, %v1283
    %v1285 = vcombine.low %v821, %v829
    %v1286 = vcombine.low %v836, %v838
    %v1288 = vunpack.c.l.s4 1983009808
    %v1289 = vunpack.c.0.s8 %v1288
    %v1290 = vlaneseq
    %v1291 = vshrl.u32 %v1290, 7
    %v1292 = vsub.s32 %v1289, %v1291
    %v1293 = vrot.slane %v1285, %v1292
    %v1295 = vunpack.c.l.s4 1983009808
    %v1296 = vunpack.c.0.s8 %v1295
    %v1297 = vlaneseq
    %v1298 = vshrl.u32 %v1297, 7
    %v1299 = vsub.s32 %v1296, %v1298
    %v1300 = vrot.slane %v1286, %v1299
    %v1301 = vcombine.low %v1293, %v1300
    %v1302 = vcombine.low %v854, %v853
    %v1303 = vcombine.low %v863, %v871
    %v1305 = vunpack.c.l.s4 1983009808
    %v1306 = vunpack.c.0.s8 %v1305
    %v1307 = vlaneseq
    %v1308 = vshrl.u32 %v1307, 7
    %v1309 = vsub.s32 %v1306, %v1308
    %v1310 = vrot.slane %v1302, %v1309
    %v1312 = vunpack.c.l.s4 1983009808
    %v1313 = vunpack.c.0.s8 %v1312
    %v1314 = vlaneseq
    %v1315 = vshrl.u32 %v1314, 7
    %v1316 = vsub.s32 %v1313, %v1315
    %v1317 = vrot.slane %v1303, %v1316
    %v1318 = vcombine.low %v1310, %v1317
    %v1323 = vpack.c.bf16 %v1284, %v1267
    %v1324 = vpack.c.bf16 %v1318, %v1301
    %v1325 = vpack.c.bf16 %v899, %v898
    %v1326 = vpack.c.bf16 %v901, %v900
    %v1328 = vsel %vm516, %v1323, 0
    %v1331 = vsel %vm516, %v1324, 0
    %1333 = vmatprep.subr.bf16.mxu0 0
    %1334 = vmatpush1.bf16.msra.mxu0 %v1325
    %1335 = vmatprep.subr.bf16.mxu0 0
    %1336 = vmatpush1.bf16.msra.mxu0 %v1326
    %1337 = vmatprep.subr.bf16.mxu0 0
    %1338 = vmatpush1.bf16.msra.mxu0 0
    %1339 = vmatprep.subr.bf16.mxu0 0
    %1340 = vmatpush1.bf16.msra.mxu0 0
    %1341 = vmatprep.subr.bf16.mxu0 0
    %1342 = vmatpush1.bf16.msra.mxu0 0
    %1343 = vmatprep.subr.bf16.mxu0 0
    %1344 = vmatpush1.bf16.msra.mxu0 0
    %1345 = vmatprep.subr.bf16.mxu0 0
    %1346 = vmatpush1.bf16.msra.mxu0 0
    %1347 = vmatprep.subr.bf16.mxu0 0
    %1348 = vmatpush1.bf16.msra.mxu0 0
    %1349 = vmatprep.subr.bf16.mxu0 0
    %1350 = vmatpush1.bf16.msra.mxu0 0
    %1351 = vmatprep.subr.bf16.mxu0 0
    %1352 = vmatpush1.bf16.msra.mxu0 0
    %1353 = vmatprep.subr.bf16.mxu0 0
    %1354 = vmatpush1.bf16.msra.mxu0 0
    %1355 = vmatprep.subr.bf16.mxu0 0
    %1356 = vmatpush1.bf16.msra.mxu0 0
    %1357 = vmatprep.subr.bf16.mxu0 0
    %1358 = vmatpush1.bf16.msra.mxu0 0
    %1359 = vmatprep.subr.bf16.mxu0 0
    %1360 = vmatpush1.bf16.msra.mxu0 0
    %1361 = vmatprep.subr.bf16.mxu0 0
    %1362 = vmatpush1.bf16.msra.mxu0 0
    %1363 = vmatprep.subr.bf16.mxu0 0
    %1364 = vmatpush1.bf16.msra.mxu0 0
    %1365 = vmatprep.mubr.bf16.mxu0 0
    %1366 = vmatmul.mubr.bf16.gmra.mrb[0].mxu0 %v1328
    %v1367 = vpop.f32.mrb[0].mxu0
    %v1368 = vadd.f32 0.0, %v1367
    %v1369 = vpop.f32.mrb[0].mxu0
    %v1370 = vpop.f32.mrb[0].mxu0
    %v1371 = vadd.f32 0.0, %v1370
    %v1372 = vpop.f32.mrb[0].mxu0
    %1373 = vmatprep.mubr.bf16.mxu0 0
    %1374 = vmatmul.mubr.bf16.gmra.mrb[0].mxu0 %v1331
    %v1375 = vpop.f32.mrb[0].mxu0
    %v1376 = vadd.f32 0.0, %v1375
    %v1377 = vpop.f32.mrb[0].mxu0
    %v1378 = vpop.f32.mrb[0].mxu0
    %v1379 = vadd.f32 0.0, %v1378
    %v1380 = vpop.f32.mrb[0].mxu0
    %1381 = vdwg.mxu0
    %v1382 = vadd.f32 %v1237, %v1368
    %v1383 = vadd.f32 %v1240, %v1371
    %v1384 = vadd.f32 %v1245, %v1376
    %v1385 = vadd.f32 %v1248, %v1379
    %v1386 = vcombine.low %v941, %v951
    %v1387 = vcombine.low %v795, %v803
    %v1389 = vunpack.c.l.s4 1983009808
    %v1390 = vunpack.c.0.s8 %v1389
    %v1391 = vlaneseq
    %v1392 = vshrl.u32 %v1391, 7
    %v1393 = vsub.s32 %v1390, %v1392
    %v1394 = vrot.slane %v1387, %v1393
    %v1395 = vcombine.low %v958, %v1394
    %v1396 = vcombine.low %v975, %v985
    %v1397 = vcombine.low %v870, %v872
    %v1399 = vunpack.c.l.s4 1983009808
    %v1400 = vunpack.c.0.s8 %v1399
    %v1401 = vlaneseq
    %v1402 = vshrl.u32 %v1401, 7
    %v1403 = vsub.s32 %v1400, %v1402
    %v1404 = vrot.slane %v1397, %v1403
    %v1405 = vcombine.low %v992, %v1404
    %v1410 = vpack.c.bf16 %v1395, %v1386
    %v1411 = vpack.c.bf16 %v1405, %v1396
    %v1412 = vpack.c.bf16 %v903, %v902
    %v1413 = vpack.c.bf16 %v905, %v904
    %v1415 = vsel %vm516, %v1410, 0
    %v1418 = vsel %vm516, %v1411, 0
    %1420 = vmatprep.subr.bf16.mxu0 0
    %1421 = vmatpush1.bf16.msra.mxu0 %v1412
    %1422 = vmatprep.subr.bf16.mxu0 0
    %1423 = vmatpush1.bf16.msra.mxu0 %v1413
    %1424 = vmatprep.subr.bf16.mxu0 0
    %1425 = vmatpush1.bf16.msra.mxu0 0
    %1426 = vmatprep.subr.bf16.mxu0 0
    %1427 = vmatpush1.bf16.msra.mxu0 0
    %1428 = vmatprep.subr.bf16.mxu0 0
    %1429 = vmatpush1.bf16.msra.mxu0 0
    %1430 = vmatprep.subr.bf16.mxu0 0
    %1431 = vmatpush1.bf16.msra.mxu0 0
    %1432 = vmatprep.subr.bf16.mxu0 0
    %1433 = vmatpush1.bf16.msra.mxu0 0
    %1434 = vmatprep.subr.bf16.mxu0 0
    %1435 = vmatpush1.bf16.msra.mxu0 0
    %1436 = vmatprep.subr.bf16.mxu0 0
    %1437 = vmatpush1.bf16.msra.mxu0 0
    %1438 = vmatprep.subr.bf16.mxu0 0
    %1439 = vmatpush1.bf16.msra.mxu0 0
    %1440 = vmatprep.subr.bf16.mxu0 0
    %1441 = vmatpush1.bf16.msra.mxu0 0
    %1442 = vmatprep.subr.bf16.mxu0 0
    %1443 = vmatpush1.bf16.msra.mxu0 0
    %1444 = vmatprep.subr.bf16.mxu0 0
    %1445 = vmatpush1.bf16.msra.mxu0 0
    %1446 = vmatprep.subr.bf16.mxu0 0
    %1447 = vmatpush1.bf16.msra.mxu0 0
    %1448 = vmatprep.subr.bf16.mxu0 0
    %1449 = vmatpush1.bf16.msra.mxu0 0
    %1450 = vmatprep.subr.bf16.mxu0 0
    %1451 = vmatpush1.bf16.msra.mxu0 0
    %1452 = vmatprep.mubr.bf16.mxu0 0
    %1453 = vmatmul.mubr.bf16.gmra.mrb[0].mxu0 %v1415
    %v1454 = vpop.f32.mrb[0].mxu0
    %v1455 = vadd.f32 0.0, %v1454
    %v1456 = vpop.f32.mrb[0].mxu0
    %v1457 = vpop.f32.mrb[0].mxu0
    %v1458 = vadd.f32 0.0, %v1457
    %v1459 = vpop.f32.mrb[0].mxu0
    %1460 = vmatprep.mubr.bf16.mxu0 0
    %1461 = vmatmul.mubr.bf16.gmra.mrb[0].mxu0 %v1418
    %v1462 = vpop.f32.mrb[0].mxu0
    %v1463 = vadd.f32 0.0, %v1462
    %v1464 = vpop.f32.mrb[0].mxu0
    %v1465 = vpop.f32.mrb[0].mxu0
    %v1466 = vadd.f32 0.0, %v1465
    %v1467 = vpop.f32.mrb[0].mxu0
    %1468 = vdwg.mxu0
    %v1469 = vadd.f32 %v1382, %v1455
    %v1470 = vadd.f32 %v1383, %v1458
    %v1471 = vadd.f32 %v1384, %v1463
    %v1472 = vadd.f32 %v1385, %v1466
    %v1473 = vrot.slane %v795, 7
    %v1474 = vrot.slane %v1473, 2
    %v1475 = vrot.slane %v803, 7
    %v1476 = vsel %vm1008, %v1474, %v1475
    %v1477 = vrot.slane %v1475, 2
    %v1478 = vrot.slane %v802, 7
    %v1479 = vsel %vm1008, %v1477, %v1478
    %v1480 = vrot.slane %v870, 7
    %v1481 = vrot.slane %v1480, 2
    %v1482 = vrot.slane %v872, 7
    %v1483 = vsel %vm1008, %v1481, %v1482
    %v1484 = vrot.slane %v1482, 2
    %v1485 = vrot.slane %v880, 7
    %v1486 = vsel %vm1008, %v1484, %v1485
    %v1487 = vcombine.low %v1080, %v1090
    %v1488 = vcombine.low %v1476, %v1479
    %v1490 = vunpack.c.l.s4 1983009808
    %v1491 = vunpack.c.0.s8 %v1490
    %v1492 = vlaneseq
    %v1493 = vshrl.u32 %v1492, 7
    %v1494 = vsub.s32 %v1491, %v1493
    %v1495 = vrot.slane %v1488, %v1494
    %v1496 = vcombine.low %v1097, %v1495
    %v1497 = vcombine.low %v1114, %v1124
    %v1498 = vcombine.low %v1483, %v1486
    %v1500 = vunpack.c.l.s4 1983009808
    %v1501 = vunpack.c.0.s8 %v1500
    %v1502 = vlaneseq
    %v1503 = vshrl.u32 %v1502, 7
    %v1504 = vsub.s32 %v1501, %v1503
    %v1505 = vrot.slane %v1498, %v1504
    %v1506 = vcombine.low %v1131, %v1505
    %v1511 = vpack.c.bf16 %v1496, %v1487
    %v1512 = vpack.c.bf16 %v1506, %v1497
    %v1513 = vpack.c.bf16 %v907, %v906
    %v1514 = vpack.c.bf16 %v909, %v908
    %v1516 = vsel %vm516, %v1511, 0
    %v1519 = vsel %vm516, %v1512, 0
    %1521 = vmatprep.subr.bf16.mxu0 0
    %1522 = vmatpush1.bf16.msra.mxu0 %v1513
    %1523 = vmatprep.subr.bf16.mxu0 0
    %1524 = vmatpush1.bf16.msra.mxu0 %v1514
    %1525 = vmatprep.subr.bf16.mxu0 0
    %1526 = vmatpush1.bf16.msra.mxu0 0
    %1527 = vmatprep.subr.bf16.mxu0 0
    %1528 = vmatpush1.bf16.msra.mxu0 0
    %1529 = vmatprep.subr.bf16.mxu0 0
    %1530 = vmatpush1.bf16.msra.mxu0 0
    %1531 = vmatprep.subr.bf16.mxu0 0
    %1532 = vmatpush1.bf16.msra.mxu0 0
    %1533 = vmatprep.subr.bf16.mxu0 0
    %1534 = vmatpush1.bf16.msra.mxu0 0
    %1535 = vmatprep.subr.bf16.mxu0 0
    %1536 = vmatpush1.bf16.msra.mxu0 0
    %1537 = vmatprep.subr.bf16.mxu0 0
    %1538 = vmatpush1.bf16.msra.mxu0 0
    %1539 = vmatprep.subr.bf16.mxu0 0
    %1540 = vmatpush1.bf16.msra.mxu0 0
    %1541 = vmatprep.subr.bf16.mxu0 0
    %1542 = vmatpush1.bf16.msra.mxu0 0
    %1543 = vmatprep.subr.bf16.mxu0 0
    %1544 = vmatpush1.bf16.msra.mxu0 0
    %1545 = vmatprep.subr.bf16.mxu0 0
    %1546 = vmatpush1.bf16.msra.mxu0 0
    %1547 = vmatprep.subr.bf16.mxu0 0
    %1548 = vmatpush1.bf16.msra.mxu0 0
    %1549 = vmatprep.subr.bf16.mxu0 0
    %1550 = vmatpush1.bf16.msra.mxu0 0
    %1551 = vmatprep.subr.bf16.mxu0 0
    %1552 = vmatpush1.bf16.msra.mxu0 0
    %1553 = vmatprep.mubr.bf16.mxu0 0
    %1554 = vmatmul.mubr.bf16.gmra.mrb[0].mxu0 %v1516
    %v1555 = vpop.f32.mrb[0].mxu0
    %v1556 = vadd.f32 0.0, %v1555
    %v1557 = vpop.f32.mrb[0].mxu0
    %v1558 = vpop.f32.mrb[0].mxu0
    %v1559 = vadd.f32 0.0, %v1558
    %v1560 = vpop.f32.mrb[0].mxu0
    %1561 = vmatprep.mubr.bf16.mxu0 0
    %1562 = vmatmul.mubr.bf16.gmra.mrb[0].mxu0 %v1519
    %v1563 = vpop.f32.mrb[0].mxu0
    %v1564 = vadd.f32 0.0, %v1563
    %v1565 = vpop.f32.mrb[0].mxu0
    %v1566 = vpop.f32.mrb[0].mxu0
    %v1567 = vadd.f32 0.0, %v1566
    %v1568 = vpop.f32.mrb[0].mxu0
    %1569 = vdwg.mxu0
    %v1570 = vadd.f32 %v1469, %v1556
    %v1571 = vadd.f32 %v1470, %v1559
    %v1572 = vadd.f32 %v1471, %v1564
    %v1573 = vadd.f32 %v1472, %v1567
    %v1574 = vcombine.low %v1266, %v1276
    %v1575 = vcombine.low %v803, %v802
    %v1577 = vunpack.c.l.s4 1983009808
    %v1578 = vunpack.c.0.s8 %v1577
    %v1579 = vlaneseq
    %v1580 = vshrl.u32 %v1579, 7
    %v1581 = vsub.s32 %v1578, %v1580
    %v1582 = vrot.slane %v1575, %v1581
    %v1583 = vcombine.low %v1283, %v1582
    %v1584 = vcombine.low %v1300, %v1310
    %v1585 = vcombine.low %v872, %v880
    %v1587 = vunpack.c.l.s4 1983009808
    %v1588 = vunpack.c.0.s8 %v1587
    %v1589 = vlaneseq
    %v1590 = vshrl.u32 %v1589, 7
    %v1591 = vsub.s32 %v1588, %v1590
    %v1592 = vrot.slane %v1585, %v1591
    %v1593 = vcombine.low %v1317, %v1592
    %v1598 = vpack.c.bf16 %v1583, %v1574
    %v1599 = vpack.c.bf16 %v1593, %v1584
    %v1600 = vpack.c.bf16 %v911, %v910
    %v1601 = vpack.c.bf16 %v913, %v912
    %v1603 = vsel %vm516, %v1598, 0
    %v1606 = vsel %vm516, %v1599, 0
    %1608 = vmatprep.subr.bf16.mxu0 0
    %1609 = vmatpush1.bf16.msra.mxu0 %v1600
    %1610 = vmatprep.subr.bf16.mxu0 0
    %1611 = vmatpush1.bf16.msra.mxu0 %v1601
    %1612 = vmatprep.subr.bf16.mxu0 0
    %1613 = vmatpush1.bf16.msra.mxu0 0
    %1614 = vmatprep.subr.bf16.mxu0 0
    %1615 = vmatpush1.bf16.msra.mxu0 0
    %1616 = vmatprep.subr.bf16.mxu0 0
    %1617 = vmatpush1.bf16.msra.mxu0 0
    %1618 = vmatprep.subr.bf16.mxu0 0
    %1619 = vmatpush1.bf16.msra.mxu0 0
    %1620 = vmatprep.subr.bf16.mxu0 0
    %1621 = vmatpush1.bf16.msra.mxu0 0
    %1622 = vmatprep.subr.bf16.mxu0 0
    %1623 = vmatpush1.bf16.msra.mxu0 0
    %1624 = vmatprep.subr.bf16.mxu0 0
    %1625 = vmatpush1.bf16.msra.mxu0 0
    %1626 = vmatprep.subr.bf16.mxu0 0
    %1627 = vmatpush1.bf16.msra.mxu0 0
    %1628 = vmatprep.subr.bf16.mxu0 0
    %1629 = vmatpush1.bf16.msra.mxu0 0
    %1630 = vmatprep.subr.bf16.mxu0 0
    %1631 = vmatpush1.bf16.msra.mxu0 0
    %1632 = vmatprep.subr.bf16.mxu0 0
    %1633 = vmatpush1.bf16.msra.mxu0 0
    %1634 = vmatprep.subr.bf16.mxu0 0
    %1635 = vmatpush1.bf16.msra.mxu0 0
    %1636 = vmatprep.subr.bf16.mxu0 0
    %1637 = vmatpush1.bf16.msra.mxu0 0
    %1638 = vmatprep.subr.bf16.mxu0 0
    %1639 = vmatpush1.bf16.msra.mxu0 0
    %1640 = vmatprep.mubr.bf16.mxu0 0
    %1641 = vmatmul.mubr.bf16.gmra.mrb[0].mxu0 %v1603
    %v1642 = vpop.f32.mrb[0].mxu0
    %v1643 = vadd.f32 0.0, %v1642
    %v1644 = vpop.f32.mrb[0].mxu0
    %v1645 = vpop.f32.mrb[0].mxu0
    %v1646 = vadd.f32 0.0, %v1645
    %v1647 = vpop.f32.mrb[0].mxu0
    %1648 = vmatprep.mubr.bf16.mxu0 0
    %1649 = vmatmul.mubr.bf16.gmra.mrb[0].mxu0 %v1606
    %v1650 = vpop.f32.mrb[0].mxu0
    %v1651 = vadd.f32 0.0, %v1650
    %v1652 = vpop.f32.mrb[0].mxu0
    %v1653 = vpop.f32.mrb[0].mxu0
    %v1654 = vadd.f32 0.0, %v1653
    %v1655 = vpop.f32.mrb[0].mxu0
    %1656 = vdwg.mxu0
    %v1657 = vadd.f32 %v1570, %v1643
    %v1658 = vadd.f32 %v1571, %v1646
    %v1659 = vadd.f32 %v1572, %v1651
    %v1660 = vadd.f32 %v1573, %v1654
    %v1661 = vcombine.low %v804, %v812
    %v1663 = vunpack.c.l.s4 1983009808
    %v1664 = vunpack.c.0.s8 %v1663
    %v1665 = vlaneseq
    %v1666 = vshrl.u32 %v1665, 7
    %v1667 = vsub.s32 %v1664, %v1666
    %v1668 = vrot.slane %v1661, %v1667
    %v1669 = vcombine.low %v1394, %v1668
    %v1670 = vcombine.low %v888, %v887
    %v1672 = vunpack.c.l.s4 1983009808
    %v1673 = vunpack.c.0.s8 %v1672
    %v1674 = vlaneseq
    %v1675 = vshrl.u32 %v1674, 7
    %v1676 = vsub.s32 %v1673, %v1675
    %v1677 = vrot.slane %v1670, %v1676
    %v1678 = vcombine.low %v1404, %v1677
    %v1681 = vpack.c.bf16 %v1669, %v959
    %v1682 = vpack.c.bf16 %v1678, %v993
    %v1683 = vpack.c.bf16 %v915, %v914
    %v1684 = vpack.c.bf16 %v917, %v916
    %v1686 = vsel %vm516, %v1681, 0
    %v1689 = vsel %vm516, %v1682, 0
    %1691 = vmatprep.subr.bf16.mxu0 0
    %1692 = vmatpush1.bf16.msra.mxu0 %v1683
    %1693 = vmatprep.subr.bf16.mxu0 0
    %1694 = vmatpush1.bf16.msra.mxu0 %v1684
    %1695 = vmatprep.subr.bf16.mxu0 0
    %1696 = vmatpush1.bf16.msra.mxu0 0
    %1697 = vmatprep.subr.bf16.mxu0 0
    %1698 = vmatpush1.bf16.msra.mxu0 0
    %1699 = vmatprep.subr.bf16.mxu0 0
    %1700 = vmatpush1.bf16.msra.mxu0 0
    %1701 = vmatprep.subr.bf16.mxu0 0
    %1702 = vmatpush1.bf16.msra.mxu0 0
    %1703 = vmatprep.subr.bf16.mxu0 0
    %1704 = vmatpush1.bf16.msra.mxu0 0
    %1705 = vmatprep.subr.bf16.mxu0 0
    %1706 = vmatpush1.bf16.msra.mxu0 0
    %1707 = vmatprep.subr.bf16.mxu0 0
    %1708 = vmatpush1.bf16.msra.mxu0 0
    %1709 = vmatprep.subr.bf16.mxu0 0
    %1710 = vmatpush1.bf16.msra.mxu0 0
    %1711 = vmatprep.subr.bf16.mxu0 0
    %1712 = vmatpush1.bf16.msra.mxu0 0
    %1713 = vmatprep.subr.bf16.mxu0 0
    %1714 = vmatpush1.bf16.msra.mxu0 0
    %1715 = vmatprep.subr.bf16.mxu0 0
    %1716 = vmatpush1.bf16.msra.mxu0 0
    %1717 = vmatprep.subr.bf16.mxu0 0
    %1718 = vmatpush1.bf16.msra.mxu0 0
    %1719 = vmatprep.subr.bf16.mxu0 0
    %1720 = vmatpush1.bf16.msra.mxu0 0
    %1721 = vmatprep.subr.bf16.mxu0 0
    %1722 = vmatpush1.bf16.msra.mxu0 0
    %1723 = vmatprep.mubr.bf16.mxu0 0
    %1724 = vmatmul.mubr.bf16.gmra.mrb[0].mxu0 %v1686
    %v1725 = vpop.f32.mrb[0].mxu0
    %v1726 = vadd.f32 0.0, %v1725
    %v1727 = vpop.f32.mrb[0].mxu0
    %v1728 = vpop.f32.mrb[0].mxu0
    %v1729 = vadd.f32 0.0, %v1728
    %v1730 = vpop.f32.mrb[0].mxu0
    %1731 = vmatprep.mubr.bf16.mxu0 0
    %1732 = vmatmul.mubr.bf16.gmra.mrb[0].mxu0 %v1689
    %v1733 = vpop.f32.mrb[0].mxu0
    %v1734 = vadd.f32 0.0, %v1733
    %v1735 = vpop.f32.mrb[0].mxu0
    %v1736 = vpop.f32.mrb[0].mxu0
    %v1737 = vadd.f32 0.0, %v1736
    %v1738 = vpop.f32.mrb[0].mxu0
    %1739 = vdwg.mxu0
    %v1740 = vadd.f32 %v1657, %v1726
    %v1741 = vadd.f32 %v1658, %v1729
    %v1742 = vadd.f32 %v1659, %v1734
    %v1743 = vadd.f32 %v1660, %v1737
    %v1744 = vrot.slane %v804, 7
    %v1745 = vrot.slane %v1744, 2
    %v1746 = vrot.slane %v812, 7
    %v1747 = vsel %vm1008, %v1745, %v1746
    %v1748 = vrot.slane %v1746, 2
    %v1749 = vrot.slane %v820, 7
    %v1750 = vsel %vm1008, %v1748, %v1749
    %v1751 = vrot.slane %v888, 7
    %v1752 = vrot.slane %v1751, 2
    %v1753 = vrot.slane %v887, 7
    %v1754 = vsel %vm1008, %v1752, %v1753
    %v1755 = vrot.slane %v1753, 2
    %v1756 = vrot.slane %v889, 7
    %v1757 = vsel %vm1008, %v1755, %v1756
    %v1758 = vcombine.low %v1747, %v1750
    %v1760 = vunpack.c.l.s4 1983009808
    %v1761 = vunpack.c.0.s8 %v1760
    %v1762 = vlaneseq
    %v1763 = vshrl.u32 %v1762, 7
    %v1764 = vsub.s32 %v1761, %v1763
    %v1765 = vrot.slane %v1758, %v1764
    %v1766 = vcombine.low %v1495, %v1765
    %v1767 = vcombine.low %v1754, %v1757
    %v1769 = vunpack.c.l.s4 1983009808
    %v1770 = vunpack.c.0.s8 %v1769
    %v1771 = vlaneseq
    %v1772 = vshrl.u32 %v1771, 7
    %v1773 = vsub.s32 %v1770, %v1772
    %v1774 = vrot.slane %v1767, %v1773
    %v1775 = vcombine.low %v1505, %v1774
    %v1778 = vpack.c.bf16 %v1766, %v1098
    %v1779 = vpack.c.bf16 %v1775, %v1132
    %v1780 = vpack.c.bf16 %v919, %v918
    %v1781 = vpack.c.bf16 %v921, %v920
    %v1783 = vsel %vm516, %v1778, 0
    %v1786 = vsel %vm516, %v1779, 0
    %1788 = vmatprep.subr.bf16.mxu0 0
    %1789 = vmatpush1.bf16.msra.mxu0 %v1780
    %1790 = vmatprep.subr.bf16.mxu0 0
    %1791 = vmatpush1.bf16.msra.mxu0 %v1781
    %1792 = vmatprep.subr.bf16.mxu0 0
    %1793 = vmatpush1.bf16.msra.mxu0 0
    %1794 = vmatprep.subr.bf16.mxu0 0
    %1795 = vmatpush1.bf16.msra.mxu0 0
    %1796 = vmatprep.subr.bf16.mxu0 0
    %1797 = vmatpush1.bf16.msra.mxu0 0
    %1798 = vmatprep.subr.bf16.mxu0 0
    %1799 = vmatpush1.bf16.msra.mxu0 0
    %1800 = vmatprep.subr.bf16.mxu0 0
    %1801 = vmatpush1.bf16.msra.mxu0 0
    %1802 = vmatprep.subr.bf16.mxu0 0
    %1803 = vmatpush1.bf16.msra.mxu0 0
    %1804 = vmatprep.subr.bf16.mxu0 0
    %1805 = vmatpush1.bf16.msra.mxu0 0
    %1806 = vmatprep.subr.bf16.mxu0 0
    %1807 = vmatpush1.bf16.msra.mxu0 0
    %1808 = vmatprep.subr.bf16.mxu0 0
    %1809 = vmatpush1.bf16.msra.mxu0 0
    %1810 = vmatprep.subr.bf16.mxu0 0
    %1811 = vmatpush1.bf16.msra.mxu0 0
    %1812 = vmatprep.subr.bf16.mxu0 0
    %1813 = vmatpush1.bf16.msra.mxu0 0
    %1814 = vmatprep.subr.bf16.mxu0 0
    %1815 = vmatpush1.bf16.msra.mxu0 0
    %1816 = vmatprep.subr.bf16.mxu0 0
    %1817 = vmatpush1.bf16.msra.mxu0 0
    %1818 = vmatprep.subr.bf16.mxu0 0
    %1819 = vmatpush1.bf16.msra.mxu0 0
    %1820 = vmatprep.mubr.bf16.mxu0 0
    %1821 = vmatmul.mubr.bf16.gmra.mrb[0].mxu0 %v1783
    %v1822 = vpop.f32.mrb[0].mxu0
    %v1823 = vadd.f32 0.0, %v1822
    %v1824 = vpop.f32.mrb[0].mxu0
    %v1825 = vpop.f32.mrb[0].mxu0
    %v1826 = vadd.f32 0.0, %v1825
    %v1827 = vpop.f32.mrb[0].mxu0
    %1828 = vmatprep.mubr.bf16.mxu0 0
    %1829 = vmatmul.mubr.bf16.gmra.mrb[0].mxu0 %v1786
    %v1830 = vpop.f32.mrb[0].mxu0
    %v1831 = vadd.f32 0.0, %v1830
    %v1832 = vpop.f32.mrb[0].mxu0
    %v1833 = vpop.f32.mrb[0].mxu0
    %v1834 = vadd.f32 0.0, %v1833
    %v1835 = vpop.f32.mrb[0].mxu0
    %1836 = vdwg.mxu0
    %v1837 = vadd.f32 %v1740, %v1823
    %v1838 = vadd.f32 %v1741, %v1826
    %v1839 = vadd.f32 %v1742, %v1831
    %v1840 = vadd.f32 %v1743, %v1834
    %v1841 = vcombine.low %v812, %v820
    %v1843 = vunpack.c.l.s4 1983009808
    %v1844 = vunpack.c.0.s8 %v1843
    %v1845 = vlaneseq
    %v1846 = vshrl.u32 %v1845, 7
    %v1847 = vsub.s32 %v1844, %v1846
    %v1848 = vrot.slane %v1841, %v1847
    %v1849 = vcombine.low %v1582, %v1848
    %v1850 = vcombine.low %v887, %v889
    %v1852 = vunpack.c.l.s4 1983009808
    %v1853 = vunpack.c.0.s8 %v1852
    %v1854 = vlaneseq
    %v1855 = vshrl.u32 %v1854, 7
    %v1856 = vsub.s32 %v1853, %v1855
    %v1857 = vrot.slane %v1850, %v1856
    %v1858 = vcombine.low %v1592, %v1857
    %v1861 = vpack.c.bf16 %v1849, %v1284
    %v1862 = vpack.c.bf16 %v1858, %v1318
    %v1863 = vpack.c.bf16 %v923, %v922
    %v1864 = vpack.c.bf16 %v925, %v924
    %v1866 = vsel %vm516, %v1861, 0
    %v1869 = vsel %vm516, %v1862, 0
    %1871 = vmatprep.subr.bf16.mxu0 0
    %1872 = vmatpush1.bf16.msra.mxu0 %v1863
    %1873 = vmatprep.subr.bf16.mxu0 0
    %1874 = vmatpush1.bf16.msra.mxu0 %v1864
    %1875 = vmatprep.subr.bf16.mxu0 0
    %1876 = vmatpush1.bf16.msra.mxu0 0
    %1877 = vmatprep.subr.bf16.mxu0 0
    %1878 = vmatpush1.bf16.msra.mxu0 0
    %1879 = vmatprep.subr.bf16.mxu0 0
    %1880 = vmatpush1.bf16.msra.mxu0 0
    %1881 = vmatprep.subr.bf16.mxu0 0
    %1882 = vmatpush1.bf16.msra.mxu0 0
    %1883 = vmatprep.subr.bf16.mxu0 0
    %1884 = vmatpush1.bf16.msra.mxu0 0
    %1885 = vmatprep.subr.bf16.mxu0 0
    %1886 = vmatpush1.bf16.msra.mxu0 0
    %1887 = vmatprep.subr.bf16.mxu0 0
    %1888 = vmatpush1.bf16.msra.mxu0 0
    %1889 = vmatprep.subr.bf16.mxu0 0
    %1890 = vmatpush1.bf16.msra.mxu0 0
    %1891 = vmatprep.subr.bf16.mxu0 0
    %1892 = vmatpush1.bf16.msra.mxu0 0
    %1893 = vmatprep.subr.bf16.mxu0 0
    %1894 = vmatpush1.bf16.msra.mxu0 0
    %1895 = vmatprep.subr.bf16.mxu0 0
    %1896 = vmatpush1.bf16.msra.mxu0 0
    %1897 = vmatprep.subr.bf16.mxu0 0
    %1898 = vmatpush1.bf16.msra.mxu0 0
    %1899 = vmatprep.subr.bf16.mxu0 0
    %1900 = vmatpush1.bf16.msra.mxu0 0
    %1901 = vmatprep.subr.bf16.mxu0 0
    %1902 = vmatpush1.bf16.msra.mxu0 0
    %1903 = vmatprep.mubr.bf16.mxu0 0
    %1904 = vmatmul.mubr.bf16.gmra.mrb[0].mxu0 %v1866
    %v1905 = vpop.f32.mrb[0].mxu0
    %v1906 = vadd.f32 0.0, %v1905
    %v1907 = vpop.f32.mrb[0].mxu0
    %v1908 = vpop.f32.mrb[0].mxu0
    %v1909 = vadd.f32 0.0, %v1908
    %v1910 = vpop.f32.mrb[0].mxu0
    %1911 = vmatprep.mubr.bf16.mxu0 0
    %1912 = vmatmul.mubr.bf16.gmra.mrb[0].mxu0 %v1869
    %v1913 = vpop.f32.mrb[0].mxu0
    %v1914 = vadd.f32 0.0, %v1913
    %v1915 = vpop.f32.mrb[0].mxu0
    %v1916 = vpop.f32.mrb[0].mxu0
    %v1917 = vadd.f32 0.0, %v1916
    %v1918 = vpop.f32.mrb[0].mxu0
    %1919 = vdwg.mxu0
    %v1920 = vadd.f32 %v1837, %v1906
    %v1921 = vadd.f32 %v1838, %v1909
    %v1922 = vadd.f32 %v1839, %v1914
    %v1923 = vadd.f32 %v1840, %v1917
    %v1924 = vld [vmem:[%s6] sm:$0x1]
    %v1925 = vld [vmem:[%s7] sm:$0x1]
    %v1926 = vsel %vm516, %v1920, 0.0
    %1927 = vadd.xlane.f32.xlu0 %v1926
    %v1928 = vpop.xlane.xlu0 %1927
    %v1929 = vsel %vm516, %v1921, 0.0
    %1930 = vadd.xlane.f32.xlu0 %v1929
    %v1931 = vpop.xlane.xlu0 %1930
    %v1932 = vsel %vm516, %v1922, 0.0
    %1933 = vadd.xlane.f32.xlu0 %v1932
    %v1934 = vpop.xlane.xlu0 %1933
    %v1935 = vsel %vm516, %v1923, 0.0
    %1936 = vadd.xlane.f32.xlu0 %v1935
    %v1937 = vpop.xlane.xlu0 %1936
    %v1938 = vmul.f32 %v1928, %v544
    %v1939 = vmul.f32 %v1931, %v544
    %v1940 = vmul.f32 %v1934, %v544
    %v1941 = vmul.f32 %v1937, %v544
    %v1942 = vsub.f32 %v1920, %v1938
    %v1943 = vsub.f32 %v1921, %v1939
    %v1944 = vsub.f32 %v1922, %v1940
    %v1945 = vsub.f32 %v1923, %v1941
    %v1946 = vmul.f32 %v1942, %v1942
    %v1947 = vmul.f32 %v1943, %v1943
    %v1948 = vmul.f32 %v1944, %v1944
    %v1949 = vmul.f32 %v1945, %v1945
    %v1950 = vsel %vm516, %v1946, 0.0
    %1951 = vadd.xlane.f32.xlu0 %v1950
    %v1952 = vpop.xlane.xlu0 %1951
    %v1953 = vsel %vm516, %v1947, 0.0
    %1954 = vadd.xlane.f32.xlu0 %v1953
    %v1955 = vpop.xlane.xlu0 %1954
    %v1956 = vsel %vm516, %v1948, 0.0
    %1957 = vadd.xlane.f32.xlu0 %v1956
    %v1958 = vpop.xlane.xlu0 %1957
    %v1959 = vsel %vm516, %v1949, 0.0
    %1960 = vadd.xlane.f32.xlu0 %v1959
    %v1961 = vpop.xlane.xlu0 %1960
    %v1962 = vmul.f32 %v1952, %v544
    %v1963 = vmul.f32 %v1955, %v544
    %v1964 = vmul.f32 %v1958, %v544
    %v1965 = vmul.f32 %v1961, %v544
    %v1966 = vadd.f32 %v1962, 1e-06
    %v1967 = vadd.f32 %v1963, 1e-06
    %v1968 = vadd.f32 %v1964, 1e-06
    %v1969 = vadd.f32 %v1965, 1e-06
    %v1970 = vrsqrt.pop %v1966
    %v1971 = vrsqrt.pop %v1967
    %v1972 = vrsqrt.pop %v1968
    %v1973 = vrsqrt.pop %v1969
    %v1974 = vmul.f32 %v1942, %v1970
    %v1975 = vmul.f32 %v1943, %v1971
    %v1976 = vmul.f32 %v1944, %v1972
    %v1977 = vmul.f32 %v1945, %v1973
    %v1979 = vlaneseq
    %v1980 = vshrl.u32 %v1979, 7
    %v1981 = vsub.s32 0, %v1980
    %v1982 = vrot.slane %v1924, %v1981
    %v1984 = vmul.f32 %v1974, %v1982
    %v1985 = vmul.f32 %v1975, %v1982
    %v1986 = vmul.f32 %v1976, %v1982
    %v1987 = vmul.f32 %v1977, %v1982
    %v1989 = vlaneseq
    %v1990 = vshrl.u32 %v1989, 7
    %v1991 = vsub.s32 0, %v1990
    %v1992 = vrot.slane %v1925, %v1991
    %v1994 = vadd.f32 %v1984, %v1992
    %v1995 = vadd.f32 %v1985, %v1992
    %v1996 = vadd.f32 %v1986, %v1992
    %v1997 = vadd.f32 %v1987, %v1992
    %v2002 = vcombine.high %v1994, %v1994
    %v2003 = vcombine.high %v1995, %v1995
    %v2004 = vcombine.high %v1996, %v1996
    %v2005 = vcombine.high %v1997, %v1997
    %vm2010 = vcmask 257024
    %2011 = vst.msk [vmem:[#allocation2] sm:$0xf] %vm2010, %v1994
    %2012 = vst.msk [vmem:[#allocation2 + $0x4] sm:$0xf] %vm2010, %v2002
    %2013 = vst.msk [vmem:[#allocation2 + $0x8] sm:$0xf] %vm2010, %v1995
    %2014 = vst.msk [vmem:[#allocation2 + $0xc] sm:$0xf] %vm2010, %v2003
    %2015 = vst.msk [vmem:[#allocation2 + $0x10] sm:$0xf] %vm2010, %v1996
    %2016 = vst.msk [vmem:[#allocation2 + $0x14] sm:$0xf] %vm2010, %v2004
    %2017 = vst.msk [vmem:[#allocation2 + $0x18] sm:$0xf] %vm2010, %v1997
    %2018 = vst.msk [vmem:[#allocation2 + $0x1c] sm:$0xf] %vm2010, %v2005
    // Predicated region
    $region34: #{image_encoder.11} parent=1 // pred_check
      _
    $region35: #{image_encoder.11} parent=1 // pred_check_branch
      %2020 = sbr.rel (0) target = $region37
    $region36: #{image_encoder.11} parent=1 // pred_region
      %s2022 = ssub.s32 512, 512
      %2023 = vsyncadd [#allocation3], %s2022
      %s2024 = sshll.u32 [#allocation2], 4
      %s2025 = int_to_ptr.vmem [resolvable:$true] %s2024
      %2030 = dma.vmem_to_hbm [thread:$0]  %s2025, 512, %s8, [#allocation3], 64, 64, 4
    $region37: #{image_encoder.11} parent=1 // pred_fallthru
      _
    // Predicated region
    $region38: #{image_encoder.11} parent=1 // pred_check
      _
    $region39: #{image_encoder.11} parent=1 // pred_check_branch
      %2032 = sbr.rel (0) target = $region41
    $region40: #{image_encoder.11} parent=1 // pred_region
      %2033 = dma.done [#allocation3], 512
    $region41: #{image_encoder.11} parent=1 // pred_fallthru
      _
    %2034 = vsyncpa [#allocation3], 1

</llo_original>
